<compile_context>
chip_gen: v7x
topology: tpu7x:2x2x1
jax: 0.10.0
libtpu: 0.0.40
codegen_flags: <defaults>
</compile_context>

<pallas_src>
import functools

import jax
import jax.numpy as jnp
import numpy as np
from jax.experimental import pallas as pl
from jax.experimental.pallas import tpu as pltpu


# ----------------------------- Pallas kernels -----------------------------

def _conv_stats_kernel(p_ref, w_ref, o_ref, sum_ref, ssq_ref, acc_s, acc_q):
    """K-folded conv matmul + fused per-channel BatchNorm statistics.

    p_ref   : (K, TM)   bf16  im2col patches, K = taps*Cin, TM output positions on lanes
    w_ref   : (Cout, K) bf16  flattened conv weights
    o_ref   : (Cout, TM) f32  raw conv output tile (channels on sublanes -> lane-dense store)
    sum_ref : (Cout, 1) f32   per-channel sum       (written at the last grid step)
    ssq_ref : (Cout, 1) f32   per-channel sum of sq (written at the last grid step)
    acc_s, acc_q : (Cout, 1) f32 VMEM scratch accumulators (persist across the grid)
    """
    i = pl.program_id(0)

    @pl.when(i == 0)
    def _init():
        acc_s[...] = jnp.zeros_like(acc_s)
        acc_q[...] = jnp.zeros_like(acc_q)

    # Single MXU push per tile: (Cout, K) x (K, TM) -> (Cout, TM), f32 accumulate.
    y = jnp.dot(w_ref[...], p_ref[...], preferred_element_type=jnp.float32)
    o_ref[...] = y

    acc_s[...] += jnp.sum(y, axis=1, keepdims=True)
    acc_q[...] += jnp.sum(y * y, axis=1, keepdims=True)

    @pl.when(i == pl.num_programs(0) - 1)
    def _finalize():
        sum_ref[...] = acc_s[...]
        ssq_ref[...] = acc_q[...]


def _bn_relu_kernel(x_ref, scale_ref, shift_ref, o_ref):
    """y = relu(x * scale + shift) on (C, TM) tiles; scale/shift are per-channel (C, 1)."""
    o_ref[...] = jnp.maximum(
        x_ref[...] * scale_ref[...] + shift_ref[...], 0.0).astype(o_ref.dtype)


# ----------------------------- tiling helper -----------------------------

def _pick_tile(m, bytes_per_col, budget=8 * 1024 * 1024):
    """Largest lane tile TM with TM | M and (TM % 128 == 0 or TM == M) under the VMEM budget.

    budget is deliberately conservative (8 MiB) so the double-buffered working set fits the
    scoped-VMEM defaults on v5e (16 MiB), v6e (32 MiB) and v7x (32 of 64 MiB).
    """
    cap = max(128, budget // max(1, bytes_per_col))
    if m <= cap:
        return m
    t = (min(m, cap) // 128) * 128
    while t >= 128:
        if m % t == 0:
            return t
        t -= 128
    return m  # fallback: single full block


# ----------------------------- Pallas wrappers -----------------------------

def conv_stats(patches, w_flat):
    """patches: (K, M) bf16, w_flat: (Cout, K) bf16 ->
       (raw conv output (Cout, M) f32, per-channel sum (Cout,1), sum-of-squares (Cout,1))."""
    k, m = patches.shape
    cout = w_flat.shape[0]
    # per-lane-column footprint: bf16 patches (x2 double-buffer) + f32 output (x2)
    tm = _pick_tile(m, bytes_per_col=k * 2 * 2 + cout * 4 * 2)
    grid = (m // tm,)

    return pl.pallas_call(
        _conv_stats_kernel,
        out_shape=(jax.ShapeDtypeStruct((cout, m), jnp.float32),
                   jax.ShapeDtypeStruct((cout, 1), jnp.float32),
                   jax.ShapeDtypeStruct((cout, 1), jnp.float32)),
        grid=grid,
        in_specs=[pl.BlockSpec((k, tm), lambda i: (0, i)),
                  pl.BlockSpec((cout, k), lambda i: (0, 0))],
        out_specs=(pl.BlockSpec((cout, tm), lambda i: (0, i)),
                   pl.BlockSpec((cout, 1), lambda i: (0, 0)),
                   pl.BlockSpec((cout, 1), lambda i: (0, 0))),
        scratch_shapes=[pltpu.VMEM((cout, 1), jnp.float32),
                        pltpu.VMEM((cout, 1), jnp.float32)],
        compiler_params=pltpu.CompilerParams(
            dimension_semantics=("arbitrary",)),   # stats accumulate across the row grid
    )(patches, w_flat)


def bn_relu(y_raw, ch_sum, ch_ssq, gamma, beta, *, out_dtype=jnp.float32, eps=1e-5):
    """Apply training-mode BatchNorm (from fused sum/sumsq) + ReLU on (C, M) activations."""
    c, m = y_raw.shape
    mean = ch_sum / m
    var = jnp.maximum(ch_ssq / m - mean * mean, 0.0)      # biased variance (PyTorch training)
    scale = gamma.reshape(c, 1) * jax.lax.rsqrt(var + eps)
    shift = beta.reshape(c, 1) - mean * scale

    out_bytes = jnp.dtype(out_dtype).itemsize
    tm = _pick_tile(m, bytes_per_col=c * (4 + out_bytes) * 2)

    return pl.pallas_call(
        _bn_relu_kernel,
        out_shape=jax.ShapeDtypeStruct((c, m), out_dtype),
        grid=(m // tm,),
        in_specs=[pl.BlockSpec((c, tm), lambda i: (0, i)),
                  pl.BlockSpec((c, 1), lambda i: (0, 0)),
                  pl.BlockSpec((c, 1), lambda i: (0, 0))],
        out_specs=pl.BlockSpec((c, tm), lambda i: (0, i)),
        compiler_params=pltpu.CompilerParams(dimension_semantics=("parallel",)),
    )(y_raw, scale, shift)


# --------------------- glue: K-folded im2col + weight flattening ---------------------

def _im2col_3x3x3(x):
    """x: (C, N, D, H, W) -> (27*C, N*D*H*W) bf16 patches (3x3x3 conv, padding 1)."""
    c, n, d, h, w = x.shape
    xp = jnp.pad(x.astype(jnp.bfloat16), ((0, 0), (0, 0), (1, 1), (1, 1), (1, 1)))
    taps = [xp[:, :, kd:kd + d, kh:kh + h, kw:kw + w].reshape(c, -1)
            for kd in range(3) for kh in range(3) for kw in range(3)]
    return jnp.concatenate(taps, axis=0)


def _im2col_down(x, down):
    """x: (C, N, D, H, W) -> (dd*dh*dw*C, M') bf16 patches (kernel == stride == down)."""
    c = x.shape[0]
    dd, dh, dw = down
    xb = x.astype(jnp.bfloat16)
    taps = [xb[:, :, kd::dd, kh::dh, kw::dw].reshape(c, -1)
            for kd in range(dd) for kh in range(dh) for kw in range(dw)]
    return jnp.concatenate(taps, axis=0)


def _flatten_w(w_torch):
    """(Cout, Cin, KD, KH, KW) -> (Cout, KD*KH*KW*Cin) bf16, tap-major / cin-minor columns."""
    cout = w_torch.shape[0]
    return jnp.transpose(w_torch, (0, 2, 3, 4, 1)).reshape(cout, -1).astype(jnp.bfloat16)


# ------------------------------ full forward ------------------------------

def downsample_unet3d_forward(x_ncdhw, params, down_sample=(1, 2, 2)):
    """x_ncdhw: (N, Cin, D, H, W) float32; returns (x_down, y) in NCDHW like PyTorch.

    Note: conv biases in `params` are intentionally unused — training-mode BatchNorm
    subtracts the batch mean, so a per-channel conv bias cancels exactly.
    """
    n, _, d, h, w = x_ncdhw.shape
    cout = params["w1"].shape[0]
    dd, dh, dw = down_sample

    # Channels-on-sublane layout: (C, N, D, H, W) == (C, M) flattened; only the two small
    # leading axes (N, C) are swapped at the boundary.
    x = jnp.transpose(x_ncdhw, (1, 0, 2, 3, 4)).astype(jnp.float32)

    # conv1 (+fused BN stats) -> bn1 -> relu   (intermediate kept bf16: only feeds conv2)
    y1, s1, q1 = conv_stats(_im2col_3x3x3(x), _flatten_w(params["w1"]))
    h1 = bn_relu(y1, s1, q1, params["g1"], params["be1"], out_dtype=jnp.bfloat16)
    h1 = h1.reshape(cout, n, d, h, w)

    # conv2 (+fused BN stats) -> bn2 -> relu   (this is `y`, returned -> f32)
    y2, s2, q2 = conv_stats(_im2col_3x3x3(h1), _flatten_w(params["w2"]))
    y = bn_relu(y2, s2, q2, params["g2"], params["be2"]).reshape(cout, n, d, h, w)

    # conv3 (kernel == stride == down_sample) (+fused BN stats) -> bn3 -> relu
    y3, s3, q3 = conv_stats(_im2col_down(y, down_sample), _flatten_w(params["w3"]))
    z = bn_relu(y3, s3, q3, params["g3"], params["be3"]).reshape(
        cout, n, d // dd, h // dh, w // dw)

    return (jnp.transpose(z, (1, 0, 2, 3, 4)),   # x: (N, Cout, D/dd, H/dh, W/dw)
            jnp.transpose(y, (1, 0, 2, 3, 4)))   # y: (N, Cout, D, H, W)


# -------------------- pure-JAX reference (for validation) --------------------

def _ref_conv(x_ndhwc, w_torch, b, strides, padding):
    w = jnp.transpose(w_torch, (2, 3, 4, 1, 0))   # (Cout,Cin,KD,KH,KW) -> DHWIO
    return jax.lax.conv_general_dilated(
        x_ndhwc, w, window_strides=strides, padding=padding,
        dimension_numbers=("NDHWC", "DHWIO", "NDHWC"),
        precision=jax.lax.Precision.HIGHEST) + b


def _ref_bn_relu(x, gamma, beta, eps=1e-5):
    mean = jnp.mean(x, axis=(0, 1, 2, 3))
    var = jnp.var(x, axis=(0, 1, 2, 3))
    return jax.nn.relu((x - mean) * (gamma / jnp.sqrt(var + eps)) + beta)


def _ref_forward(x_ncdhw, params, down_sample=(1, 2, 2)):
    x = jnp.transpose(x_ncdhw, (0, 2, 3, 4, 1)).astype(jnp.float32)
    pad1 = [(1, 1), (1, 1), (1, 1)]
    h = _ref_bn_relu(_ref_conv(x, params["w1"], params["b1"], (1, 1, 1), pad1),
                     params["g1"], params["be1"])
    y = _ref_bn_relu(_ref_conv(h, params["w2"], params["b2"], (1, 1, 1), pad1),
                     params["g2"], params["be2"])
    z = _ref_bn_relu(_ref_conv(y, params["w3"], params["b3"], down_sample, "VALID"),
                     params["g3"], params["be3"])
    return jnp.transpose(z, (0, 4, 1, 2, 3)), jnp.transpose(y, (0, 4, 1, 2, 3))


# ----------------------------------- main -----------------------------------

if __name__ == "__main__":
    key = jax.random.PRNGKey(0)
    ks = jax.random.split(key, 13)

    N, Cin, Cout, D, H, W = 2, 4, 8, 4, 16, 16
    down = (1, 2, 2)

    params = {
        # PyTorch-layout conv weights: (Cout, Cin, KD, KH, KW)
        "w1": 0.1 * jax.random.normal(ks[0], (Cout, Cin, 3, 3, 3), jnp.float32),
        "b1": 0.1 * jax.random.normal(ks[1], (Cout,), jnp.float32),
        "g1": 1.0 + 0.1 * jax.random.normal(ks[2], (Cout,), jnp.float32),
        "be1": 0.1 * jax.random.normal(ks[3], (Cout,), jnp.float32),
        "w2": 0.1 * jax.random.normal(ks[4], (Cout, Cout, 3, 3, 3), jnp.float32),
        "b2": 0.1 * jax.random.normal(ks[5], (Cout,), jnp.float32),
        "g2": 1.0 + 0.1 * jax.random.normal(ks[6], (Cout,), jnp.float32),
        "be2": 0.1 * jax.random.normal(ks[7], (Cout,), jnp.float32),
        "w3": 0.1 * jax.random.normal(ks[8], (Cout, Cout, down[0], down[1], down[2]),
                                      jnp.float32),
        "b3": 0.1 * jax.random.normal(ks[9], (Cout,), jnp.float32),
        "g3": 1.0 + 0.1 * jax.random.normal(ks[10], (Cout,), jnp.float32),
        "be3": 0.1 * jax.random.normal(ks[11], (Cout,), jnp.float32),
    }
    x = jax.random.normal(ks[12], (N, Cin, D, H, W), jnp.float32)   # PyTorch NCDHW

    fwd = jax.jit(functools.partial(downsample_unet3d_forward, down_sample=down))
    x_out, y_out = fwd(x, params)
    jax.block_until_ready((x_out, y_out))

    assert x_out.shape == (N, Cout, D // down[0], H // down[1], W // down[2])
    assert y_out.shape == (N, Cout, D, H, W)

    # sanity check vs pure-JAX f32 reference (tolerance absorbs bf16 MXU inputs and the
    # exact bias-cancellation under training-mode BatchNorm)
    x_ref, y_ref = _ref_forward(x, params, down)
    np.testing.assert_allclose(np.asarray(y_out), np.asarray(y_ref), rtol=3e-2, atol=3e-2)
    np.testing.assert_allclose(np.asarray(x_out), np.asarray(x_ref), rtol=3e-2, atol=3e-2)

    print("KERNEL_OK")
</pallas_src>

<mosaic_0001>
module attributes {stable_mosaic.version = 11 : i64} {
  func.func @_conv_stats_kernel(%arg0: i32, %arg1: memref<108x2048xbf16, #tpu.memory_space<vmem>>, %arg2: memref<8x108xbf16, #tpu.memory_space<vmem>>, %arg3: memref<8x2048xf32, #tpu.memory_space<vmem>>, %arg4: memref<8x1xf32, #tpu.memory_space<vmem>>, %arg5: memref<8x1xf32, #tpu.memory_space<vmem>>, %arg6: memref<8x1xf32, #tpu.memory_space<vmem>>, %arg7: memref<8x1xf32, #tpu.memory_space<vmem>>) attributes {dimension_semantics = [#tpu.dimension_semantics<arbitrary>], iteration_bounds = array<i64: 1>, scalar_prefetch = 0 : i64, scratch_operands = 2 : i64, tpu.core_type = #tpu.core_type<tc>, window_params = [{transform_indices = @transform_0, window_bounds = array<i64: 108, 2048>}, {pipeline_mode = #tpu.pipeline_mode<synchronous>, transform_indices = @transform_1, window_bounds = array<i64: 8, 108>}, {transform_indices = @transform_2, window_bounds = array<i64: 8, 2048>}, {pipeline_mode = #tpu.pipeline_mode<synchronous>, transform_indices = @transform_3, window_bounds = array<i64: 8, 1>}, {pipeline_mode = #tpu.pipeline_mode<synchronous>, transform_indices = @transform_4, window_bounds = array<i64: 8, 1>}]} {
    %c0_i32 = arith.constant 0 : i32
    %0 = arith.cmpi eq, %arg0, %c0_i32 : i32
    %1 = arith.extui %0 : i1 to i32
    %c0_i32_0 = arith.constant 0 : i32
    %2 = arith.cmpi ne, %1, %c0_i32_0 : i32
    scf.if %2 {
      %cst_18 = arith.constant 0.000000e+00 : f32
      %21 = vector.broadcast %cst_18 : f32 to vector<8x1xf32>
      %c0_19 = arith.constant 0 : index
      %c0_20 = arith.constant 0 : index
      %22 = vector.load %arg6[%c0_19, %c0_20] : memref<8x1xf32, #tpu.memory_space<vmem>>, vector<8x1xf32>
      tpu.vector_store %arg6[%c0_19, %c0_20], %21 {strides = array<i32>} : memref<8x1xf32, #tpu.memory_space<vmem>>, vector<8x1xf32>,
      %cst_21 = arith.constant 0.000000e+00 : f32
      %23 = vector.broadcast %cst_21 : f32 to vector<8x1xf32>
      %c0_22 = arith.constant 0 : index
      %c0_23 = arith.constant 0 : index
      %24 = vector.load %arg7[%c0_22, %c0_23] : memref<8x1xf32, #tpu.memory_space<vmem>>, vector<8x1xf32>
      tpu.vector_store %arg7[%c0_22, %c0_23], %23 {strides = array<i32>} : memref<8x1xf32, #tpu.memory_space<vmem>>, vector<8x1xf32>,
    } else {
    }
    %c0 = arith.constant 0 : index
    %c0_1 = arith.constant 0 : index
    %3 = vector.load %arg2[%c0, %c0_1] : memref<8x108xbf16, #tpu.memory_space<vmem>>, vector<8x108xbf16>
    %c0_2 = arith.constant 0 : index
    %c0_3 = arith.constant 0 : index
    %4 = vector.load %arg1[%c0_2, %c0_3] : memref<108x2048xbf16, #tpu.memory_space<vmem>>, vector<108x2048xbf16>
    %cst = arith.constant dense<0.000000e+00> : vector<8x2048xf32>
    %5 = tpu.matmul %3, %4, %cst {dimension_numbers = #tpu.dot_dimension_numbers<[1], [0], [0], [1], [0, 0, 1, 1], [], []>} : vector<8x108xbf16>, vector<108x2048xbf16>, vector<8x2048xf32> -> vector<8x2048xf32>
    %c0_4 = arith.constant 0 : index
    %c0_5 = arith.constant 0 : index
    %6 = vector.load %arg3[%c0_4, %c0_5] : memref<8x2048xf32, #tpu.memory_space<vmem>>, vector<8x2048xf32>
    tpu.vector_store %arg3[%c0_4, %c0_5], %5 {strides = array<i32>} : memref<8x2048xf32, #tpu.memory_space<vmem>>, vector<8x2048xf32>,
    %c0_6 = arith.constant 0 : index
    %c0_7 = arith.constant 0 : index
    %7 = vector.load %arg6[%c0_6, %c0_7] : memref<8x1xf32, #tpu.memory_space<vmem>>, vector<8x1xf32>
    %cst_8 = arith.constant dense<0.000000e+00> : vector<8xf32>
    %8 = vector.multi_reduction <add>, %5, %cst_8 [1] : vector<8x2048xf32> to vector<8xf32>
    %9 = vector.shape_cast %8 : vector<8xf32> to vector<8x1xf32>
    %10 = arith.addf %7, %9 : vector<8x1xf32>
    %c0_9 = arith.constant 0 : index
    %c0_10 = arith.constant 0 : index
    %11 = vector.load %arg6[%c0_9, %c0_10] : memref<8x1xf32, #tpu.memory_space<vmem>>, vector<8x1xf32>
    tpu.vector_store %arg6[%c0_9, %c0_10], %10 {strides = array<i32>} : memref<8x1xf32, #tpu.memory_space<vmem>>, vector<8x1xf32>,
    %c0_11 = arith.constant 0 : index
    %c0_12 = arith.constant 0 : index
    %12 = vector.load %arg7[%c0_11, %c0_12] : memref<8x1xf32, #tpu.memory_space<vmem>>, vector<8x1xf32>
    %13 = arith.mulf %5, %5 : vector<8x2048xf32>
    %cst_13 = arith.constant dense<0.000000e+00> : vector<8xf32>
    %14 = vector.multi_reduction <add>, %13, %cst_13 [1] : vector<8x2048xf32> to vector<8xf32>
    %15 = vector.shape_cast %14 : vector<8xf32> to vector<8x1xf32>
    %16 = arith.addf %12, %15 : vector<8x1xf32>
    %c0_14 = arith.constant 0 : index
    %c0_15 = arith.constant 0 : index
    %17 = vector.load %arg7[%c0_14, %c0_15] : memref<8x1xf32, #tpu.memory_space<vmem>>, vector<8x1xf32>
    tpu.vector_store %arg7[%c0_14, %c0_15], %16 {strides = array<i32>} : memref<8x1xf32, #tpu.memory_space<vmem>>, vector<8x1xf32>,
    %c0_i32_16 = arith.constant 0 : i32
    %18 = arith.cmpi eq, %arg0, %c0_i32_16 : i32
    %19 = arith.extui %18 : i1 to i32
    %c0_i32_17 = arith.constant 0 : i32
    %20 = arith.cmpi ne, %19, %c0_i32_17 : i32
    scf.if %20 {
      %c0_18 = arith.constant 0 : index
      %c0_19 = arith.constant 0 : index
      %21 = vector.load %arg6[%c0_18, %c0_19] : memref<8x1xf32, #tpu.memory_space<vmem>>, vector<8x1xf32>
      %c0_20 = arith.constant 0 : index
      %c0_21 = arith.constant 0 : index
      %22 = vector.load %arg4[%c0_20, %c0_21] : memref<8x1xf32, #tpu.memory_space<vmem>>, vector<8x1xf32>
      tpu.vector_store %arg4[%c0_20, %c0_21], %21 {strides = array<i32>} : memref<8x1xf32, #tpu.memory_space<vmem>>, vector<8x1xf32>,
      %c0_22 = arith.constant 0 : index
      %c0_23 = arith.constant 0 : index
      %23 = vector.load %arg7[%c0_22, %c0_23] : memref<8x1xf32, #tpu.memory_space<vmem>>, vector<8x1xf32>
      %c0_24 = arith.constant 0 : index
      %c0_25 = arith.constant 0 : index
      %24 = vector.load %arg5[%c0_24, %c0_25] : memref<8x1xf32, #tpu.memory_space<vmem>>, vector<8x1xf32>
      tpu.vector_store %arg5[%c0_24, %c0_25], %23 {strides = array<i32>} : memref<8x1xf32, #tpu.memory_space<vmem>>, vector<8x1xf32>,
    } else {
    }
    return
  }
  func.func @transform_0(%arg0: i32) -> (i32, i32) {
    %c0_i32 = arith.constant 0 : i32
    %c0_i32_0 = arith.constant 0 : i32
    return %c0_i32, %arg0 : i32, i32
  }
  func.func @transform_1(%arg0: i32) -> (i32, i32) {
    %c0_i32 = arith.constant 0 : i32
    %c0_i32_0 = arith.constant 0 : i32
    %c0_i32_1 = arith.constant 0 : i32
    return %c0_i32, %c0_i32_0 : i32, i32
  }
  func.func @transform_2(%arg0: i32) -> (i32, i32) {
    %c0_i32 = arith.constant 0 : i32
    %c0_i32_0 = arith.constant 0 : i32
    return %c0_i32, %arg0 : i32, i32
  }
  func.func @transform_3(%arg0: i32) -> (i32, i32) {
    %c0_i32 = arith.constant 0 : i32
    %c0_i32_0 = arith.constant 0 : i32
    %c0_i32_1 = arith.constant 0 : i32
    return %c0_i32, %c0_i32_0 : i32, i32
  }
  func.func @transform_4(%arg0: i32) -> (i32, i32) {
    %c0_i32 = arith.constant 0 : i32
    %c0_i32_0 = arith.constant 0 : i32
    %c0_i32_1 = arith.constant 0 : i32
    return %c0_i32, %c0_i32_0 : i32, i32
  }
}

module attributes {stable_mosaic.version = 11 : i64} {
  func.func @_bn_relu_kernel(%arg0: i32, %arg1: memref<8x2048xf32, #tpu.memory_space<vmem>>, %arg2: memref<8x1xf32, #tpu.memory_space<vmem>>, %arg3: memref<8x1xf32, #tpu.memory_space<vmem>>, %arg4: memref<8x2048xbf16, #tpu.memory_space<vmem>>) attributes {dimension_semantics = [#tpu.dimension_semantics<parallel>], iteration_bounds = array<i64: 1>, scalar_prefetch = 0 : i64, scratch_operands = 0 : i64, tpu.core_type = #tpu.core_type<tc>, window_params = [{transform_indices = @transform_0, window_bounds = array<i64: 8, 2048>}, {pipeline_mode = #tpu.pipeline_mode<synchronous>, transform_indices = @transform_1, window_bounds = array<i64: 8, 1>}, {pipeline_mode = #tpu.pipeline_mode<synchronous>, transform_indices = @transform_2, window_bounds = array<i64: 8, 1>}, {transform_indices = @transform_3, window_bounds = array<i64: 8, 2048>}]} {
    %c0 = arith.constant 0 : index
    %c0_0 = arith.constant 0 : index
    %0 = vector.load %arg1[%c0, %c0_0] : memref<8x2048xf32, #tpu.memory_space<vmem>>, vector<8x2048xf32>
    %c0_1 = arith.constant 0 : index
    %c0_2 = arith.constant 0 : index
    %1 = vector.load %arg2[%c0_1, %c0_2] : memref<8x1xf32, #tpu.memory_space<vmem>>, vector<8x1xf32>
    %2 = vector.broadcast %1 : vector<8x1xf32> to vector<8x2048xf32>
    %3 = arith.mulf %0, %2 : vector<8x2048xf32>
    %c0_3 = arith.constant 0 : index
    %c0_4 = arith.constant 0 : index
    %4 = vector.load %arg3[%c0_3, %c0_4] : memref<8x1xf32, #tpu.memory_space<vmem>>, vector<8x1xf32>
    %5 = vector.broadcast %4 : vector<8x1xf32> to vector<8x2048xf32>
    %6 = arith.addf %3, %5 : vector<8x2048xf32>
    %cst = arith.constant 0.000000e+00 : f32
    %7 = vector.broadcast %cst : f32 to vector<8x2048xf32>
    %8 = arith.maximumf %6, %7 : vector<8x2048xf32>
    %9 = arith.truncf %8 : vector<8x2048xf32> to vector<8x2048xbf16>
    %c0_5 = arith.constant 0 : index
    %c0_6 = arith.constant 0 : index
    %10 = vector.load %arg4[%c0_5, %c0_6] : memref<8x2048xbf16, #tpu.memory_space<vmem>>, vector<8x2048xbf16>
    tpu.vector_store %arg4[%c0_5, %c0_6], %9 {strides = array<i32>} : memref<8x2048xbf16, #tpu.memory_space<vmem>>, vector<8x2048xbf16>,
    return
  }
  func.func @transform_0(%arg0: i32) -> (i32, i32) {
    %c0_i32 = arith.constant 0 : i32
    %c0_i32_0 = arith.constant 0 : i32
    return %c0_i32, %arg0 : i32, i32
  }
  func.func @transform_1(%arg0: i32) -> (i32, i32) {
    %c0_i32 = arith.constant 0 : i32
    %c0_i32_0 = arith.constant 0 : i32
    %c0_i32_1 = arith.constant 0 : i32
    return %c0_i32, %c0_i32_0 : i32, i32
  }
  func.func @transform_2(%arg0: i32) -> (i32, i32) {
    %c0_i32 = arith.constant 0 : i32
    %c0_i32_0 = arith.constant 0 : i32
    %c0_i32_1 = arith.constant 0 : i32
    return %c0_i32, %c0_i32_0 : i32, i32
  }
  func.func @transform_3(%arg0: i32) -> (i32, i32) {
    %c0_i32 = arith.constant 0 : i32
    %c0_i32_0 = arith.constant 0 : i32
    return %c0_i32, %arg0 : i32, i32
  }
}

module attributes {stable_mosaic.version = 11 : i64} {
  func.func @_conv_stats_kernel(%arg0: i32, %arg1: memref<216x2048xbf16, #tpu.memory_space<vmem>>, %arg2: memref<8x216xbf16, #tpu.memory_space<vmem>>, %arg3: memref<8x2048xf32, #tpu.memory_space<vmem>>, %arg4: memref<8x1xf32, #tpu.memory_space<vmem>>, %arg5: memref<8x1xf32, #tpu.memory_space<vmem>>, %arg6: memref<8x1xf32, #tpu.memory_space<vmem>>, %arg7: memref<8x1xf32, #tpu.memory_space<vmem>>) attributes {dimension_semantics = [#tpu.dimension_semantics<arbitrary>], iteration_bounds = array<i64: 1>, scalar_prefetch = 0 : i64, scratch_operands = 2 : i64, tpu.core_type = #tpu.core_type<tc>, window_params = [{transform_indices = @transform_0, window_bounds = array<i64: 216, 2048>}, {pipeline_mode = #tpu.pipeline_mode<synchronous>, transform_indices = @transform_1, window_bounds = array<i64: 8, 216>}, {transform_indices = @transform_2, window_bounds = array<i64: 8, 2048>}, {pipeline_mode = #tpu.pipeline_mode<synchronous>, transform_indices = @transform_3, window_bounds = array<i64: 8, 1>}, {pipeline_mode = #tpu.pipeline_mode<synchronous>, transform_indices = @transform_4, window_bounds = array<i64: 8, 1>}]} {
    %c0_i32 = arith.constant 0 : i32
    %0 = arith.cmpi eq, %arg0, %c0_i32 : i32
    %1 = arith.extui %0 : i1 to i32
    %c0_i32_0 = arith.constant 0 : i32
    %2 = arith.cmpi ne, %1, %c0_i32_0 : i32
    scf.if %2 {
      %cst_18 = arith.constant 0.000000e+00 : f32
      %21 = vector.broadcast %cst_18 : f32 to vector<8x1xf32>
      %c0_19 = arith.constant 0 : index
      %c0_20 = arith.constant 0 : index
      %22 = vector.load %arg6[%c0_19, %c0_20] : memref<8x1xf32, #tpu.memory_space<vmem>>, vector<8x1xf32>
      tpu.vector_store %arg6[%c0_19, %c0_20], %21 {strides = array<i32>} : memref<8x1xf32, #tpu.memory_space<vmem>>, vector<8x1xf32>,
      %cst_21 = arith.constant 0.000000e+00 : f32
      %23 = vector.broadcast %cst_21 : f32 to vector<8x1xf32>
      %c0_22 = arith.constant 0 : index
      %c0_23 = arith.constant 0 : index
      %24 = vector.load %arg7[%c0_22, %c0_23] : memref<8x1xf32, #tpu.memory_space<vmem>>, vector<8x1xf32>
      tpu.vector_store %arg7[%c0_22, %c0_23], %23 {strides = array<i32>} : memref<8x1xf32, #tpu.memory_space<vmem>>, vector<8x1xf32>,
    } else {
    }
    %c0 = arith.constant 0 : index
    %c0_1 = arith.constant 0 : index
    %3 = vector.load %arg2[%c0, %c0_1] : memref<8x216xbf16, #tpu.memory_space<vmem>>, vector<8x216xbf16>
    %c0_2 = arith.constant 0 : index
    %c0_3 = arith.constant 0 : index
    %4 = vector.load %arg1[%c0_2, %c0_3] : memref<216x2048xbf16, #tpu.memory_space<vmem>>, vector<216x2048xbf16>
    %cst = arith.constant dense<0.000000e+00> : vector<8x2048xf32>
    %5 = tpu.matmul %3, %4, %cst {dimension_numbers = #tpu.dot_dimension_numbers<[1], [0], [0], [1], [0, 0, 1, 1], [], []>} : vector<8x216xbf16>, vector<216x2048xbf16>, vector<8x2048xf32> -> vector<8x2048xf32>
    %c0_4 = arith.constant 0 : index
    %c0_5 = arith.constant 0 : index
    %6 = vector.load %arg3[%c0_4, %c0_5] : memref<8x2048xf32, #tpu.memory_space<vmem>>, vector<8x2048xf32>
    tpu.vector_store %arg3[%c0_4, %c0_5], %5 {strides = array<i32>} : memref<8x2048xf32, #tpu.memory_space<vmem>>, vector<8x2048xf32>,
    %c0_6 = arith.constant 0 : index
    %c0_7 = arith.constant 0 : index
    %7 = vector.load %arg6[%c0_6, %c0_7] : memref<8x1xf32, #tpu.memory_space<vmem>>, vector<8x1xf32>
    %cst_8 = arith.constant dense<0.000000e+00> : vector<8xf32>
    %8 = vector.multi_reduction <add>, %5, %cst_8 [1] : vector<8x2048xf32> to vector<8xf32>
    %9 = vector.shape_cast %8 : vector<8xf32> to vector<8x1xf32>
    %10 = arith.addf %7, %9 : vector<8x1xf32>
    %c0_9 = arith.constant 0 : index
    %c0_10 = arith.constant 0 : index
    %11 = vector.load %arg6[%c0_9, %c0_10] : memref<8x1xf32, #tpu.memory_space<vmem>>, vector<8x1xf32>
    tpu.vector_store %arg6[%c0_9, %c0_10], %10 {strides = array<i32>} : memref<8x1xf32, #tpu.memory_space<vmem>>, vector<8x1xf32>,
    %c0_11 = arith.constant 0 : index
    %c0_12 = arith.constant 0 : index
    %12 = vector.load %arg7[%c0_11, %c0_12] : memref<8x1xf32, #tpu.memory_space<vmem>>, vector<8x1xf32>
    %13 = arith.mulf %5, %5 : vector<8x2048xf32>
    %cst_13 = arith.constant dense<0.000000e+00> : vector<8xf32>
    %14 = vector.multi_reduction <add>, %13, %cst_13 [1] : vector<8x2048xf32> to vector<8xf32>
    %15 = vector.shape_cast %14 : vector<8xf32> to vector<8x1xf32>
    %16 = arith.addf %12, %15 : vector<8x1xf32>
    %c0_14 = arith.constant 0 : index
    %c0_15 = arith.constant 0 : index
    %17 = vector.load %arg7[%c0_14, %c0_15] : memref<8x1xf32, #tpu.memory_space<vmem>>, vector<8x1xf32>
    tpu.vector_store %arg7[%c0_14, %c0_15], %16 {strides = array<i32>} : memref<8x1xf32, #tpu.memory_space<vmem>>, vector<8x1xf32>,
    %c0_i32_16 = arith.constant 0 : i32
    %18 = arith.cmpi eq, %arg0, %c0_i32_16 : i32
    %19 = arith.extui %18 : i1 to i32
    %c0_i32_17 = arith.constant 0 : i32
    %20 = arith.cmpi ne, %19, %c0_i32_17 : i32
    scf.if %20 {
      %c0_18 = arith.constant 0 : index
      %c0_19 = arith.constant 0 : index
      %21 = vector.load %arg6[%c0_18, %c0_19] : memref<8x1xf32, #tpu.memory_space<vmem>>, vector<8x1xf32>
      %c0_20 = arith.constant 0 : index
      %c0_21 = arith.constant 0 : index
      %22 = vector.load %arg4[%c0_20, %c0_21] : memref<8x1xf32, #tpu.memory_space<vmem>>, vector<8x1xf32>
      tpu.vector_store %arg4[%c0_20, %c0_21], %21 {strides = array<i32>} : memref<8x1xf32, #tpu.memory_space<vmem>>, vector<8x1xf32>,
      %c0_22 = arith.constant 0 : index
      %c0_23 = arith.constant 0 : index
      %23 = vector.load %arg7[%c0_22, %c0_23] : memref<8x1xf32, #tpu.memory_space<vmem>>, vector<8x1xf32>
      %c0_24 = arith.constant 0 : index
      %c0_25 = arith.constant 0 : index
      %24 = vector.load %arg5[%c0_24, %c0_25] : memref<8x1xf32, #tpu.memory_space<vmem>>, vector<8x1xf32>
      tpu.vector_store %arg5[%c0_24, %c0_25], %23 {strides = array<i32>} : memref<8x1xf32, #tpu.memory_space<vmem>>, vector<8x1xf32>,
    } else {
    }
    return
  }
  func.func @transform_0(%arg0: i32) -> (i32, i32) {
    %c0_i32 = arith.constant 0 : i32
    %c0_i32_0 = arith.constant 0 : i32
    return %c0_i32, %arg0 : i32, i32
  }
  func.func @transform_1(%arg0: i32) -> (i32, i32) {
    %c0_i32 = arith.constant 0 : i32
    %c0_i32_0 = arith.constant 0 : i32
    %c0_i32_1 = arith.constant 0 : i32
    return %c0_i32, %c0_i32_0 : i32, i32
  }
  func.func @transform_2(%arg0: i32) -> (i32, i32) {
    %c0_i32 = arith.constant 0 : i32
    %c0_i32_0 = arith.constant 0 : i32
    return %c0_i32, %arg0 : i32, i32
  }
  func.func @transform_3(%arg0: i32) -> (i32, i32) {
    %c0_i32 = arith.constant 0 : i32
    %c0_i32_0 = arith.constant 0 : i32
    %c0_i32_1 = arith.constant 0 : i32
    return %c0_i32, %c0_i32_0 : i32, i32
  }
  func.func @transform_4(%arg0: i32) -> (i32, i32) {
    %c0_i32 = arith.constant 0 : i32
    %c0_i32_0 = arith.constant 0 : i32
    %c0_i32_1 = arith.constant 0 : i32
    return %c0_i32, %c0_i32_0 : i32, i32
  }
}

module attributes {stable_mosaic.version = 11 : i64} {
  func.func @_bn_relu_kernel(%arg0: i32, %arg1: memref<8x2048xf32, #tpu.memory_space<vmem>>, %arg2: memref<8x1xf32, #tpu.memory_space<vmem>>, %arg3: memref<8x1xf32, #tpu.memory_space<vmem>>, %arg4: memref<8x2048xf32, #tpu.memory_space<vmem>>) attributes {dimension_semantics = [#tpu.dimension_semantics<parallel>], iteration_bounds = array<i64: 1>, scalar_prefetch = 0 : i64, scratch_operands = 0 : i64, tpu.core_type = #tpu.core_type<tc>, window_params = [{transform_indices = @transform_0, window_bounds = array<i64: 8, 2048>}, {pipeline_mode = #tpu.pipeline_mode<synchronous>, transform_indices = @transform_1, window_bounds = array<i64: 8, 1>}, {pipeline_mode = #tpu.pipeline_mode<synchronous>, transform_indices = @transform_2, window_bounds = array<i64: 8, 1>}, {transform_indices = @transform_3, window_bounds = array<i64: 8, 2048>}]} {
    %c0 = arith.constant 0 : index
    %c0_0 = arith.constant 0 : index
    %0 = vector.load %arg1[%c0, %c0_0] : memref<8x2048xf32, #tpu.memory_space<vmem>>, vector<8x2048xf32>
    %c0_1 = arith.constant 0 : index
    %c0_2 = arith.constant 0 : index
    %1 = vector.load %arg2[%c0_1, %c0_2] : memref<8x1xf32, #tpu.memory_space<vmem>>, vector<8x1xf32>
    %2 = vector.broadcast %1 : vector<8x1xf32> to vector<8x2048xf32>
    %3 = arith.mulf %0, %2 : vector<8x2048xf32>
    %c0_3 = arith.constant 0 : index
    %c0_4 = arith.constant 0 : index
    %4 = vector.load %arg3[%c0_3, %c0_4] : memref<8x1xf32, #tpu.memory_space<vmem>>, vector<8x1xf32>
    %5 = vector.broadcast %4 : vector<8x1xf32> to vector<8x2048xf32>
    %6 = arith.addf %3, %5 : vector<8x2048xf32>
    %cst = arith.constant 0.000000e+00 : f32
    %7 = vector.broadcast %cst : f32 to vector<8x2048xf32>
    %8 = arith.maximumf %6, %7 : vector<8x2048xf32>
    %c0_5 = arith.constant 0 : index
    %c0_6 = arith.constant 0 : index
    %9 = vector.load %arg4[%c0_5, %c0_6] : memref<8x2048xf32, #tpu.memory_space<vmem>>, vector<8x2048xf32>
    tpu.vector_store %arg4[%c0_5, %c0_6], %8 {strides = array<i32>} : memref<8x2048xf32, #tpu.memory_space<vmem>>, vector<8x2048xf32>,
    return
  }
  func.func @transform_0(%arg0: i32) -> (i32, i32) {
    %c0_i32 = arith.constant 0 : i32
    %c0_i32_0 = arith.constant 0 : i32
    return %c0_i32, %arg0 : i32, i32
  }
  func.func @transform_1(%arg0: i32) -> (i32, i32) {
    %c0_i32 = arith.constant 0 : i32
    %c0_i32_0 = arith.constant 0 : i32
    %c0_i32_1 = arith.constant 0 : i32
    return %c0_i32, %c0_i32_0 : i32, i32
  }
  func.func @transform_2(%arg0: i32) -> (i32, i32) {
    %c0_i32 = arith.constant 0 : i32
    %c0_i32_0 = arith.constant 0 : i32
    %c0_i32_1 = arith.constant 0 : i32
    return %c0_i32, %c0_i32_0 : i32, i32
  }
  func.func @transform_3(%arg0: i32) -> (i32, i32) {
    %c0_i32 = arith.constant 0 : i32
    %c0_i32_0 = arith.constant 0 : i32
    return %c0_i32, %arg0 : i32, i32
  }
}

module attributes {stable_mosaic.version = 11 : i64} {
  func.func @_conv_stats_kernel(%arg0: i32, %arg1: memref<32x512xbf16, #tpu.memory_space<vmem>>, %arg2: memref<8x32xbf16, #tpu.memory_space<vmem>>, %arg3: memref<8x512xf32, #tpu.memory_space<vmem>>, %arg4: memref<8x1xf32, #tpu.memory_space<vmem>>, %arg5: memref<8x1xf32, #tpu.memory_space<vmem>>, %arg6: memref<8x1xf32, #tpu.memory_space<vmem>>, %arg7: memref<8x1xf32, #tpu.memory_space<vmem>>) attributes {dimension_semantics = [#tpu.dimension_semantics<arbitrary>], iteration_bounds = array<i64: 1>, scalar_prefetch = 0 : i64, scratch_operands = 2 : i64, tpu.core_type = #tpu.core_type<tc>, window_params = [{transform_indices = @transform_0, window_bounds = array<i64: 32, 512>}, {pipeline_mode = #tpu.pipeline_mode<synchronous>, transform_indices = @transform_1, window_bounds = array<i64: 8, 32>}, {transform_indices = @transform_2, window_bounds = array<i64: 8, 512>}, {pipeline_mode = #tpu.pipeline_mode<synchronous>, transform_indices = @transform_3, window_bounds = array<i64: 8, 1>}, {pipeline_mode = #tpu.pipeline_mode<synchronous>, transform_indices = @transform_4, window_bounds = array<i64: 8, 1>}]} {
    %c0_i32 = arith.constant 0 : i32
    %0 = arith.cmpi eq, %arg0, %c0_i32 : i32
    %1 = arith.extui %0 : i1 to i32
    %c0_i32_0 = arith.constant 0 : i32
    %2 = arith.cmpi ne, %1, %c0_i32_0 : i32
    scf.if %2 {
      %cst_18 = arith.constant 0.000000e+00 : f32
      %21 = vector.broadcast %cst_18 : f32 to vector<8x1xf32>
      %c0_19 = arith.constant 0 : index
      %c0_20 = arith.constant 0 : index
      %22 = vector.load %arg6[%c0_19, %c0_20] : memref<8x1xf32, #tpu.memory_space<vmem>>, vector<8x1xf32>
      tpu.vector_store %arg6[%c0_19, %c0_20], %21 {strides = array<i32>} : memref<8x1xf32, #tpu.memory_space<vmem>>, vector<8x1xf32>,
      %cst_21 = arith.constant 0.000000e+00 : f32
      %23 = vector.broadcast %cst_21 : f32 to vector<8x1xf32>
      %c0_22 = arith.constant 0 : index
      %c0_23 = arith.constant 0 : index
      %24 = vector.load %arg7[%c0_22, %c0_23] : memref<8x1xf32, #tpu.memory_space<vmem>>, vector<8x1xf32>
      tpu.vector_store %arg7[%c0_22, %c0_23], %23 {strides = array<i32>} : memref<8x1xf32, #tpu.memory_space<vmem>>, vector<8x1xf32>,
    } else {
    }
    %c0 = arith.constant 0 : index
    %c0_1 = arith.constant 0 : index
    %3 = vector.load %arg2[%c0, %c0_1] : memref<8x32xbf16, #tpu.memory_space<vmem>>, vector<8x32xbf16>
    %c0_2 = arith.constant 0 : index
    %c0_3 = arith.constant 0 : index
    %4 = vector.load %arg1[%c0_2, %c0_3] : memref<32x512xbf16, #tpu.memory_space<vmem>>, vector<32x512xbf16>
    %cst = arith.constant dense<0.000000e+00> : vector<8x512xf32>
    %5 = tpu.matmul %3, %4, %cst {dimension_numbers = #tpu.dot_dimension_numbers<[1], [0], [0], [1], [0, 0, 1, 1], [], []>} : vector<8x32xbf16>, vector<32x512xbf16>, vector<8x512xf32> -> vector<8x512xf32>
    %c0_4 = arith.constant 0 : index
    %c0_5 = arith.constant 0 : index
    %6 = vector.load %arg3[%c0_4, %c0_5] : memref<8x512xf32, #tpu.memory_space<vmem>>, vector<8x512xf32>
    tpu.vector_store %arg3[%c0_4, %c0_5], %5 {strides = array<i32>} : memref<8x512xf32, #tpu.memory_space<vmem>>, vector<8x512xf32>,
    %c0_6 = arith.constant 0 : index
    %c0_7 = arith.constant 0 : index
    %7 = vector.load %arg6[%c0_6, %c0_7] : memref<8x1xf32, #tpu.memory_space<vmem>>, vector<8x1xf32>
    %cst_8 = arith.constant dense<0.000000e+00> : vector<8xf32>
    %8 = vector.multi_reduction <add>, %5, %cst_8 [1] : vector<8x512xf32> to vector<8xf32>
    %9 = vector.shape_cast %8 : vector<8xf32> to vector<8x1xf32>
    %10 = arith.addf %7, %9 : vector<8x1xf32>
    %c0_9 = arith.constant 0 : index
    %c0_10 = arith.constant 0 : index
    %11 = vector.load %arg6[%c0_9, %c0_10] : memref<8x1xf32, #tpu.memory_space<vmem>>, vector<8x1xf32>
    tpu.vector_store %arg6[%c0_9, %c0_10], %10 {strides = array<i32>} : memref<8x1xf32, #tpu.memory_space<vmem>>, vector<8x1xf32>,
    %c0_11 = arith.constant 0 : index
    %c0_12 = arith.constant 0 : index
    %12 = vector.load %arg7[%c0_11, %c0_12] : memref<8x1xf32, #tpu.memory_space<vmem>>, vector<8x1xf32>
    %13 = arith.mulf %5, %5 : vector<8x512xf32>
    %cst_13 = arith.constant dense<0.000000e+00> : vector<8xf32>
    %14 = vector.multi_reduction <add>, %13, %cst_13 [1] : vector<8x512xf32> to vector<8xf32>
    %15 = vector.shape_cast %14 : vector<8xf32> to vector<8x1xf32>
    %16 = arith.addf %12, %15 : vector<8x1xf32>
    %c0_14 = arith.constant 0 : index
    %c0_15 = arith.constant 0 : index
    %17 = vector.load %arg7[%c0_14, %c0_15] : memref<8x1xf32, #tpu.memory_space<vmem>>, vector<8x1xf32>
    tpu.vector_store %arg7[%c0_14, %c0_15], %16 {strides = array<i32>} : memref<8x1xf32, #tpu.memory_space<vmem>>, vector<8x1xf32>,
    %c0_i32_16 = arith.constant 0 : i32
    %18 = arith.cmpi eq, %arg0, %c0_i32_16 : i32
    %19 = arith.extui %18 : i1 to i32
    %c0_i32_17 = arith.constant 0 : i32
    %20 = arith.cmpi ne, %19, %c0_i32_17 : i32
    scf.if %20 {
      %c0_18 = arith.constant 0 : index
      %c0_19 = arith.constant 0 : index
      %21 = vector.load %arg6[%c0_18, %c0_19] : memref<8x1xf32, #tpu.memory_space<vmem>>, vector<8x1xf32>
      %c0_20 = arith.constant 0 : index
      %c0_21 = arith.constant 0 : index
      %22 = vector.load %arg4[%c0_20, %c0_21] : memref<8x1xf32, #tpu.memory_space<vmem>>, vector<8x1xf32>
      tpu.vector_store %arg4[%c0_20, %c0_21], %21 {strides = array<i32>} : memref<8x1xf32, #tpu.memory_space<vmem>>, vector<8x1xf32>,
      %c0_22 = arith.constant 0 : index
      %c0_23 = arith.constant 0 : index
      %23 = vector.load %arg7[%c0_22, %c0_23] : memref<8x1xf32, #tpu.memory_space<vmem>>, vector<8x1xf32>
      %c0_24 = arith.constant 0 : index
      %c0_25 = arith.constant 0 : index
      %24 = vector.load %arg5[%c0_24, %c0_25] : memref<8x1xf32, #tpu.memory_space<vmem>>, vector<8x1xf32>
      tpu.vector_store %arg5[%c0_24, %c0_25], %23 {strides = array<i32>} : memref<8x1xf32, #tpu.memory_space<vmem>>, vector<8x1xf32>,
    } else {
    }
    return
  }
  func.func @transform_0(%arg0: i32) -> (i32, i32) {
    %c0_i32 = arith.constant 0 : i32
    %c0_i32_0 = arith.constant 0 : i32
    return %c0_i32, %arg0 : i32, i32
  }
  func.func @transform_1(%arg0: i32) -> (i32, i32) {
    %c0_i32 = arith.constant 0 : i32
    %c0_i32_0 = arith.constant 0 : i32
    %c0_i32_1 = arith.constant 0 : i32
    return %c0_i32, %c0_i32_0 : i32, i32
  }
  func.func @transform_2(%arg0: i32) -> (i32, i32) {
    %c0_i32 = arith.constant 0 : i32
    %c0_i32_0 = arith.constant 0 : i32
    return %c0_i32, %arg0 : i32, i32
  }
  func.func @transform_3(%arg0: i32) -> (i32, i32) {
    %c0_i32 = arith.constant 0 : i32
    %c0_i32_0 = arith.constant 0 : i32
    %c0_i32_1 = arith.constant 0 : i32
    return %c0_i32, %c0_i32_0 : i32, i32
  }
  func.func @transform_4(%arg0: i32) -> (i32, i32) {
    %c0_i32 = arith.constant 0 : i32
    %c0_i32_0 = arith.constant 0 : i32
    %c0_i32_1 = arith.constant 0 : i32
    return %c0_i32, %c0_i32_0 : i32, i32
  }
}

module attributes {stable_mosaic.version = 11 : i64} {
  func.func @_bn_relu_kernel(%arg0: i32, %arg1: memref<8x512xf32, #tpu.memory_space<vmem>>, %arg2: memref<8x1xf32, #tpu.memory_space<vmem>>, %arg3: memref<8x1xf32, #tpu.memory_space<vmem>>, %arg4: memref<8x512xf32, #tpu.memory_space<vmem>>) attributes {dimension_semantics = [#tpu.dimension_semantics<parallel>], iteration_bounds = array<i64: 1>, scalar_prefetch = 0 : i64, scratch_operands = 0 : i64, tpu.core_type = #tpu.core_type<tc>, window_params = [{transform_indices = @transform_0, window_bounds = array<i64: 8, 512>}, {pipeline_mode = #tpu.pipeline_mode<synchronous>, transform_indices = @transform_1, window_bounds = array<i64: 8, 1>}, {pipeline_mode = #tpu.pipeline_mode<synchronous>, transform_indices = @transform_2, window_bounds = array<i64: 8, 1>}, {transform_indices = @transform_3, window_bounds = array<i64: 8, 512>}]} {
    %c0 = arith.constant 0 : index
    %c0_0 = arith.constant 0 : index
    %0 = vector.load %arg1[%c0, %c0_0] : memref<8x512xf32, #tpu.memory_space<vmem>>, vector<8x512xf32>
    %c0_1 = arith.constant 0 : index
    %c0_2 = arith.constant 0 : index
    %1 = vector.load %arg2[%c0_1, %c0_2] : memref<8x1xf32, #tpu.memory_space<vmem>>, vector<8x1xf32>
    %2 = vector.broadcast %1 : vector<8x1xf32> to vector<8x512xf32>
    %3 = arith.mulf %0, %2 : vector<8x512xf32>
    %c0_3 = arith.constant 0 : index
    %c0_4 = arith.constant 0 : index
    %4 = vector.load %arg3[%c0_3, %c0_4] : memref<8x1xf32, #tpu.memory_space<vmem>>, vector<8x1xf32>
    %5 = vector.broadcast %4 : vector<8x1xf32> to vector<8x512xf32>
    %6 = arith.addf %3, %5 : vector<8x512xf32>
    %cst = arith.constant 0.000000e+00 : f32
    %7 = vector.broadcast %cst : f32 to vector<8x512xf32>
    %8 = arith.maximumf %6, %7 : vector<8x512xf32>
    %c0_5 = arith.constant 0 : index
    %c0_6 = arith.constant 0 : index
    %9 = vector.load %arg4[%c0_5, %c0_6] : memref<8x512xf32, #tpu.memory_space<vmem>>, vector<8x512xf32>
    tpu.vector_store %arg4[%c0_5, %c0_6], %8 {strides = array<i32>} : memref<8x512xf32, #tpu.memory_space<vmem>>, vector<8x512xf32>,
    return
  }
  func.func @transform_0(%arg0: i32) -> (i32, i32) {
    %c0_i32 = arith.constant 0 : i32
    %c0_i32_0 = arith.constant 0 : i32
    return %c0_i32, %arg0 : i32, i32
  }
  func.func @transform_1(%arg0: i32) -> (i32, i32) {
    %c0_i32 = arith.constant 0 : i32
    %c0_i32_0 = arith.constant 0 : i32
    %c0_i32_1 = arith.constant 0 : i32
    return %c0_i32, %c0_i32_0 : i32, i32
  }
  func.func @transform_2(%arg0: i32) -> (i32, i32) {
    %c0_i32 = arith.constant 0 : i32
    %c0_i32_0 = arith.constant 0 : i32
    %c0_i32_1 = arith.constant 0 : i32
    return %c0_i32, %c0_i32_0 : i32, i32
  }
  func.func @transform_3(%arg0: i32) -> (i32, i32) {
    %c0_i32 = arith.constant 0 : i32
    %c0_i32_0 = arith.constant 0 : i32
    return %c0_i32, %arg0 : i32, i32
  }
}

</mosaic_0001>

<llo_original>
// kernel: downsample_unet3d_forward.6
$region0: #{downsample_unet3d_forward.6}
  #allocation0 [shape = 'u32[]', space=smem, size = 0x4, offset = 0x4, fixed_abs, tag = 'smem constant byte address 0x4 - core index']
  #allocation1 [shape = 'u32[144,128]{1,0:T(1,128)}', space=vmem, size = 0x12000, scoped, tag = 'internal scratch']
  #allocation2 [shape = 'f32[8,1]{1,0:T(8,128)}', space=vmem, size = 0x1000, scoped, tag = 'scratch operand']
  #allocation3 [shape = 'f32[8,1]{1,0:T(8,128)}', space=vmem, size = 0x1000, scoped, tag = 'scratch operand']
  %s0 = inlined_call_operand.vmem [shape: bf16[108,2048], index: 0, kind: input, shape index: {}]
  %s1 = inlined_call_operand.vmem [shape: bf16[8,108], index: 1, kind: input, shape index: {}]
  %s2 = inlined_call_operand.vmem [shape: f32[8,2048], index: 2, kind: output, shape index: {0}]
  %s3 = inlined_call_operand.vmem [shape: f32[8,1], index: 3, kind: output, shape index: {1}]
  %s4 = inlined_call_operand.vmem [shape: f32[8,1], index: 4, kind: output, shape index: {2}]
  %5 = xla_tuple %s2, %s3, %s4
  %s6 = sld [smem:[#allocation0]]
  $region42: #{downsample_unet3d_forward.6} parent=0
    _
  %s8 = ssub.s32 1, %s6
  %s9 = scalar_select 0, %s8, %s6
  // Predicated region
  $region2: #{downsample_unet3d_forward.6} parent=0 // pred_check
    _
  $region3: #{downsample_unet3d_forward.6} parent=0 // pred_check_branch
    %11 = sbr.rel (0) target = $region5
  $region4: #{downsample_unet3d_forward.6} parent=0 // pred_region
    _
  $region5: #{downsample_unet3d_forward.6} parent=0 // pred_fallthru
    _
  // Predicated region
  $region6: #{downsample_unet3d_forward.6} parent=0 // pred_check
    _
  $region7: #{downsample_unet3d_forward.6} parent=0 // pred_check_branch
    %13 = sbr.rel (0) target = $region9
  $region8: #{downsample_unet3d_forward.6} parent=0 // pred_region
    _
  $region9: #{downsample_unet3d_forward.6} parent=0 // pred_fallthru
    _
  %p15 = scmp.eq.s32.totalorder 0, 0
  // Predicated region
  $region10: #{downsample_unet3d_forward.6} parent=0 // pred_check
    %p16 = pneg %p15
  $region11: #{downsample_unet3d_forward.6} parent=0 // pred_check_branch
    %18 = sbr.rel (%p16) target = $region13
  $region12: #{downsample_unet3d_forward.6} parent=0 // pred_region
    %vm19 = vcmask 7168
    %20 = vst.msk [vmem:[#allocation2] sm:$0xff] %vm19, 0.0
    %21 = vst.msk [vmem:[#allocation3] sm:$0xff] %vm19, 0.0
  $region13: #{downsample_unet3d_forward.6} parent=0 // pred_fallthru
    _
  %v22 = vld [vmem:[%s1] sm:$0xf]
  %v23 = vld [vmem:[%s0] sm:$0xff]
  %v24 = vld [vmem:[%s0 + $0x8] sm:$0xff]
  %v25 = vld [vmem:[%s0 + $0x10] sm:$0xff]
  %v26 = vld [vmem:[%s0 + $0x18] sm:$0xff]
  %v27 = vld [vmem:[%s0 + $0x20] sm:$0xff]
  %v28 = vld [vmem:[%s0 + $0x28] sm:$0xff]
  %v29 = vld [vmem:[%s0 + $0x30] sm:$0xff]
  %v30 = vld [vmem:[%s0 + $0x38] sm:$0xff]
  %v31 = vld [vmem:[%s0 + $0x40] sm:$0xff]
  %v32 = vld [vmem:[%s0 + $0x48] sm:$0xff]
  %v33 = vld [vmem:[%s0 + $0x50] sm:$0xff]
  %v34 = vld [vmem:[%s0 + $0x58] sm:$0xff]
  %v35 = vld [vmem:[%s0 + $0x60] sm:$0xff]
  %v36 = vld [vmem:[%s0 + $0x68] sm:$0xff]
  %v37 = vld [vmem:[%s0 + $0x70] sm:$0xff]
  %v38 = vld [vmem:[%s0 + $0x78] sm:$0xff]
  %v39 = vld [vmem:[%s0 + $0x80] sm:$0xff]
  %v40 = vld [vmem:[%s0 + $0x88] sm:$0xff]
  %v41 = vld [vmem:[%s0 + $0x90] sm:$0xff]
  %v42 = vld [vmem:[%s0 + $0x98] sm:$0xff]
  %v43 = vld [vmem:[%s0 + $0xa0] sm:$0xff]
  %v44 = vld [vmem:[%s0 + $0xa8] sm:$0xff]
  %v45 = vld [vmem:[%s0 + $0xb0] sm:$0xff]
  %v46 = vld [vmem:[%s0 + $0xb8] sm:$0xff]
  %v47 = vld [vmem:[%s0 + $0xc0] sm:$0xff]
  %v48 = vld [vmem:[%s0 + $0xc8] sm:$0xff]
  %v49 = vld [vmem:[%s0 + $0xd0] sm:$0xff]
  %v50 = vld [vmem:[%s0 + $0xd8] sm:$0xff]
  %v51 = vld [vmem:[%s0 + $0xe0] sm:$0xff]
  %v52 = vld [vmem:[%s0 + $0xe8] sm:$0xff]
  %v53 = vld [vmem:[%s0 + $0xf0] sm:$0xff]
  %v54 = vld [vmem:[%s0 + $0xf8] sm:$0xff]
  %v55 = vld [vmem:[%s0 + $0x100] sm:$0xff]
  %v56 = vld [vmem:[%s0 + $0x108] sm:$0xff]
  %v57 = vld [vmem:[%s0 + $0x110] sm:$0xff]
  %v58 = vld [vmem:[%s0 + $0x118] sm:$0xff]
  %v59 = vld [vmem:[%s0 + $0x120] sm:$0xff]
  %v60 = vld [vmem:[%s0 + $0x128] sm:$0xff]
  %v61 = vld [vmem:[%s0 + $0x130] sm:$0xff]
  %v62 = vld [vmem:[%s0 + $0x138] sm:$0xff]
  %v63 = vld [vmem:[%s0 + $0x140] sm:$0xff]
  %v64 = vld [vmem:[%s0 + $0x148] sm:$0xff]
  %v65 = vld [vmem:[%s0 + $0x150] sm:$0xff]
  %v66 = vld [vmem:[%s0 + $0x158] sm:$0xff]
  %v67 = vld [vmem:[%s0 + $0x160] sm:$0xff]
  %v68 = vld [vmem:[%s0 + $0x168] sm:$0xff]
  %v69 = vld [vmem:[%s0 + $0x170] sm:$0xff]
  %v70 = vld [vmem:[%s0 + $0x178] sm:$0xff]
  %v71 = vld [vmem:[%s0 + $0x180] sm:$0xff]
  %v72 = vld [vmem:[%s0 + $0x188] sm:$0xff]
  %v73 = vld [vmem:[%s0 + $0x190] sm:$0xff]
  %v74 = vld [vmem:[%s0 + $0x198] sm:$0xff]
  %v75 = vld [vmem:[%s0 + $0x1a0] sm:$0xff]
  %v76 = vld [vmem:[%s0 + $0x1a8] sm:$0xff]
  %v77 = vld [vmem:[%s0 + $0x1b0] sm:$0xff]
  %v78 = vld [vmem:[%s0 + $0x1b8] sm:$0xff]
  %v79 = vld [vmem:[%s0 + $0x1c0] sm:$0xff]
  %v80 = vld [vmem:[%s0 + $0x1c8] sm:$0xff]
  %v81 = vld [vmem:[%s0 + $0x1d0] sm:$0xff]
  %v82 = vld [vmem:[%s0 + $0x1d8] sm:$0xff]
  %v83 = vld [vmem:[%s0 + $0x1e0] sm:$0xff]
  %v84 = vld [vmem:[%s0 + $0x1e8] sm:$0xff]
  %v85 = vld [vmem:[%s0 + $0x1f0] sm:$0xff]
  %v86 = vld [vmem:[%s0 + $0x1f8] sm:$0xff]
  %v87 = vld [vmem:[%s0 + $0x200] sm:$0xff]
  %v88 = vld [vmem:[%s0 + $0x208] sm:$0xff]
  %v89 = vld [vmem:[%s0 + $0x210] sm:$0xff]
  %v90 = vld [vmem:[%s0 + $0x218] sm:$0xff]
  %v91 = vld [vmem:[%s0 + $0x220] sm:$0xff]
  %v92 = vld [vmem:[%s0 + $0x228] sm:$0xff]
  %v93 = vld [vmem:[%s0 + $0x230] sm:$0xff]
  %v94 = vld [vmem:[%s0 + $0x238] sm:$0xff]
  %v95 = vld [vmem:[%s0 + $0x240] sm:$0xff]
  %v96 = vld [vmem:[%s0 + $0x248] sm:$0xff]
  %v97 = vld [vmem:[%s0 + $0x250] sm:$0xff]
  %v98 = vld [vmem:[%s0 + $0x258] sm:$0xff]
  %v99 = vld [vmem:[%s0 + $0x260] sm:$0xff]
  %v100 = vld [vmem:[%s0 + $0x268] sm:$0xff]
  %v101 = vld [vmem:[%s0 + $0x270] sm:$0xff]
  %v102 = vld [vmem:[%s0 + $0x278] sm:$0xff]
  %v103 = vld [vmem:[%s0 + $0x280] sm:$0xff]
  %v104 = vld [vmem:[%s0 + $0x288] sm:$0xff]
  %v105 = vld [vmem:[%s0 + $0x290] sm:$0xff]
  %v106 = vld [vmem:[%s0 + $0x298] sm:$0xff]
  %v107 = vld [vmem:[%s0 + $0x2a0] sm:$0xff]
  %v108 = vld [vmem:[%s0 + $0x2a8] sm:$0xff]
  %v109 = vld [vmem:[%s0 + $0x2b0] sm:$0xff]
  %v110 = vld [vmem:[%s0 + $0x2b8] sm:$0xff]
  %v111 = vld [vmem:[%s0 + $0x2c0] sm:$0xff]
  %v112 = vld [vmem:[%s0 + $0x2c8] sm:$0xff]
  %v113 = vld [vmem:[%s0 + $0x2d0] sm:$0xff]
  %v114 = vld [vmem:[%s0 + $0x2d8] sm:$0xff]
  %v115 = vld [vmem:[%s0 + $0x2e0] sm:$0xff]
  %v116 = vld [vmem:[%s0 + $0x2e8] sm:$0xff]
  %v117 = vld [vmem:[%s0 + $0x2f0] sm:$0xff]
  %v118 = vld [vmem:[%s0 + $0x2f8] sm:$0xff]
  %v119 = vld [vmem:[%s0 + $0x300] sm:$0xff]
  %v120 = vld [vmem:[%s0 + $0x308] sm:$0xff]
  %v121 = vld [vmem:[%s0 + $0x310] sm:$0xff]
  %v122 = vld [vmem:[%s0 + $0x318] sm:$0xff]
  %v123 = vld [vmem:[%s0 + $0x320] sm:$0xff]
  %v124 = vld [vmem:[%s0 + $0x328] sm:$0xff]
  %v125 = vld [vmem:[%s0 + $0x330] sm:$0xff]
  %v126 = vld [vmem:[%s0 + $0x338] sm:$0xff]
  %v127 = vld [vmem:[%s0 + $0x340] sm:$0x33]
  %v128 = vld [vmem:[%s0 + $0x348] sm:$0x33]
  %v129 = vld [vmem:[%s0 + $0x350] sm:$0x33]
  %v130 = vld [vmem:[%s0 + $0x358] sm:$0x33]
  %v131 = vld [vmem:[%s0 + $0x360] sm:$0x33]
  %v132 = vld [vmem:[%s0 + $0x368] sm:$0x33]
  %v133 = vld [vmem:[%s0 + $0x370] sm:$0x33]
  %v134 = vld [vmem:[%s0 + $0x378] sm:$0x33]
  %v247 = vunpack.c.l.b16 %v23
  %v248 = vunpack.c.h.b16 %v23
  %v249 = vunpack.c.l.b16 %v24
  %v250 = vunpack.c.h.b16 %v24
  %v251 = vunpack.c.l.b16 %v25
  %v252 = vunpack.c.h.b16 %v25
  %v253 = vunpack.c.l.b16 %v26
  %v254 = vunpack.c.h.b16 %v26
  %v255 = vunpack.c.l.b16 %v27
  %v256 = vunpack.c.h.b16 %v27
  %v257 = vunpack.c.l.b16 %v28
  %v258 = vunpack.c.h.b16 %v28
  %v259 = vunpack.c.l.b16 %v29
  %v260 = vunpack.c.h.b16 %v29
  %v261 = vunpack.c.l.b16 %v30
  %v262 = vunpack.c.h.b16 %v30
  %v263 = vunpack.c.l.b16 %v31
  %v264 = vunpack.c.h.b16 %v31
  %v265 = vunpack.c.l.b16 %v32
  %v266 = vunpack.c.h.b16 %v32
  %v267 = vunpack.c.l.b16 %v33
  %v268 = vunpack.c.h.b16 %v33
  %v269 = vunpack.c.l.b16 %v34
  %v270 = vunpack.c.h.b16 %v34
  %v271 = vunpack.c.l.b16 %v35
  %v272 = vunpack.c.h.b16 %v35
  %v273 = vunpack.c.l.b16 %v36
  %v274 = vunpack.c.h.b16 %v36
  %v275 = vunpack.c.l.b16 %v37
  %v276 = vunpack.c.h.b16 %v37
  %v277 = vunpack.c.l.b16 %v38
  %v278 = vunpack.c.h.b16 %v38
  %v279 = vunpack.c.l.b16 %v39
  %v280 = vunpack.c.h.b16 %v39
  %v281 = vunpack.c.l.b16 %v40
  %v282 = vunpack.c.h.b16 %v40
  %v283 = vunpack.c.l.b16 %v41
  %v284 = vunpack.c.h.b16 %v41
  %v285 = vunpack.c.l.b16 %v42
  %v286 = vunpack.c.h.b16 %v42
  %v287 = vunpack.c.l.b16 %v43
  %v288 = vunpack.c.h.b16 %v43
  %v289 = vunpack.c.l.b16 %v44
  %v290 = vunpack.c.h.b16 %v44
  %v291 = vunpack.c.l.b16 %v45
  %v292 = vunpack.c.h.b16 %v45
  %v293 = vunpack.c.l.b16 %v46
  %v294 = vunpack.c.h.b16 %v46
  %v295 = vunpack.c.l.b16 %v47
  %v296 = vunpack.c.h.b16 %v47
  %v297 = vunpack.c.l.b16 %v48
  %v298 = vunpack.c.h.b16 %v48
  %v299 = vunpack.c.l.b16 %v49
  %v300 = vunpack.c.h.b16 %v49
  %v301 = vunpack.c.l.b16 %v50
  %v302 = vunpack.c.h.b16 %v50
  %v303 = vunpack.c.l.b16 %v51
  %v304 = vunpack.c.h.b16 %v51
  %v305 = vunpack.c.l.b16 %v52
  %v306 = vunpack.c.h.b16 %v52
  %v307 = vunpack.c.l.b16 %v53
  %v308 = vunpack.c.h.b16 %v53
  %v309 = vunpack.c.l.b16 %v54
  %v310 = vunpack.c.h.b16 %v54
  %v311 = vunpack.c.l.b16 %v55
  %v312 = vunpack.c.h.b16 %v55
  %v313 = vunpack.c.l.b16 %v56
  %v314 = vunpack.c.h.b16 %v56
  %v315 = vunpack.c.l.b16 %v57
  %v316 = vunpack.c.h.b16 %v57
  %v317 = vunpack.c.l.b16 %v58
  %v318 = vunpack.c.h.b16 %v58
  %v319 = vunpack.c.l.b16 %v59
  %v320 = vunpack.c.h.b16 %v59
  %v321 = vunpack.c.l.b16 %v60
  %v322 = vunpack.c.h.b16 %v60
  %v323 = vunpack.c.l.b16 %v61
  %v324 = vunpack.c.h.b16 %v61
  %v325 = vunpack.c.l.b16 %v62
  %v326 = vunpack.c.h.b16 %v62
  %v327 = vunpack.c.l.b16 %v63
  %v328 = vunpack.c.h.b16 %v63
  %v329 = vunpack.c.l.b16 %v64
  %v330 = vunpack.c.h.b16 %v64
  %v331 = vunpack.c.l.b16 %v65
  %v332 = vunpack.c.h.b16 %v65
  %v333 = vunpack.c.l.b16 %v66
  %v334 = vunpack.c.h.b16 %v66
  %v335 = vunpack.c.l.b16 %v67
  %v336 = vunpack.c.h.b16 %v67
  %v337 = vunpack.c.l.b16 %v68
  %v338 = vunpack.c.h.b16 %v68
  %v339 = vunpack.c.l.b16 %v69
  %v340 = vunpack.c.h.b16 %v69
  %v341 = vunpack.c.l.b16 %v70
  %v342 = vunpack.c.h.b16 %v70
  %v343 = vunpack.c.l.b16 %v71
  %v344 = vunpack.c.h.b16 %v71
  %v345 = vunpack.c.l.b16 %v72
  %v346 = vunpack.c.h.b16 %v72
  %v347 = vunpack.c.l.b16 %v73
  %v348 = vunpack.c.h.b16 %v73
  %v349 = vunpack.c.l.b16 %v74
  %v350 = vunpack.c.h.b16 %v74
  %v351 = vunpack.c.l.b16 %v75
  %v352 = vunpack.c.h.b16 %v75
  %v353 = vunpack.c.l.b16 %v76
  %v354 = vunpack.c.h.b16 %v76
  %v355 = vunpack.c.l.b16 %v77
  %v356 = vunpack.c.h.b16 %v77
  %v357 = vunpack.c.l.b16 %v78
  %v358 = vunpack.c.h.b16 %v78
  %v359 = vunpack.c.l.b16 %v79
  %v360 = vunpack.c.h.b16 %v79
  %v361 = vunpack.c.l.b16 %v80
  %v362 = vunpack.c.h.b16 %v80
  %v363 = vunpack.c.l.b16 %v81
  %v364 = vunpack.c.h.b16 %v81
  %v365 = vunpack.c.l.b16 %v82
  %v366 = vunpack.c.h.b16 %v82
  %v367 = vunpack.c.l.b16 %v83
  %v368 = vunpack.c.h.b16 %v83
  %v369 = vunpack.c.l.b16 %v84
  %v370 = vunpack.c.h.b16 %v84
  %v371 = vunpack.c.l.b16 %v85
  %v372 = vunpack.c.h.b16 %v85
  %v373 = vunpack.c.l.b16 %v86
  %v374 = vunpack.c.h.b16 %v86
  %v375 = vunpack.c.l.b16 %v87
  %v376 = vunpack.c.h.b16 %v87
  %v377 = vunpack.c.l.b16 %v88
  %v378 = vunpack.c.h.b16 %v88
  %v379 = vunpack.c.l.b16 %v89
  %v380 = vunpack.c.h.b16 %v89
  %v381 = vunpack.c.l.b16 %v90
  %v382 = vunpack.c.h.b16 %v90
  %v383 = vunpack.c.l.b16 %v91
  %v384 = vunpack.c.h.b16 %v91
  %v385 = vunpack.c.l.b16 %v92
  %v386 = vunpack.c.h.b16 %v92
  %v387 = vunpack.c.l.b16 %v93
  %v388 = vunpack.c.h.b16 %v93
  %v389 = vunpack.c.l.b16 %v94
  %v390 = vunpack.c.h.b16 %v94
  %v391 = vunpack.c.l.b16 %v95
  %v392 = vunpack.c.h.b16 %v95
  %v393 = vunpack.c.l.b16 %v96
  %v394 = vunpack.c.h.b16 %v96
  %v395 = vunpack.c.l.b16 %v97
  %v396 = vunpack.c.h.b16 %v97
  %v397 = vunpack.c.l.b16 %v98
  %v398 = vunpack.c.h.b16 %v98
  %v399 = vunpack.c.l.b16 %v99
  %v400 = vunpack.c.h.b16 %v99
  %v401 = vunpack.c.l.b16 %v100
  %v402 = vunpack.c.h.b16 %v100
  %v403 = vunpack.c.l.b16 %v101
  %v404 = vunpack.c.h.b16 %v101
  %v405 = vunpack.c.l.b16 %v102
  %v406 = vunpack.c.h.b16 %v102
  %v407 = vunpack.c.l.b16 %v103
  %v408 = vunpack.c.h.b16 %v103
  %v409 = vunpack.c.l.b16 %v104
  %v410 = vunpack.c.h.b16 %v104
  %v411 = vunpack.c.l.b16 %v105
  %v412 = vunpack.c.h.b16 %v105
  %v413 = vunpack.c.l.b16 %v106
  %v414 = vunpack.c.h.b16 %v106
  %v415 = vunpack.c.l.b16 %v107
  %v416 = vunpack.c.h.b16 %v107
  %v417 = vunpack.c.l.b16 %v108
  %v418 = vunpack.c.h.b16 %v108
  %v419 = vunpack.c.l.b16 %v109
  %v420 = vunpack.c.h.b16 %v109
  %v421 = vunpack.c.l.b16 %v110
  %v422 = vunpack.c.h.b16 %v110
  %v423 = vunpack.c.l.b16 %v111
  %v424 = vunpack.c.h.b16 %v111
  %v425 = vunpack.c.l.b16 %v112
  %v426 = vunpack.c.h.b16 %v112
  %v427 = vunpack.c.l.b16 %v113
  %v428 = vunpack.c.h.b16 %v113
  %v429 = vunpack.c.l.b16 %v114
  %v430 = vunpack.c.h.b16 %v114
  %v431 = vunpack.c.l.b16 %v115
  %v432 = vunpack.c.h.b16 %v115
  %v433 = vunpack.c.l.b16 %v116
  %v434 = vunpack.c.h.b16 %v116
  %v435 = vunpack.c.l.b16 %v117
  %v436 = vunpack.c.h.b16 %v117
  %v437 = vunpack.c.l.b16 %v118
  %v438 = vunpack.c.h.b16 %v118
  %v439 = vunpack.c.l.b16 %v119
  %v440 = vunpack.c.h.b16 %v119
  %v441 = vunpack.c.l.b16 %v120
  %v442 = vunpack.c.h.b16 %v120
  %v443 = vunpack.c.l.b16 %v121
  %v444 = vunpack.c.h.b16 %v121
  %v445 = vunpack.c.l.b16 %v122
  %v446 = vunpack.c.h.b16 %v122
  %v447 = vunpack.c.l.b16 %v123
  %v448 = vunpack.c.h.b16 %v123
  %v449 = vunpack.c.l.b16 %v124
  %v450 = vunpack.c.h.b16 %v124
  %v451 = vunpack.c.l.b16 %v125
  %v452 = vunpack.c.h.b16 %v125
  %v453 = vunpack.c.l.b16 %v126
  %v454 = vunpack.c.h.b16 %v126
  %v455 = vunpack.c.l.b16 %v127
  %v456 = vunpack.c.h.b16 %v127
  %v457 = vunpack.c.l.b16 %v128
  %v458 = vunpack.c.h.b16 %v128
  %v459 = vunpack.c.l.b16 %v129
  %v460 = vunpack.c.h.b16 %v129
  %v461 = vunpack.c.l.b16 %v130
  %v462 = vunpack.c.h.b16 %v130
  %v463 = vunpack.c.l.b16 %v131
  %v464 = vunpack.c.h.b16 %v131
  %v465 = vunpack.c.l.b16 %v132
  %v466 = vunpack.c.h.b16 %v132
  %v467 = vunpack.c.l.b16 %v133
  %v468 = vunpack.c.h.b16 %v133
  %v469 = vunpack.c.l.b16 %v134
  %v470 = vunpack.c.h.b16 %v134
  %v471 = vpack.c.b16 %v263, %v247
  %v472 = vpack.c.b16 %v264, %v248
  %v473 = vpack.c.b16 %v265, %v249
  %v474 = vpack.c.b16 %v266, %v250
  %v475 = vpack.c.b16 %v267, %v251
  %v476 = vpack.c.b16 %v268, %v252
  %v477 = vpack.c.b16 %v269, %v253
  %v478 = vpack.c.b16 %v270, %v254
  %v479 = vpack.c.b16 %v271, %v255
  %v480 = vpack.c.b16 %v272, %v256
  %v481 = vpack.c.b16 %v273, %v257
  %v482 = vpack.c.b16 %v274, %v258
  %v483 = vpack.c.b16 %v275, %v259
  %v484 = vpack.c.b16 %v276, %v260
  %v485 = vpack.c.b16 %v277, %v261
  %v486 = vpack.c.b16 %v278, %v262
  %v487 = vpack.c.b16 %v295, %v279
  %v488 = vpack.c.b16 %v296, %v280
  %v489 = vpack.c.b16 %v297, %v281
  %v490 = vpack.c.b16 %v298, %v282
  %v491 = vpack.c.b16 %v299, %v283
  %v492 = vpack.c.b16 %v300, %v284
  %v493 = vpack.c.b16 %v301, %v285
  %v494 = vpack.c.b16 %v302, %v286
  %v495 = vpack.c.b16 %v303, %v287
  %v496 = vpack.c.b16 %v304, %v288
  %v497 = vpack.c.b16 %v305, %v289
  %v498 = vpack.c.b16 %v306, %v290
  %v499 = vpack.c.b16 %v307, %v291
  %v500 = vpack.c.b16 %v308, %v292
  %v501 = vpack.c.b16 %v309, %v293
  %v502 = vpack.c.b16 %v310, %v294
  %v503 = vpack.c.b16 %v327, %v311
  %v504 = vpack.c.b16 %v328, %v312
  %v505 = vpack.c.b16 %v329, %v313
  %v506 = vpack.c.b16 %v330, %v314
  %v507 = vpack.c.b16 %v331, %v315
  %v508 = vpack.c.b16 %v332, %v316
  %v509 = vpack.c.b16 %v333, %v317
  %v510 = vpack.c.b16 %v334, %v318
  %v511 = vpack.c.b16 %v335, %v319
  %v512 = vpack.c.b16 %v336, %v320
  %v513 = vpack.c.b16 %v337, %v321
  %v514 = vpack.c.b16 %v338, %v322
  %v515 = vpack.c.b16 %v339, %v323
  %v516 = vpack.c.b16 %v340, %v324
  %v517 = vpack.c.b16 %v341, %v325
  %v518 = vpack.c.b16 %v342, %v326
  %v519 = vpack.c.b16 %v359, %v343
  %v520 = vpack.c.b16 %v360, %v344
  %v521 = vpack.c.b16 %v361, %v345
  %v522 = vpack.c.b16 %v362, %v346
  %v523 = vpack.c.b16 %v363, %v347
  %v524 = vpack.c.b16 %v364, %v348
  %v525 = vpack.c.b16 %v365, %v349
  %v526 = vpack.c.b16 %v366, %v350
  %v527 = vpack.c.b16 %v367, %v351
  %v528 = vpack.c.b16 %v368, %v352
  %v529 = vpack.c.b16 %v369, %v353
  %v530 = vpack.c.b16 %v370, %v354
  %v531 = vpack.c.b16 %v371, %v355
  %v532 = vpack.c.b16 %v372, %v356
  %v533 = vpack.c.b16 %v373, %v357
  %v534 = vpack.c.b16 %v374, %v358
  %v535 = vpack.c.b16 %v391, %v375
  %v536 = vpack.c.b16 %v392, %v376
  %v537 = vpack.c.b16 %v393, %v377
  %v538 = vpack.c.b16 %v394, %v378
  %v539 = vpack.c.b16 %v395, %v379
  %v540 = vpack.c.b16 %v396, %v380
  %v541 = vpack.c.b16 %v397, %v381
  %v542 = vpack.c.b16 %v398, %v382
  %v543 = vpack.c.b16 %v399, %v383
  %v544 = vpack.c.b16 %v400, %v384
  %v545 = vpack.c.b16 %v401, %v385
  %v546 = vpack.c.b16 %v402, %v386
  %v547 = vpack.c.b16 %v403, %v387
  %v548 = vpack.c.b16 %v404, %v388
  %v549 = vpack.c.b16 %v405, %v389
  %v550 = vpack.c.b16 %v406, %v390
  %v551 = vpack.c.b16 %v423, %v407
  %v552 = vpack.c.b16 %v424, %v408
  %v553 = vpack.c.b16 %v425, %v409
  %v554 = vpack.c.b16 %v426, %v410
  %v555 = vpack.c.b16 %v427, %v411
  %v556 = vpack.c.b16 %v428, %v412
  %v557 = vpack.c.b16 %v429, %v413
  %v558 = vpack.c.b16 %v430, %v414
  %v559 = vpack.c.b16 %v431, %v415
  %v560 = vpack.c.b16 %v432, %v416
  %v561 = vpack.c.b16 %v433, %v417
  %v562 = vpack.c.b16 %v434, %v418
  %v563 = vpack.c.b16 %v435, %v419
  %v564 = vpack.c.b16 %v436, %v420
  %v565 = vpack.c.b16 %v437, %v421
  %v566 = vpack.c.b16 %v438, %v422
  %v567 = vpack.c.b16 %v455, %v439
  %v568 = vpack.c.b16 %v456, %v440
  %v569 = vpack.c.b16 %v457, %v441
  %v570 = vpack.c.b16 %v458, %v442
  %v571 = vpack.c.b16 %v459, %v443
  %v572 = vpack.c.b16 %v460, %v444
  %v573 = vpack.c.b16 %v461, %v445
  %v574 = vpack.c.b16 %v462, %v446
  %v575 = vpack.c.b16 %v463, %v447
  %v576 = vpack.c.b16 %v464, %v448
  %v577 = vpack.c.b16 %v465, %v449
  %v578 = vpack.c.b16 %v466, %v450
  %v579 = vpack.c.b16 %v467, %v451
  %v580 = vpack.c.b16 %v468, %v452
  %v581 = vpack.c.b16 %v469, %v453
  %v582 = vpack.c.b16 %v470, %v454
  %vm679 = vcmask 883712
  %v681 = vsel %vm679, %v22, 0
  %vm683 = vcmask 1045504
  %v685 = vsel %vm683, %v567, 0
  %v688 = vsel %vm683, %v568, 0
  %v691 = vsel %vm683, %v569, 0
  %v694 = vsel %vm683, %v570, 0
  %v697 = vsel %vm683, %v571, 0
  %v700 = vsel %vm683, %v572, 0
  %v703 = vsel %vm683, %v573, 0
  %v706 = vsel %vm683, %v574, 0
  %v709 = vsel %vm683, %v575, 0
  %v712 = vsel %vm683, %v576, 0
  %v715 = vsel %vm683, %v577, 0
  %v718 = vsel %vm683, %v578, 0
  %v721 = vsel %vm683, %v579, 0
  %v724 = vsel %vm683, %v580, 0
  %v727 = vsel %vm683, %v581, 0
  %v730 = vsel %vm683, %v582, 0
  %732 = vmatprep.subr.bf16.mxu0 %v472
  %733 = vmatpush1.bf16.msra.mxu0 %v471
  %734 = vmatprep.subr.bf16.mxu0 %v488
  %735 = vmatpush1.bf16.msra.mxu0 %v487
  %736 = vmatprep.subr.bf16.mxu0 %v504
  %737 = vmatpush1.bf16.msra.mxu0 %v503
  %738 = vmatprep.subr.bf16.mxu0 %v520
  %739 = vmatpush1.bf16.msra.mxu0 %v519
  %740 = vmatprep.subr.bf16.mxu0 %v536
  %741 = vmatpush1.bf16.msra.mxu0 %v535
  %742 = vmatprep.subr.bf16.mxu0 %v552
  %743 = vmatpush1.bf16.msra.mxu0 %v551
  %744 = vmatprep.subr.bf16.mxu0 %v688
  %745 = vmatpush1.bf16.msra.mxu0 %v685
  %746 = vmatprep.subr.bf16.mxu0 0
  %747 = vmatpush1.bf16.msra.mxu0 0
  %748 = vmatprep.subr.bf16.mxu0 0
  %749 = vmatpush1.bf16.msra.mxu0 0
  %750 = vmatprep.subr.bf16.mxu0 0
  %751 = vmatpush1.bf16.msra.mxu0 0
  %752 = vmatprep.subr.bf16.mxu0 0
  %753 = vmatpush1.bf16.msra.mxu0 0
  %754 = vmatprep.subr.bf16.mxu0 0
  %755 = vmatpush1.bf16.msra.mxu0 0
  %756 = vmatprep.subr.bf16.mxu0 0
  %757 = vmatpush1.bf16.msra.mxu0 0
  %758 = vmatprep.subr.bf16.mxu0 0
  %759 = vmatpush1.bf16.msra.mxu0 0
  %760 = vmatprep.subr.bf16.mxu0 0
  %761 = vmatpush1.bf16.msra.mxu0 0
  %762 = vmatprep.subr.bf16.mxu0 0
  %763 = vmatpush1.bf16.msra.mxu0 0
  %764 = vmatprep.mubr.bf16.mxu0 0
  %765 = vmatmul.mubr.bf16.gmra.mrb[0].mxu0 %v681
  %v766 = vpop.f32.mrb[0].mxu0
  %v767 = vadd.f32 0.0, %v766
  %v768 = vpop.f32.mrb[0].mxu0
  %v769 = vadd.f32 0.0, %v768
  %v770 = vpop.f32.mrb[0].mxu0
  %v771 = vpop.f32.mrb[0].mxu0
  %772 = vdwg.mxu0
  %773 = vmatprep.subr.bf16.mxu0 %v474
  %774 = vmatpush1.bf16.msra.mxu0 %v473
  %775 = vmatprep.subr.bf16.mxu0 %v490
  %776 = vmatpush1.bf16.msra.mxu0 %v489
  %777 = vmatprep.subr.bf16.mxu0 %v506
  %778 = vmatpush1.bf16.msra.mxu0 %v505
  %779 = vmatprep.subr.bf16.mxu0 %v522
  %780 = vmatpush1.bf16.msra.mxu0 %v521
  %781 = vmatprep.subr.bf16.mxu0 %v538
  %782 = vmatpush1.bf16.msra.mxu0 %v537
  %783 = vmatprep.subr.bf16.mxu0 %v554
  %784 = vmatpush1.bf16.msra.mxu0 %v553
  %785 = vmatprep.subr.bf16.mxu0 %v694
  %786 = vmatpush1.bf16.msra.mxu0 %v691
  %787 = vmatprep.subr.bf16.mxu0 0
  %788 = vmatpush1.bf16.msra.mxu0 0
  %789 = vmatprep.subr.bf16.mxu0 0
  %790 = vmatpush1.bf16.msra.mxu0 0
  %791 = vmatprep.subr.bf16.mxu0 0
  %792 = vmatpush1.bf16.msra.mxu0 0
  %793 = vmatprep.subr.bf16.mxu0 0
  %794 = vmatpush1.bf16.msra.mxu0 0
  %795 = vmatprep.subr.bf16.mxu0 0
  %796 = vmatpush1.bf16.msra.mxu0 0
  %797 = vmatprep.subr.bf16.mxu0 0
  %798 = vmatpush1.bf16.msra.mxu0 0
  %799 = vmatprep.subr.bf16.mxu0 0
  %800 = vmatpush1.bf16.msra.mxu0 0
  %801 = vmatprep.subr.bf16.mxu0 0
  %802 = vmatpush1.bf16.msra.mxu0 0
  %803 = vmatprep.subr.bf16.mxu0 0
  %804 = vmatpush1.bf16.msra.mxu0 0
  %805 = vmatprep.mubr.bf16.mxu0 0
  %806 = vmatmul.mubr.bf16.gmra.mrb[0].mxu0 %v681
  %v807 = vpop.f32.mrb[0].mxu0
  %v808 = vadd.f32 0.0, %v807
  %v809 = vpop.f32.mrb[0].mxu0
  %v810 = vadd.f32 0.0, %v809
  %v811 = vpop.f32.mrb[0].mxu0
  %v812 = vpop.f32.mrb[0].mxu0
  %813 = vdwg.mxu0
  %814 = vmatprep.subr.bf16.mxu0 %v476
  %815 = vmatpush1.bf16.msra.mxu0 %v475
  %816 = vmatprep.subr.bf16.mxu0 %v492
  %817 = vmatpush1.bf16.msra.mxu0 %v491
  %818 = vmatprep.subr.bf16.mxu0 %v508
  %819 = vmatpush1.bf16.msra.mxu0 %v507
  %820 = vmatprep.subr.bf16.mxu0 %v524
  %821 = vmatpush1.bf16.msra.mxu0 %v523
  %822 = vmatprep.subr.bf16.mxu0 %v540
  %823 = vmatpush1.bf16.msra.mxu0 %v539
  %824 = vmatprep.subr.bf16.mxu0 %v556
  %825 = vmatpush1.bf16.msra.mxu0 %v555
  %826 = vmatprep.subr.bf16.mxu0 %v700
  %827 = vmatpush1.bf16.msra.mxu0 %v697
  %828 = vmatprep.subr.bf16.mxu0 0
  %829 = vmatpush1.bf16.msra.mxu0 0
  %830 = vmatprep.subr.bf16.mxu0 0
  %831 = vmatpush1.bf16.msra.mxu0 0
  %832 = vmatprep.subr.bf16.mxu0 0
  %833 = vmatpush1.bf16.msra.mxu0 0
  %834 = vmatprep.subr.bf16.mxu0 0
  %835 = vmatpush1.bf16.msra.mxu0 0
  %836 = vmatprep.subr.bf16.mxu0 0
  %837 = vmatpush1.bf16.msra.mxu0 0
  %838 = vmatprep.subr.bf16.mxu0 0
  %839 = vmatpush1.bf16.msra.mxu0 0
  %840 = vmatprep.subr.bf16.mxu0 0
  %841 = vmatpush1.bf16.msra.mxu0 0
  %842 = vmatprep.subr.bf16.mxu0 0
  %843 = vmatpush1.bf16.msra.mxu0 0
  %844 = vmatprep.subr.bf16.mxu0 0
  %845 = vmatpush1.bf16.msra.mxu0 0
  %846 = vmatprep.mubr.bf16.mxu0 0
  %847 = vmatmul.mubr.bf16.gmra.mrb[0].mxu0 %v681
  %v848 = vpop.f32.mrb[0].mxu0
  %v849 = vadd.f32 0.0, %v848
  %v850 = vpop.f32.mrb[0].mxu0
  %v851 = vadd.f32 0.0, %v850
  %v852 = vpop.f32.mrb[0].mxu0
  %v853 = vpop.f32.mrb[0].mxu0
  %854 = vdwg.mxu0
  %855 = vmatprep.subr.bf16.mxu0 %v478
  %856 = vmatpush1.bf16.msra.mxu0 %v477
  %857 = vmatprep.subr.bf16.mxu0 %v494
  %858 = vmatpush1.bf16.msra.mxu0 %v493
  %859 = vmatprep.subr.bf16.mxu0 %v510
  %860 = vmatpush1.bf16.msra.mxu0 %v509
  %861 = vmatprep.subr.bf16.mxu0 %v526
  %862 = vmatpush1.bf16.msra.mxu0 %v525
  %863 = vmatprep.subr.bf16.mxu0 %v542
  %864 = vmatpush1.bf16.msra.mxu0 %v541
  %865 = vmatprep.subr.bf16.mxu0 %v558
  %866 = vmatpush1.bf16.msra.mxu0 %v557
  %867 = vmatprep.subr.bf16.mxu0 %v706
  %868 = vmatpush1.bf16.msra.mxu0 %v703
  %869 = vmatprep.subr.bf16.mxu0 0
  %870 = vmatpush1.bf16.msra.mxu0 0
  %871 = vmatprep.subr.bf16.mxu0 0
  %872 = vmatpush1.bf16.msra.mxu0 0
  %873 = vmatprep.subr.bf16.mxu0 0
  %874 = vmatpush1.bf16.msra.mxu0 0
  %875 = vmatprep.subr.bf16.mxu0 0
  %876 = vmatpush1.bf16.msra.mxu0 0
  %877 = vmatprep.subr.bf16.mxu0 0
  %878 = vmatpush1.bf16.msra.mxu0 0
  %879 = vmatprep.subr.bf16.mxu0 0
  %880 = vmatpush1.bf16.msra.mxu0 0
  %881 = vmatprep.subr.bf16.mxu0 0
  %882 = vmatpush1.bf16.msra.mxu0 0
  %883 = vmatprep.subr.bf16.mxu0 0
  %884 = vmatpush1.bf16.msra.mxu0 0
  %885 = vmatprep.subr.bf16.mxu0 0
  %886 = vmatpush1.bf16.msra.mxu0 0
  %887 = vmatprep.mubr.bf16.mxu0 0
  %888 = vmatmul.mubr.bf16.gmra.mrb[0].mxu0 %v681
  %v889 = vpop.f32.mrb[0].mxu0
  %v890 = vadd.f32 0.0, %v889
  %v891 = vpop.f32.mrb[0].mxu0
  %v892 = vadd.f32 0.0, %v891
  %v893 = vpop.f32.mrb[0].mxu0
  %v894 = vpop.f32.mrb[0].mxu0
  %895 = vdwg.mxu0
  %896 = vmatprep.subr.bf16.mxu0 %v480
  %897 = vmatpush1.bf16.msra.mxu0 %v479
  %898 = vmatprep.subr.bf16.mxu0 %v496
  %899 = vmatpush1.bf16.msra.mxu0 %v495
  %900 = vmatprep.subr.bf16.mxu0 %v512
  %901 = vmatpush1.bf16.msra.mxu0 %v511
  %902 = vmatprep.subr.bf16.mxu0 %v528
  %903 = vmatpush1.bf16.msra.mxu0 %v527
  %904 = vmatprep.subr.bf16.mxu0 %v544
  %905 = vmatpush1.bf16.msra.mxu0 %v543
  %906 = vmatprep.subr.bf16.mxu0 %v560
  %907 = vmatpush1.bf16.msra.mxu0 %v559
  %908 = vmatprep.subr.bf16.mxu0 %v712
  %909 = vmatpush1.bf16.msra.mxu0 %v709
  %910 = vmatprep.subr.bf16.mxu0 0
  %911 = vmatpush1.bf16.msra.mxu0 0
  %912 = vmatprep.subr.bf16.mxu0 0
  %913 = vmatpush1.bf16.msra.mxu0 0
  %914 = vmatprep.subr.bf16.mxu0 0
  %915 = vmatpush1.bf16.msra.mxu0 0
  %916 = vmatprep.subr.bf16.mxu0 0
  %917 = vmatpush1.bf16.msra.mxu0 0
  %918 = vmatprep.subr.bf16.mxu0 0
  %919 = vmatpush1.bf16.msra.mxu0 0
  %920 = vmatprep.subr.bf16.mxu0 0
  %921 = vmatpush1.bf16.msra.mxu0 0
  %922 = vmatprep.subr.bf16.mxu0 0
  %923 = vmatpush1.bf16.msra.mxu0 0
  %924 = vmatprep.subr.bf16.mxu0 0
  %925 = vmatpush1.bf16.msra.mxu0 0
  %926 = vmatprep.subr.bf16.mxu0 0
  %927 = vmatpush1.bf16.msra.mxu0 0
  %928 = vmatprep.mubr.bf16.mxu0 0
  %929 = vmatmul.mubr.bf16.gmra.mrb[0].mxu0 %v681
  %v930 = vpop.f32.mrb[0].mxu0
  %v931 = vadd.f32 0.0, %v930
  %v932 = vpop.f32.mrb[0].mxu0
  %v933 = vadd.f32 0.0, %v932
  %v934 = vpop.f32.mrb[0].mxu0
  %v935 = vpop.f32.mrb[0].mxu0
  %936 = vdwg.mxu0
  %937 = vmatprep.subr.bf16.mxu0 %v482
  %938 = vmatpush1.bf16.msra.mxu0 %v481
  %939 = vmatprep.subr.bf16.mxu0 %v498
  %940 = vmatpush1.bf16.msra.mxu0 %v497
  %941 = vmatprep.subr.bf16.mxu0 %v514
  %942 = vmatpush1.bf16.msra.mxu0 %v513
  %943 = vmatprep.subr.bf16.mxu0 %v530
  %944 = vmatpush1.bf16.msra.mxu0 %v529
  %945 = vmatprep.subr.bf16.mxu0 %v546
  %946 = vmatpush1.bf16.msra.mxu0 %v545
  %947 = vmatprep.subr.bf16.mxu0 %v562
  %948 = vmatpush1.bf16.msra.mxu0 %v561
  %949 = vmatprep.subr.bf16.mxu0 %v718
  %950 = vmatpush1.bf16.msra.mxu0 %v715
  %951 = vmatprep.subr.bf16.mxu0 0
  %952 = vmatpush1.bf16.msra.mxu0 0
  %953 = vmatprep.subr.bf16.mxu0 0
  %954 = vmatpush1.bf16.msra.mxu0 0
  %955 = vmatprep.subr.bf16.mxu0 0
  %956 = vmatpush1.bf16.msra.mxu0 0
  %957 = vmatprep.subr.bf16.mxu0 0
  %958 = vmatpush1.bf16.msra.mxu0 0
  %959 = vmatprep.subr.bf16.mxu0 0
  %960 = vmatpush1.bf16.msra.mxu0 0
  %961 = vmatprep.subr.bf16.mxu0 0
  %962 = vmatpush1.bf16.msra.mxu0 0
  %963 = vmatprep.subr.bf16.mxu0 0
  %964 = vmatpush1.bf16.msra.mxu0 0
  %965 = vmatprep.subr.bf16.mxu0 0
  %966 = vmatpush1.bf16.msra.mxu0 0
  %967 = vmatprep.subr.bf16.mxu0 0
  %968 = vmatpush1.bf16.msra.mxu0 0
  %969 = vmatprep.mubr.bf16.mxu0 0
  %970 = vmatmul.mubr.bf16.gmra.mrb[0].mxu0 %v681
  %v971 = vpop.f32.mrb[0].mxu0
  %v972 = vadd.f32 0.0, %v971
  %v973 = vpop.f32.mrb[0].mxu0
  %v974 = vadd.f32 0.0, %v973
  %v975 = vpop.f32.mrb[0].mxu0
  %v976 = vpop.f32.mrb[0].mxu0
  %977 = vdwg.mxu0
  %978 = vmatprep.subr.bf16.mxu0 %v484
  %979 = vmatpush1.bf16.msra.mxu0 %v483
  %980 = vmatprep.subr.bf16.mxu0 %v500
  %981 = vmatpush1.bf16.msra.mxu0 %v499
  %982 = vmatprep.subr.bf16.mxu0 %v516
  %983 = vmatpush1.bf16.msra.mxu0 %v515
  %984 = vmatprep.subr.bf16.mxu0 %v532
  %985 = vmatpush1.bf16.msra.mxu0 %v531
  %986 = vmatprep.subr.bf16.mxu0 %v548
  %987 = vmatpush1.bf16.msra.mxu0 %v547
  %988 = vmatprep.subr.bf16.mxu0 %v564
  %989 = vmatpush1.bf16.msra.mxu0 %v563
  %990 = vmatprep.subr.bf16.mxu0 %v724
  %991 = vmatpush1.bf16.msra.mxu0 %v721
  %992 = vmatprep.subr.bf16.mxu0 0
  %993 = vmatpush1.bf16.msra.mxu0 0
  %994 = vmatprep.subr.bf16.mxu0 0
  %995 = vmatpush1.bf16.msra.mxu0 0
  %996 = vmatprep.subr.bf16.mxu0 0
  %997 = vmatpush1.bf16.msra.mxu0 0
  %998 = vmatprep.subr.bf16.mxu0 0
  %999 = vmatpush1.bf16.msra.mxu0 0
  %1000 = vmatprep.subr.bf16.mxu0 0
  %1001 = vmatpush1.bf16.msra.mxu0 0
  %1002 = vmatprep.subr.bf16.mxu0 0
  %1003 = vmatpush1.bf16.msra.mxu0 0
  %1004 = vmatprep.subr.bf16.mxu0 0
  %1005 = vmatpush1.bf16.msra.mxu0 0
  %1006 = vmatprep.subr.bf16.mxu0 0
  %1007 = vmatpush1.bf16.msra.mxu0 0
  %1008 = vmatprep.subr.bf16.mxu0 0
  %1009 = vmatpush1.bf16.msra.mxu0 0
  %1010 = vmatprep.mubr.bf16.mxu0 0
  %1011 = vmatmul.mubr.bf16.gmra.mrb[0].mxu0 %v681
  %v1012 = vpop.f32.mrb[0].mxu0
  %v1013 = vadd.f32 0.0, %v1012
  %v1014 = vpop.f32.mrb[0].mxu0
  %v1015 = vadd.f32 0.0, %v1014
  %v1016 = vpop.f32.mrb[0].mxu0
  %v1017 = vpop.f32.mrb[0].mxu0
  %1018 = vdwg.mxu0
  %1019 = vmatprep.subr.bf16.mxu0 %v486
  %1020 = vmatpush1.bf16.msra.mxu0 %v485
  %1021 = vmatprep.subr.bf16.mxu0 %v502
  %1022 = vmatpush1.bf16.msra.mxu0 %v501
  %1023 = vmatprep.subr.bf16.mxu0 %v518
  %1024 = vmatpush1.bf16.msra.mxu0 %v517
  %1025 = vmatprep.subr.bf16.mxu0 %v534
  %1026 = vmatpush1.bf16.msra.mxu0 %v533
  %1027 = vmatprep.subr.bf16.mxu0 %v550
  %1028 = vmatpush1.bf16.msra.mxu0 %v549
  %1029 = vmatprep.subr.bf16.mxu0 %v566
  %1030 = vmatpush1.bf16.msra.mxu0 %v565
  %1031 = vmatprep.subr.bf16.mxu0 %v730
  %1032 = vmatpush1.bf16.msra.mxu0 %v727
  %1033 = vmatprep.subr.bf16.mxu0 0
  %1034 = vmatpush1.bf16.msra.mxu0 0
  %1035 = vmatprep.subr.bf16.mxu0 0
  %1036 = vmatpush1.bf16.msra.mxu0 0
  %1037 = vmatprep.subr.bf16.mxu0 0
  %1038 = vmatpush1.bf16.msra.mxu0 0
  %1039 = vmatprep.subr.bf16.mxu0 0
  %1040 = vmatpush1.bf16.msra.mxu0 0
  %1041 = vmatprep.subr.bf16.mxu0 0
  %1042 = vmatpush1.bf16.msra.mxu0 0
  %1043 = vmatprep.subr.bf16.mxu0 0
  %1044 = vmatpush1.bf16.msra.mxu0 0
  %1045 = vmatprep.subr.bf16.mxu0 0
  %1046 = vmatpush1.bf16.msra.mxu0 0
  %1047 = vmatprep.subr.bf16.mxu0 0
  %1048 = vmatpush1.bf16.msra.mxu0 0
  %1049 = vmatprep.subr.bf16.mxu0 0
  %1050 = vmatpush1.bf16.msra.mxu0 0
  %1051 = vmatprep.mubr.bf16.mxu0 0
  %1052 = vmatmul.mubr.bf16.gmra.mrb[0].mxu0 %v681
  %v1053 = vpop.f32.mrb[0].mxu0
  %v1054 = vadd.f32 0.0, %v1053
  %v1055 = vpop.f32.mrb[0].mxu0
  %v1056 = vadd.f32 0.0, %v1055
  %v1057 = vpop.f32.mrb[0].mxu0
  %v1058 = vpop.f32.mrb[0].mxu0
  %1059 = vdwg.mxu0
  %1060 = vst [vmem:[%s2] sm:$0xff] %v767
  %1061 = vst [vmem:[%s2 + $0x8] sm:$0xff] %v769
  %1062 = vst [vmem:[%s2 + $0x10] sm:$0xff] %v808
  %1063 = vst [vmem:[%s2 + $0x18] sm:$0xff] %v810
  %1064 = vst [vmem:[%s2 + $0x20] sm:$0xff] %v849
  %1065 = vst [vmem:[%s2 + $0x28] sm:$0xff] %v851
  %1066 = vst [vmem:[%s2 + $0x30] sm:$0xff] %v890
  %1067 = vst [vmem:[%s2 + $0x38] sm:$0xff] %v892
  %1068 = vst [vmem:[%s2 + $0x40] sm:$0xff] %v931
  %1069 = vst [vmem:[%s2 + $0x48] sm:$0xff] %v933
  %1070 = vst [vmem:[%s2 + $0x50] sm:$0xff] %v972
  %1071 = vst [vmem:[%s2 + $0x58] sm:$0xff] %v974
  %1072 = vst [vmem:[%s2 + $0x60] sm:$0xff] %v1013
  %1073 = vst [vmem:[%s2 + $0x68] sm:$0xff] %v1015
  %1074 = vst [vmem:[%s2 + $0x70] sm:$0xff] %v1054
  %1075 = vst [vmem:[%s2 + $0x78] sm:$0xff] %v1056
  %v1076 = vld [vmem:[#allocation2] sm:$0xff]
  %v1077 = vadd.f32 %v767, %v769
  %v1078 = vadd.f32 %v1077, %v808
  %v1079 = vadd.f32 %v1078, %v810
  %v1080 = vadd.f32 %v1079, %v849
  %v1081 = vadd.f32 %v1080, %v851
  %v1082 = vadd.f32 %v1081, %v890
  %v1083 = vadd.f32 %v1082, %v892
  %v1084 = vadd.f32 %v1083, %v931
  %v1085 = vadd.f32 %v1084, %v933
  %v1086 = vadd.f32 %v1085, %v972
  %v1087 = vadd.f32 %v1086, %v974
  %v1088 = vadd.f32 %v1087, %v1013
  %v1089 = vadd.f32 %v1088, %v1015
  %v1090 = vadd.f32 %v1089, %v1054
  %v1091 = vadd.f32 %v1090, %v1056
  %1092 = vadd.xlane.f32.xlu0 %v1091
  %v1093 = vpop.xlane.xlu0 %1092
  %v1094 = vadd.f32 %v1076, %v1093
  %vm1095 = vcmask 7168
  %1096 = vst.msk [vmem:[#allocation2] sm:$0xff] %vm1095, %v1094
  %v1097 = vld [vmem:[#allocation3] sm:$0xff]
  %v1098 = vmul.f32 %v767, %v767
  %v1099 = vmul.f32 %v769, %v769
  %v1100 = vmul.f32 %v808, %v808
  %v1101 = vmul.f32 %v810, %v810
  %v1102 = vmul.f32 %v849, %v849
  %v1103 = vmul.f32 %v851, %v851
  %v1104 = vmul.f32 %v890, %v890
  %v1105 = vmul.f32 %v892, %v892
  %v1106 = vmul.f32 %v931, %v931
  %v1107 = vmul.f32 %v933, %v933
  %v1108 = vmul.f32 %v972, %v972
  %v1109 = vmul.f32 %v974, %v974
  %v1110 = vmul.f32 %v1013, %v1013
  %v1111 = vmul.f32 %v1015, %v1015
  %v1112 = vmul.f32 %v1054, %v1054
  %v1113 = vmul.f32 %v1056, %v1056
  %v1114 = vadd.f32 %v1098, %v1099
  %v1115 = vadd.f32 %v1114, %v1100
  %v1116 = vadd.f32 %v1115, %v1101
  %v1117 = vadd.f32 %v1116, %v1102
  %v1118 = vadd.f32 %v1117, %v1103
  %v1119 = vadd.f32 %v1118, %v1104
  %v1120 = vadd.f32 %v1119, %v1105
  %v1121 = vadd.f32 %v1120, %v1106
  %v1122 = vadd.f32 %v1121, %v1107
  %v1123 = vadd.f32 %v1122, %v1108
  %v1124 = vadd.f32 %v1123, %v1109
  %v1125 = vadd.f32 %v1124, %v1110
  %v1126 = vadd.f32 %v1125, %v1111
  %v1127 = vadd.f32 %v1126, %v1112
  %v1128 = vadd.f32 %v1127, %v1113
  %1129 = vadd.xlane.f32.xlu0 %v1128
  %v1130 = vpop.xlane.xlu0 %1129
  %v1131 = vadd.f32 %v1097, %v1130
  %1132 = vst.msk [vmem:[#allocation3] sm:$0xff] %vm1095, %v1131
  // Predicated region
  $region14: #{downsample_unet3d_forward.6} parent=0 // pred_check
    %p1133 = pneg %p15
  $region15: #{downsample_unet3d_forward.6} parent=0 // pred_check_branch
    %1135 = sbr.rel (%p1133) target = $region17
  $region16: #{downsample_unet3d_forward.6} parent=0 // pred_region
    %v1136 = vld [vmem:[#allocation2] sm:$0xff]
    %1137 = vst.msk [vmem:[%s3] sm:$0xff] %vm1095, %v1136
    %v1138 = vld [vmem:[#allocation3] sm:$0xff]
    %1139 = vst.msk [vmem:[%s4] sm:$0xff] %vm1095, %v1138
  $region17: #{downsample_unet3d_forward.6} parent=0 // pred_fallthru
    _
  // Predicated region
  $region18: #{downsample_unet3d_forward.6} parent=0 // pred_check
    _
  $region19: #{downsample_unet3d_forward.6} parent=0 // pred_check_branch
    %1141 = sbr.rel (0) target = $region21
  $region20: #{downsample_unet3d_forward.6} parent=0 // pred_region
    _
  $region21: #{downsample_unet3d_forward.6} parent=0 // pred_fallthru
    _
  // Predicated region
  $region22: #{downsample_unet3d_forward.6} parent=0 // pred_check
    _
  $region23: #{downsample_unet3d_forward.6} parent=0 // pred_check_branch
    %1143 = sbr.rel (0) target = $region25
  $region24: #{downsample_unet3d_forward.6} parent=0 // pred_region
    _
  $region25: #{downsample_unet3d_forward.6} parent=0 // pred_fallthru
    _
  // Predicated region
  $region26: #{downsample_unet3d_forward.6} parent=0 // pred_check
    _
  $region27: #{downsample_unet3d_forward.6} parent=0 // pred_check_branch
    %1145 = sbr.rel (0) target = $region29
  $region28: #{downsample_unet3d_forward.6} parent=0 // pred_region
    _
  $region29: #{downsample_unet3d_forward.6} parent=0 // pred_fallthru
    _
  // Predicated region
  $region30: #{downsample_unet3d_forward.6} parent=0 // pred_check
    _
  $region31: #{downsample_unet3d_forward.6} parent=0 // pred_check_branch
    %1147 = sbr.rel (0) target = $region33
  $region32: #{downsample_unet3d_forward.6} parent=0 // pred_region
    _
  $region33: #{downsample_unet3d_forward.6} parent=0 // pred_fallthru
    _
  // Predicated region
  $region34: #{downsample_unet3d_forward.6} parent=0 // pred_check
    _
  $region35: #{downsample_unet3d_forward.6} parent=0 // pred_check_branch
    %1149 = sbr.rel (0) target = $region37
  $region36: #{downsample_unet3d_forward.6} parent=0 // pred_region
    _
  $region37: #{downsample_unet3d_forward.6} parent=0 // pred_fallthru
    _
  // Predicated region
  $region38: #{downsample_unet3d_forward.6} parent=0 // pred_check
    _
  $region39: #{downsample_unet3d_forward.6} parent=0 // pred_check_branch
    %1151 = sbr.rel (0) target = $region41
  $region40: #{downsample_unet3d_forward.6} parent=0 // pred_region
    _
  $region41: #{downsample_unet3d_forward.6} parent=0 // pred_fallthru
    _

// kernel: downsample_unet3d_forward.7
$region0: #{downsample_unet3d_forward.7}
  #allocation0 [shape = 'u32[]', space=smem, size = 0x4, offset = 0x4, fixed_abs, tag = 'smem constant byte address 0x4 - core index']
  #allocation1 [shape = 'u32[144,128]{1,0:T(1,128)}', space=vmem, size = 0x12000, scoped, tag = 'internal scratch']
  %s0 = inlined_call_operand.vmem [shape: f32[8,2048], index: 0, kind: input, shape index: {}]
  %s1 = inlined_call_operand.vmem [shape: f32[8,1], index: 1, kind: input, shape index: {}]
  %s2 = inlined_call_operand.vmem [shape: f32[8,1], index: 2, kind: input, shape index: {}]
  %s3 = inlined_call_operand.vmem [shape: bf16[8,2048], index: 3, kind: output, shape index: {}]
  %s4 = sld [smem:[#allocation0]]
  $region22: #{downsample_unet3d_forward.7} parent=0
    _
  %s6 = ssub.s32 1, %s4
  %s7 = scalar_select 0, %s6, %s4
  // Predicated region
  $region2: #{downsample_unet3d_forward.7} parent=0 // pred_check
    _
  $region3: #{downsample_unet3d_forward.7} parent=0 // pred_check_branch
    %9 = sbr.rel (0) target = $region5
  $region4: #{downsample_unet3d_forward.7} parent=0 // pred_region
    _
  $region5: #{downsample_unet3d_forward.7} parent=0 // pred_fallthru
    _
  // Predicated region
  $region6: #{downsample_unet3d_forward.7} parent=0 // pred_check
    _
  $region7: #{downsample_unet3d_forward.7} parent=0 // pred_check_branch
    %11 = sbr.rel (0) target = $region9
  $region8: #{downsample_unet3d_forward.7} parent=0 // pred_region
    _
  $region9: #{downsample_unet3d_forward.7} parent=0 // pred_fallthru
    _
  // Predicated region
  $region10: #{downsample_unet3d_forward.7} parent=0 // pred_check
    _
  $region11: #{downsample_unet3d_forward.7} parent=0 // pred_check_branch
    %13 = sbr.rel (0) target = $region13
  $region12: #{downsample_unet3d_forward.7} parent=0 // pred_region
    _
  $region13: #{downsample_unet3d_forward.7} parent=0 // pred_fallthru
    _
  %v14 = vld [vmem:[%s0] sm:$0xff]
  %v15 = vld [vmem:[%s0 + $0x8] sm:$0xff]
  %v16 = vld [vmem:[%s0 + $0x10] sm:$0xff]
  %v17 = vld [vmem:[%s0 + $0x18] sm:$0xff]
  %v18 = vld [vmem:[%s0 + $0x20] sm:$0xff]
  %v19 = vld [vmem:[%s0 + $0x28] sm:$0xff]
  %v20 = vld [vmem:[%s0 + $0x30] sm:$0xff]
  %v21 = vld [vmem:[%s0 + $0x38] sm:$0xff]
  %v22 = vld [vmem:[%s0 + $0x40] sm:$0xff]
  %v23 = vld [vmem:[%s0 + $0x48] sm:$0xff]
  %v24 = vld [vmem:[%s0 + $0x50] sm:$0xff]
  %v25 = vld [vmem:[%s0 + $0x58] sm:$0xff]
  %v26 = vld [vmem:[%s0 + $0x60] sm:$0xff]
  %v27 = vld [vmem:[%s0 + $0x68] sm:$0xff]
  %v28 = vld [vmem:[%s0 + $0x70] sm:$0xff]
  %v29 = vld [vmem:[%s0 + $0x78] sm:$0xff]
  %v30 = vld [vmem:[%s1] sm:$0xff]
  %32 = vset.pattern.permute.xlu0 0
  %33 = vperm.xlu0 %32, %v30
  %v34 = vpop.permute.xlu0 %33
  %v36 = vmul.f32 %v14, %v34
  %v37 = vmul.f32 %v15, %v34
  %v38 = vmul.f32 %v16, %v34
  %v39 = vmul.f32 %v17, %v34
  %v40 = vmul.f32 %v18, %v34
  %v41 = vmul.f32 %v19, %v34
  %v42 = vmul.f32 %v20, %v34
  %v43 = vmul.f32 %v21, %v34
  %v44 = vmul.f32 %v22, %v34
  %v45 = vmul.f32 %v23, %v34
  %v46 = vmul.f32 %v24, %v34
  %v47 = vmul.f32 %v25, %v34
  %v48 = vmul.f32 %v26, %v34
  %v49 = vmul.f32 %v27, %v34
  %v50 = vmul.f32 %v28, %v34
  %v51 = vmul.f32 %v29, %v34
  %v52 = vld [vmem:[%s2] sm:$0xff]
  %54 = vset.pattern.permute.xlu0 0
  %55 = vperm.xlu0 %54, %v52
  %v56 = vpop.permute.xlu0 %55
  %v58 = vadd.f32 %v36, %v56
  %v59 = vadd.f32 %v37, %v56
  %v60 = vadd.f32 %v38, %v56
  %v61 = vadd.f32 %v39, %v56
  %v62 = vadd.f32 %v40, %v56
  %v63 = vadd.f32 %v41, %v56
  %v64 = vadd.f32 %v42, %v56
  %v65 = vadd.f32 %v43, %v56
  %v66 = vadd.f32 %v44, %v56
  %v67 = vadd.f32 %v45, %v56
  %v68 = vadd.f32 %v46, %v56
  %v69 = vadd.f32 %v47, %v56
  %v70 = vadd.f32 %v48, %v56
  %v71 = vadd.f32 %v49, %v56
  %v72 = vadd.f32 %v50, %v56
  %v73 = vadd.f32 %v51, %v56
  %v74 = vmax.f32 %v58, 0.0
  %v75 = vmax.f32 %v59, 0.0
  %v76 = vmax.f32 %v60, 0.0
  %v77 = vmax.f32 %v61, 0.0
  %v78 = vmax.f32 %v62, 0.0
  %v79 = vmax.f32 %v63, 0.0
  %v80 = vmax.f32 %v64, 0.0
  %v81 = vmax.f32 %v65, 0.0
  %v82 = vmax.f32 %v66, 0.0
  %v83 = vmax.f32 %v67, 0.0
  %v84 = vmax.f32 %v68, 0.0
  %v85 = vmax.f32 %v69, 0.0
  %v86 = vmax.f32 %v70, 0.0
  %v87 = vmax.f32 %v71, 0.0
  %v88 = vmax.f32 %v72, 0.0
  %v89 = vmax.f32 %v73, 0.0
  %v90 = vpack.c.bf16 %v74, %v74
  %v91 = vpack.c.bf16 %v75, %v75
  %v92 = vpack.c.bf16 %v76, %v76
  %v93 = vpack.c.bf16 %v77, %v77
  %v94 = vpack.c.bf16 %v78, %v78
  %v95 = vpack.c.bf16 %v79, %v79
  %v96 = vpack.c.bf16 %v80, %v80
  %v97 = vpack.c.bf16 %v81, %v81
  %v98 = vpack.c.bf16 %v82, %v82
  %v99 = vpack.c.bf16 %v83, %v83
  %v100 = vpack.c.bf16 %v84, %v84
  %v101 = vpack.c.bf16 %v85, %v85
  %v102 = vpack.c.bf16 %v86, %v86
  %v103 = vpack.c.bf16 %v87, %v87
  %v104 = vpack.c.bf16 %v88, %v88
  %v105 = vpack.c.bf16 %v89, %v89
  %v122 = vunpack.c.l.b16 %v90
  %v123 = vunpack.c.l.b16 %v91
  %v124 = vunpack.c.l.b16 %v92
  %v125 = vunpack.c.l.b16 %v93
  %v126 = vunpack.c.l.b16 %v94
  %v127 = vunpack.c.l.b16 %v95
  %v128 = vunpack.c.l.b16 %v96
  %v129 = vunpack.c.l.b16 %v97
  %v130 = vunpack.c.l.b16 %v98
  %v131 = vunpack.c.l.b16 %v99
  %v132 = vunpack.c.l.b16 %v100
  %v133 = vunpack.c.l.b16 %v101
  %v134 = vunpack.c.l.b16 %v102
  %v135 = vunpack.c.l.b16 %v103
  %v136 = vunpack.c.l.b16 %v104
  %v137 = vunpack.c.l.b16 %v105
  %v138 = vpack.c.b16 %v123, %v122
  %v139 = vpack.c.b16 %v125, %v124
  %v140 = vpack.c.b16 %v127, %v126
  %v141 = vpack.c.b16 %v129, %v128
  %v142 = vpack.c.b16 %v131, %v130
  %v143 = vpack.c.b16 %v133, %v132
  %v144 = vpack.c.b16 %v135, %v134
  %v145 = vpack.c.b16 %v137, %v136
  %154 = vst [vmem:[%s3] sm:$0xff] %v138
  %155 = vst [vmem:[%s3 + $0x8] sm:$0xff] %v139
  %156 = vst [vmem:[%s3 + $0x10] sm:$0xff] %v140
  %157 = vst [vmem:[%s3 + $0x18] sm:$0xff] %v141
  %158 = vst [vmem:[%s3 + $0x20] sm:$0xff] %v142
  %159 = vst [vmem:[%s3 + $0x28] sm:$0xff] %v143
  %160 = vst [vmem:[%s3 + $0x30] sm:$0xff] %v144
  %161 = vst [vmem:[%s3 + $0x38] sm:$0xff] %v145
  // Predicated region
  $region14: #{downsample_unet3d_forward.7} parent=0 // pred_check
    _
  $region15: #{downsample_unet3d_forward.7} parent=0 // pred_check_branch
    %163 = sbr.rel (0) target = $region17
  $region16: #{downsample_unet3d_forward.7} parent=0 // pred_region
    _
  $region17: #{downsample_unet3d_forward.7} parent=0 // pred_fallthru
    _
  // Predicated region
  $region18: #{downsample_unet3d_forward.7} parent=0 // pred_check
    _
  $region19: #{downsample_unet3d_forward.7} parent=0 // pred_check_branch
    %165 = sbr.rel (0) target = $region21
  $region20: #{downsample_unet3d_forward.7} parent=0 // pred_region
    _
  $region21: #{downsample_unet3d_forward.7} parent=0 // pred_fallthru
    _

// kernel: downsample_unet3d_forward.8
$region0: #{downsample_unet3d_forward.8}
  #allocation0 [shape = 'u32[]', space=smem, size = 0x4, offset = 0x4, fixed_abs, tag = 'smem constant byte address 0x4 - core index']
  #allocation1 [shape = 'u32[144,128]{1,0:T(1,128)}', space=vmem, size = 0x12000, scoped, tag = 'internal scratch']
  #allocation2 [shape = 'f32[8,1]{1,0:T(8,128)}', space=vmem, size = 0x1000, scoped, tag = 'scratch operand']
  #allocation3 [shape = 'f32[8,1]{1,0:T(8,128)}', space=vmem, size = 0x1000, scoped, tag = 'scratch operand']
  %s0 = inlined_call_operand.vmem [shape: bf16[216,2048], index: 0, kind: input, shape index: {}]
  %s1 = inlined_call_operand.vmem [shape: bf16[8,216], index: 1, kind: input, shape index: {}]
  %s2 = inlined_call_operand.vmem [shape: f32[8,2048], index: 2, kind: output, shape index: {0}]
  %s3 = inlined_call_operand.vmem [shape: f32[8,1], index: 3, kind: output, shape index: {1}]
  %s4 = inlined_call_operand.vmem [shape: f32[8,1], index: 4, kind: output, shape index: {2}]
  %5 = xla_tuple %s2, %s3, %s4
  %s6 = sld [smem:[#allocation0]]
  $region42: #{downsample_unet3d_forward.8} parent=0
    _
  %s8 = ssub.s32 1, %s6
  %s9 = scalar_select 0, %s8, %s6
  // Predicated region
  $region2: #{downsample_unet3d_forward.8} parent=0 // pred_check
    _
  $region3: #{downsample_unet3d_forward.8} parent=0 // pred_check_branch
    %11 = sbr.rel (0) target = $region5
  $region4: #{downsample_unet3d_forward.8} parent=0 // pred_region
    _
  $region5: #{downsample_unet3d_forward.8} parent=0 // pred_fallthru
    _
  // Predicated region
  $region6: #{downsample_unet3d_forward.8} parent=0 // pred_check
    _
  $region7: #{downsample_unet3d_forward.8} parent=0 // pred_check_branch
    %13 = sbr.rel (0) target = $region9
  $region8: #{downsample_unet3d_forward.8} parent=0 // pred_region
    _
  $region9: #{downsample_unet3d_forward.8} parent=0 // pred_fallthru
    _
  %p15 = scmp.eq.s32.totalorder 0, 0
  // Predicated region
  $region10: #{downsample_unet3d_forward.8} parent=0 // pred_check
    %p16 = pneg %p15
  $region11: #{downsample_unet3d_forward.8} parent=0 // pred_check_branch
    %18 = sbr.rel (%p16) target = $region13
  $region12: #{downsample_unet3d_forward.8} parent=0 // pred_region
    %vm19 = vcmask 7168
    %20 = vst.msk [vmem:[#allocation2] sm:$0xff] %vm19, 0.0
    %21 = vst.msk [vmem:[#allocation3] sm:$0xff] %vm19, 0.0
  $region13: #{downsample_unet3d_forward.8} parent=0 // pred_fallthru
    _
  %v22 = vld [vmem:[%s1] sm:$0xff]
  %v23 = vld [vmem:[%s0] sm:$0xff]
  %v24 = vld [vmem:[%s0 + $0x8] sm:$0xff]
  %v25 = vld [vmem:[%s0 + $0x10] sm:$0xff]
  %v26 = vld [vmem:[%s0 + $0x18] sm:$0xff]
  %v27 = vld [vmem:[%s0 + $0x20] sm:$0xff]
  %v28 = vld [vmem:[%s0 + $0x28] sm:$0xff]
  %v29 = vld [vmem:[%s0 + $0x30] sm:$0xff]
  %v30 = vld [vmem:[%s0 + $0x38] sm:$0xff]
  %v31 = vld [vmem:[%s0 + $0x40] sm:$0xff]
  %v32 = vld [vmem:[%s0 + $0x48] sm:$0xff]
  %v33 = vld [vmem:[%s0 + $0x50] sm:$0xff]
  %v34 = vld [vmem:[%s0 + $0x58] sm:$0xff]
  %v35 = vld [vmem:[%s0 + $0x60] sm:$0xff]
  %v36 = vld [vmem:[%s0 + $0x68] sm:$0xff]
  %v37 = vld [vmem:[%s0 + $0x70] sm:$0xff]
  %v38 = vld [vmem:[%s0 + $0x78] sm:$0xff]
  %v39 = vld [vmem:[%s0 + $0x80] sm:$0xff]
  %v40 = vld [vmem:[%s0 + $0x88] sm:$0xff]
  %v41 = vld [vmem:[%s0 + $0x90] sm:$0xff]
  %v42 = vld [vmem:[%s0 + $0x98] sm:$0xff]
  %v43 = vld [vmem:[%s0 + $0xa0] sm:$0xff]
  %v44 = vld [vmem:[%s0 + $0xa8] sm:$0xff]
  %v45 = vld [vmem:[%s0 + $0xb0] sm:$0xff]
  %v46 = vld [vmem:[%s0 + $0xb8] sm:$0xff]
  %v47 = vld [vmem:[%s0 + $0xc0] sm:$0xff]
  %v48 = vld [vmem:[%s0 + $0xc8] sm:$0xff]
  %v49 = vld [vmem:[%s0 + $0xd0] sm:$0xff]
  %v50 = vld [vmem:[%s0 + $0xd8] sm:$0xff]
  %v51 = vld [vmem:[%s0 + $0xe0] sm:$0xff]
  %v52 = vld [vmem:[%s0 + $0xe8] sm:$0xff]
  %v53 = vld [vmem:[%s0 + $0xf0] sm:$0xff]
  %v54 = vld [vmem:[%s0 + $0xf8] sm:$0xff]
  %v55 = vld [vmem:[%s0 + $0x100] sm:$0xff]
  %v56 = vld [vmem:[%s0 + $0x108] sm:$0xff]
  %v57 = vld [vmem:[%s0 + $0x110] sm:$0xff]
  %v58 = vld [vmem:[%s0 + $0x118] sm:$0xff]
  %v59 = vld [vmem:[%s0 + $0x120] sm:$0xff]
  %v60 = vld [vmem:[%s0 + $0x128] sm:$0xff]
  %v61 = vld [vmem:[%s0 + $0x130] sm:$0xff]
  %v62 = vld [vmem:[%s0 + $0x138] sm:$0xff]
  %v63 = vld [vmem:[%s0 + $0x140] sm:$0xff]
  %v64 = vld [vmem:[%s0 + $0x148] sm:$0xff]
  %v65 = vld [vmem:[%s0 + $0x150] sm:$0xff]
  %v66 = vld [vmem:[%s0 + $0x158] sm:$0xff]
  %v67 = vld [vmem:[%s0 + $0x160] sm:$0xff]
  %v68 = vld [vmem:[%s0 + $0x168] sm:$0xff]
  %v69 = vld [vmem:[%s0 + $0x170] sm:$0xff]
  %v70 = vld [vmem:[%s0 + $0x178] sm:$0xff]
  %v71 = vld [vmem:[%s0 + $0x180] sm:$0xff]
  %v72 = vld [vmem:[%s0 + $0x188] sm:$0xff]
  %v73 = vld [vmem:[%s0 + $0x190] sm:$0xff]
  %v74 = vld [vmem:[%s0 + $0x198] sm:$0xff]
  %v75 = vld [vmem:[%s0 + $0x1a0] sm:$0xff]
  %v76 = vld [vmem:[%s0 + $0x1a8] sm:$0xff]
  %v77 = vld [vmem:[%s0 + $0x1b0] sm:$0xff]
  %v78 = vld [vmem:[%s0 + $0x1b8] sm:$0xff]
  %v79 = vld [vmem:[%s0 + $0x1c0] sm:$0xff]
  %v80 = vld [vmem:[%s0 + $0x1c8] sm:$0xff]
  %v81 = vld [vmem:[%s0 + $0x1d0] sm:$0xff]
  %v82 = vld [vmem:[%s0 + $0x1d8] sm:$0xff]
  %v83 = vld [vmem:[%s0 + $0x1e0] sm:$0xff]
  %v84 = vld [vmem:[%s0 + $0x1e8] sm:$0xff]
  %v85 = vld [vmem:[%s0 + $0x1f0] sm:$0xff]
  %v86 = vld [vmem:[%s0 + $0x1f8] sm:$0xff]
  %v87 = vld [vmem:[%s0 + $0x200] sm:$0xff]
  %v88 = vld [vmem:[%s0 + $0x208] sm:$0xff]
  %v89 = vld [vmem:[%s0 + $0x210] sm:$0xff]
  %v90 = vld [vmem:[%s0 + $0x218] sm:$0xff]
  %v91 = vld [vmem:[%s0 + $0x220] sm:$0xff]
  %v92 = vld [vmem:[%s0 + $0x228] sm:$0xff]
  %v93 = vld [vmem:[%s0 + $0x230] sm:$0xff]
  %v94 = vld [vmem:[%s0 + $0x238] sm:$0xff]
  %v95 = vld [vmem:[%s0 + $0x240] sm:$0xff]
  %v96 = vld [vmem:[%s0 + $0x248] sm:$0xff]
  %v97 = vld [vmem:[%s0 + $0x250] sm:$0xff]
  %v98 = vld [vmem:[%s0 + $0x258] sm:$0xff]
  %v99 = vld [vmem:[%s0 + $0x260] sm:$0xff]
  %v100 = vld [vmem:[%s0 + $0x268] sm:$0xff]
  %v101 = vld [vmem:[%s0 + $0x270] sm:$0xff]
  %v102 = vld [vmem:[%s0 + $0x278] sm:$0xff]
  %v103 = vld [vmem:[%s0 + $0x280] sm:$0xff]
  %v104 = vld [vmem:[%s0 + $0x288] sm:$0xff]
  %v105 = vld [vmem:[%s0 + $0x290] sm:$0xff]
  %v106 = vld [vmem:[%s0 + $0x298] sm:$0xff]
  %v107 = vld [vmem:[%s0 + $0x2a0] sm:$0xff]
  %v108 = vld [vmem:[%s0 + $0x2a8] sm:$0xff]
  %v109 = vld [vmem:[%s0 + $0x2b0] sm:$0xff]
  %v110 = vld [vmem:[%s0 + $0x2b8] sm:$0xff]
  %v111 = vld [vmem:[%s0 + $0x2c0] sm:$0xff]
  %v112 = vld [vmem:[%s0 + $0x2c8] sm:$0xff]
  %v113 = vld [vmem:[%s0 + $0x2d0] sm:$0xff]
  %v114 = vld [vmem:[%s0 + $0x2d8] sm:$0xff]
  %v115 = vld [vmem:[%s0 + $0x2e0] sm:$0xff]
  %v116 = vld [vmem:[%s0 + $0x2e8] sm:$0xff]
  %v117 = vld [vmem:[%s0 + $0x2f0] sm:$0xff]
  %v118 = vld [vmem:[%s0 + $0x2f8] sm:$0xff]
  %v119 = vld [vmem:[%s0 + $0x300] sm:$0xff]
  %v120 = vld [vmem:[%s0 + $0x308] sm:$0xff]
  %v121 = vld [vmem:[%s0 + $0x310] sm:$0xff]
  %v122 = vld [vmem:[%s0 + $0x318] sm:$0xff]
  %v123 = vld [vmem:[%s0 + $0x320] sm:$0xff]
  %v124 = vld [vmem:[%s0 + $0x328] sm:$0xff]
  %v125 = vld [vmem:[%s0 + $0x330] sm:$0xff]
  %v126 = vld [vmem:[%s0 + $0x338] sm:$0xff]
  %v127 = vld [vmem:[%s0 + $0x340] sm:$0xff]
  %v128 = vld [vmem:[%s0 + $0x348] sm:$0xff]
  %v129 = vld [vmem:[%s0 + $0x350] sm:$0xff]
  %v130 = vld [vmem:[%s0 + $0x358] sm:$0xff]
  %v131 = vld [vmem:[%s0 + $0x360] sm:$0xff]
  %v132 = vld [vmem:[%s0 + $0x368] sm:$0xff]
  %v133 = vld [vmem:[%s0 + $0x370] sm:$0xff]
  %v134 = vld [vmem:[%s0 + $0x378] sm:$0xff]
  %v135 = vld [vmem:[%s0 + $0x380] sm:$0xff]
  %v136 = vld [vmem:[%s0 + $0x388] sm:$0xff]
  %v137 = vld [vmem:[%s0 + $0x390] sm:$0xff]
  %v138 = vld [vmem:[%s0 + $0x398] sm:$0xff]
  %v139 = vld [vmem:[%s0 + $0x3a0] sm:$0xff]
  %v140 = vld [vmem:[%s0 + $0x3a8] sm:$0xff]
  %v141 = vld [vmem:[%s0 + $0x3b0] sm:$0xff]
  %v142 = vld [vmem:[%s0 + $0x3b8] sm:$0xff]
  %v143 = vld [vmem:[%s0 + $0x3c0] sm:$0xff]
  %v144 = vld [vmem:[%s0 + $0x3c8] sm:$0xff]
  %v145 = vld [vmem:[%s0 + $0x3d0] sm:$0xff]
  %v146 = vld [vmem:[%s0 + $0x3d8] sm:$0xff]
  %v147 = vld [vmem:[%s0 + $0x3e0] sm:$0xff]
  %v148 = vld [vmem:[%s0 + $0x3e8] sm:$0xff]
  %v149 = vld [vmem:[%s0 + $0x3f0] sm:$0xff]
  %v150 = vld [vmem:[%s0 + $0x3f8] sm:$0xff]
  %v151 = vld [vmem:[%s0 + $0x400] sm:$0xff]
  %v152 = vld [vmem:[%s0 + $0x408] sm:$0xff]
  %v153 = vld [vmem:[%s0 + $0x410] sm:$0xff]
  %v154 = vld [vmem:[%s0 + $0x418] sm:$0xff]
  %v155 = vld [vmem:[%s0 + $0x420] sm:$0xff]
  %v156 = vld [vmem:[%s0 + $0x428] sm:$0xff]
  %v157 = vld [vmem:[%s0 + $0x430] sm:$0xff]
  %v158 = vld [vmem:[%s0 + $0x438] sm:$0xff]
  %v159 = vld [vmem:[%s0 + $0x440] sm:$0xff]
  %v160 = vld [vmem:[%s0 + $0x448] sm:$0xff]
  %v161 = vld [vmem:[%s0 + $0x450] sm:$0xff]
  %v162 = vld [vmem:[%s0 + $0x458] sm:$0xff]
  %v163 = vld [vmem:[%s0 + $0x460] sm:$0xff]
  %v164 = vld [vmem:[%s0 + $0x468] sm:$0xff]
  %v165 = vld [vmem:[%s0 + $0x470] sm:$0xff]
  %v166 = vld [vmem:[%s0 + $0x478] sm:$0xff]
  %v167 = vld [vmem:[%s0 + $0x480] sm:$0xff]
  %v168 = vld [vmem:[%s0 + $0x488] sm:$0xff]
  %v169 = vld [vmem:[%s0 + $0x490] sm:$0xff]
  %v170 = vld [vmem:[%s0 + $0x498] sm:$0xff]
  %v171 = vld [vmem:[%s0 + $0x4a0] sm:$0xff]
  %v172 = vld [vmem:[%s0 + $0x4a8] sm:$0xff]
  %v173 = vld [vmem:[%s0 + $0x4b0] sm:$0xff]
  %v174 = vld [vmem:[%s0 + $0x4b8] sm:$0xff]
  %v175 = vld [vmem:[%s0 + $0x4c0] sm:$0xff]
  %v176 = vld [vmem:[%s0 + $0x4c8] sm:$0xff]
  %v177 = vld [vmem:[%s0 + $0x4d0] sm:$0xff]
  %v178 = vld [vmem:[%s0 + $0x4d8] sm:$0xff]
  %v179 = vld [vmem:[%s0 + $0x4e0] sm:$0xff]
  %v180 = vld [vmem:[%s0 + $0x4e8] sm:$0xff]
  %v181 = vld [vmem:[%s0 + $0x4f0] sm:$0xff]
  %v182 = vld [vmem:[%s0 + $0x4f8] sm:$0xff]
  %v183 = vld [vmem:[%s0 + $0x500] sm:$0xff]
  %v184 = vld [vmem:[%s0 + $0x508] sm:$0xff]
  %v185 = vld [vmem:[%s0 + $0x510] sm:$0xff]
  %v186 = vld [vmem:[%s0 + $0x518] sm:$0xff]
  %v187 = vld [vmem:[%s0 + $0x520] sm:$0xff]
  %v188 = vld [vmem:[%s0 + $0x528] sm:$0xff]
  %v189 = vld [vmem:[%s0 + $0x530] sm:$0xff]
  %v190 = vld [vmem:[%s0 + $0x538] sm:$0xff]
  %v191 = vld [vmem:[%s0 + $0x540] sm:$0xff]
  %v192 = vld [vmem:[%s0 + $0x548] sm:$0xff]
  %v193 = vld [vmem:[%s0 + $0x550] sm:$0xff]
  %v194 = vld [vmem:[%s0 + $0x558] sm:$0xff]
  %v195 = vld [vmem:[%s0 + $0x560] sm:$0xff]
  %v196 = vld [vmem:[%s0 + $0x568] sm:$0xff]
  %v197 = vld [vmem:[%s0 + $0x570] sm:$0xff]
  %v198 = vld [vmem:[%s0 + $0x578] sm:$0xff]
  %v199 = vld [vmem:[%s0 + $0x580] sm:$0xff]
  %v200 = vld [vmem:[%s0 + $0x588] sm:$0xff]
  %v201 = vld [vmem:[%s0 + $0x590] sm:$0xff]
  %v202 = vld [vmem:[%s0 + $0x598] sm:$0xff]
  %v203 = vld [vmem:[%s0 + $0x5a0] sm:$0xff]
  %v204 = vld [vmem:[%s0 + $0x5a8] sm:$0xff]
  %v205 = vld [vmem:[%s0 + $0x5b0] sm:$0xff]
  %v206 = vld [vmem:[%s0 + $0x5b8] sm:$0xff]
  %v207 = vld [vmem:[%s0 + $0x5c0] sm:$0xff]
  %v208 = vld [vmem:[%s0 + $0x5c8] sm:$0xff]
  %v209 = vld [vmem:[%s0 + $0x5d0] sm:$0xff]
  %v210 = vld [vmem:[%s0 + $0x5d8] sm:$0xff]
  %v211 = vld [vmem:[%s0 + $0x5e0] sm:$0xff]
  %v212 = vld [vmem:[%s0 + $0x5e8] sm:$0xff]
  %v213 = vld [vmem:[%s0 + $0x5f0] sm:$0xff]
  %v214 = vld [vmem:[%s0 + $0x5f8] sm:$0xff]
  %v215 = vld [vmem:[%s0 + $0x600] sm:$0xff]
  %v216 = vld [vmem:[%s0 + $0x608] sm:$0xff]
  %v217 = vld [vmem:[%s0 + $0x610] sm:$0xff]
  %v218 = vld [vmem:[%s0 + $0x618] sm:$0xff]
  %v219 = vld [vmem:[%s0 + $0x620] sm:$0xff]
  %v220 = vld [vmem:[%s0 + $0x628] sm:$0xff]
  %v221 = vld [vmem:[%s0 + $0x630] sm:$0xff]
  %v222 = vld [vmem:[%s0 + $0x638] sm:$0xff]
  %v223 = vld [vmem:[%s0 + $0x640] sm:$0xff]
  %v224 = vld [vmem:[%s0 + $0x648] sm:$0xff]
  %v225 = vld [vmem:[%s0 + $0x650] sm:$0xff]
  %v226 = vld [vmem:[%s0 + $0x658] sm:$0xff]
  %v227 = vld [vmem:[%s0 + $0x660] sm:$0xff]
  %v228 = vld [vmem:[%s0 + $0x668] sm:$0xff]
  %v229 = vld [vmem:[%s0 + $0x670] sm:$0xff]
  %v230 = vld [vmem:[%s0 + $0x678] sm:$0xff]
  %v231 = vld [vmem:[%s0 + $0x680] sm:$0xff]
  %v232 = vld [vmem:[%s0 + $0x688] sm:$0xff]
  %v233 = vld [vmem:[%s0 + $0x690] sm:$0xff]
  %v234 = vld [vmem:[%s0 + $0x698] sm:$0xff]
  %v235 = vld [vmem:[%s0 + $0x6a0] sm:$0xff]
  %v236 = vld [vmem:[%s0 + $0x6a8] sm:$0xff]
  %v237 = vld [vmem:[%s0 + $0x6b0] sm:$0xff]
  %v238 = vld [vmem:[%s0 + $0x6b8] sm:$0xff]
  %v240 = vunpack.c.l.b16 %v22
  %v241 = vunpack.c.h.b16 %v22
  %v242 = vpack.c.b16 %v240, %v240
  %v243 = vpack.c.b16 %v241, %v241
  %v461 = vunpack.c.l.b16 %v23
  %v462 = vunpack.c.h.b16 %v23
  %v463 = vunpack.c.l.b16 %v24
  %v464 = vunpack.c.h.b16 %v24
  %v465 = vunpack.c.l.b16 %v25
  %v466 = vunpack.c.h.b16 %v25
  %v467 = vunpack.c.l.b16 %v26
  %v468 = vunpack.c.h.b16 %v26
  %v469 = vunpack.c.l.b16 %v27
  %v470 = vunpack.c.h.b16 %v27
  %v471 = vunpack.c.l.b16 %v28
  %v472 = vunpack.c.h.b16 %v28
  %v473 = vunpack.c.l.b16 %v29
  %v474 = vunpack.c.h.b16 %v29
  %v475 = vunpack.c.l.b16 %v30
  %v476 = vunpack.c.h.b16 %v30
  %v477 = vunpack.c.l.b16 %v31
  %v478 = vunpack.c.h.b16 %v31
  %v479 = vunpack.c.l.b16 %v32
  %v480 = vunpack.c.h.b16 %v32
  %v481 = vunpack.c.l.b16 %v33
  %v482 = vunpack.c.h.b16 %v33
  %v483 = vunpack.c.l.b16 %v34
  %v484 = vunpack.c.h.b16 %v34
  %v485 = vunpack.c.l.b16 %v35
  %v486 = vunpack.c.h.b16 %v35
  %v487 = vunpack.c.l.b16 %v36
  %v488 = vunpack.c.h.b16 %v36
  %v489 = vunpack.c.l.b16 %v37
  %v490 = vunpack.c.h.b16 %v37
  %v491 = vunpack.c.l.b16 %v38
  %v492 = vunpack.c.h.b16 %v38
  %v493 = vunpack.c.l.b16 %v39
  %v494 = vunpack.c.h.b16 %v39
  %v495 = vunpack.c.l.b16 %v40
  %v496 = vunpack.c.h.b16 %v40
  %v497 = vunpack.c.l.b16 %v41
  %v498 = vunpack.c.h.b16 %v41
  %v499 = vunpack.c.l.b16 %v42
  %v500 = vunpack.c.h.b16 %v42
  %v501 = vunpack.c.l.b16 %v43
  %v502 = vunpack.c.h.b16 %v43
  %v503 = vunpack.c.l.b16 %v44
  %v504 = vunpack.c.h.b16 %v44
  %v505 = vunpack.c.l.b16 %v45
  %v506 = vunpack.c.h.b16 %v45
  %v507 = vunpack.c.l.b16 %v46
  %v508 = vunpack.c.h.b16 %v46
  %v509 = vunpack.c.l.b16 %v47
  %v510 = vunpack.c.h.b16 %v47
  %v511 = vunpack.c.l.b16 %v48
  %v512 = vunpack.c.h.b16 %v48
  %v513 = vunpack.c.l.b16 %v49
  %v514 = vunpack.c.h.b16 %v49
  %v515 = vunpack.c.l.b16 %v50
  %v516 = vunpack.c.h.b16 %v50
  %v517 = vunpack.c.l.b16 %v51
  %v518 = vunpack.c.h.b16 %v51
  %v519 = vunpack.c.l.b16 %v52
  %v520 = vunpack.c.h.b16 %v52
  %v521 = vunpack.c.l.b16 %v53
  %v522 = vunpack.c.h.b16 %v53
  %v523 = vunpack.c.l.b16 %v54
  %v524 = vunpack.c.h.b16 %v54
  %v525 = vunpack.c.l.b16 %v55
  %v526 = vunpack.c.h.b16 %v55
  %v527 = vunpack.c.l.b16 %v56
  %v528 = vunpack.c.h.b16 %v56
  %v529 = vunpack.c.l.b16 %v57
  %v530 = vunpack.c.h.b16 %v57
  %v531 = vunpack.c.l.b16 %v58
  %v532 = vunpack.c.h.b16 %v58
  %v533 = vunpack.c.l.b16 %v59
  %v534 = vunpack.c.h.b16 %v59
  %v535 = vunpack.c.l.b16 %v60
  %v536 = vunpack.c.h.b16 %v60
  %v537 = vunpack.c.l.b16 %v61
  %v538 = vunpack.c.h.b16 %v61
  %v539 = vunpack.c.l.b16 %v62
  %v540 = vunpack.c.h.b16 %v62
  %v541 = vunpack.c.l.b16 %v63
  %v542 = vunpack.c.h.b16 %v63
  %v543 = vunpack.c.l.b16 %v64
  %v544 = vunpack.c.h.b16 %v64
  %v545 = vunpack.c.l.b16 %v65
  %v546 = vunpack.c.h.b16 %v65
  %v547 = vunpack.c.l.b16 %v66
  %v548 = vunpack.c.h.b16 %v66
  %v549 = vunpack.c.l.b16 %v67
  %v550 = vunpack.c.h.b16 %v67
  %v551 = vunpack.c.l.b16 %v68
  %v552 = vunpack.c.h.b16 %v68
  %v553 = vunpack.c.l.b16 %v69
  %v554 = vunpack.c.h.b16 %v69
  %v555 = vunpack.c.l.b16 %v70
  %v556 = vunpack.c.h.b16 %v70
  %v557 = vunpack.c.l.b16 %v71
  %v558 = vunpack.c.h.b16 %v71
  %v559 = vunpack.c.l.b16 %v72
  %v560 = vunpack.c.h.b16 %v72
  %v561 = vunpack.c.l.b16 %v73
  %v562 = vunpack.c.h.b16 %v73
  %v563 = vunpack.c.l.b16 %v74
  %v564 = vunpack.c.h.b16 %v74
  %v565 = vunpack.c.l.b16 %v75
  %v566 = vunpack.c.h.b16 %v75
  %v567 = vunpack.c.l.b16 %v76
  %v568 = vunpack.c.h.b16 %v76
  %v569 = vunpack.c.l.b16 %v77
  %v570 = vunpack.c.h.b16 %v77
  %v571 = vunpack.c.l.b16 %v78
  %v572 = vunpack.c.h.b16 %v78
  %v573 = vunpack.c.l.b16 %v79
  %v574 = vunpack.c.h.b16 %v79
  %v575 = vunpack.c.l.b16 %v80
  %v576 = vunpack.c.h.b16 %v80
  %v577 = vunpack.c.l.b16 %v81
  %v578 = vunpack.c.h.b16 %v81
  %v579 = vunpack.c.l.b16 %v82
  %v580 = vunpack.c.h.b16 %v82
  %v581 = vunpack.c.l.b16 %v83
  %v582 = vunpack.c.h.b16 %v83
  %v583 = vunpack.c.l.b16 %v84
  %v584 = vunpack.c.h.b16 %v84
  %v585 = vunpack.c.l.b16 %v85
  %v586 = vunpack.c.h.b16 %v85
  %v587 = vunpack.c.l.b16 %v86
  %v588 = vunpack.c.h.b16 %v86
  %v589 = vunpack.c.l.b16 %v87
  %v590 = vunpack.c.h.b16 %v87
  %v591 = vunpack.c.l.b16 %v88
  %v592 = vunpack.c.h.b16 %v88
  %v593 = vunpack.c.l.b16 %v89
  %v594 = vunpack.c.h.b16 %v89
  %v595 = vunpack.c.l.b16 %v90
  %v596 = vunpack.c.h.b16 %v90
  %v597 = vunpack.c.l.b16 %v91
  %v598 = vunpack.c.h.b16 %v91
  %v599 = vunpack.c.l.b16 %v92
  %v600 = vunpack.c.h.b16 %v92
  %v601 = vunpack.c.l.b16 %v93
  %v602 = vunpack.c.h.b16 %v93
  %v603 = vunpack.c.l.b16 %v94
  %v604 = vunpack.c.h.b16 %v94
  %v605 = vunpack.c.l.b16 %v95
  %v606 = vunpack.c.h.b16 %v95
  %v607 = vunpack.c.l.b16 %v96
  %v608 = vunpack.c.h.b16 %v96
  %v609 = vunpack.c.l.b16 %v97
  %v610 = vunpack.c.h.b16 %v97
  %v611 = vunpack.c.l.b16 %v98
  %v612 = vunpack.c.h.b16 %v98
  %v613 = vunpack.c.l.b16 %v99
  %v614 = vunpack.c.h.b16 %v99
  %v615 = vunpack.c.l.b16 %v100
  %v616 = vunpack.c.h.b16 %v100
  %v617 = vunpack.c.l.b16 %v101
  %v618 = vunpack.c.h.b16 %v101
  %v619 = vunpack.c.l.b16 %v102
  %v620 = vunpack.c.h.b16 %v102
  %v621 = vunpack.c.l.b16 %v103
  %v622 = vunpack.c.h.b16 %v103
  %v623 = vunpack.c.l.b16 %v104
  %v624 = vunpack.c.h.b16 %v104
  %v625 = vunpack.c.l.b16 %v105
  %v626 = vunpack.c.h.b16 %v105
  %v627 = vunpack.c.l.b16 %v106
  %v628 = vunpack.c.h.b16 %v106
  %v629 = vunpack.c.l.b16 %v107
  %v630 = vunpack.c.h.b16 %v107
  %v631 = vunpack.c.l.b16 %v108
  %v632 = vunpack.c.h.b16 %v108
  %v633 = vunpack.c.l.b16 %v109
  %v634 = vunpack.c.h.b16 %v109
  %v635 = vunpack.c.l.b16 %v110
  %v636 = vunpack.c.h.b16 %v110
  %v637 = vunpack.c.l.b16 %v111
  %v638 = vunpack.c.h.b16 %v111
  %v639 = vunpack.c.l.b16 %v112
  %v640 = vunpack.c.h.b16 %v112
  %v641 = vunpack.c.l.b16 %v113
  %v642 = vunpack.c.h.b16 %v113
  %v643 = vunpack.c.l.b16 %v114
  %v644 = vunpack.c.h.b16 %v114
  %v645 = vunpack.c.l.b16 %v115
  %v646 = vunpack.c.h.b16 %v115
  %v647 = vunpack.c.l.b16 %v116
  %v648 = vunpack.c.h.b16 %v116
  %v649 = vunpack.c.l.b16 %v117
  %v650 = vunpack.c.h.b16 %v117
  %v651 = vunpack.c.l.b16 %v118
  %v652 = vunpack.c.h.b16 %v118
  %v653 = vunpack.c.l.b16 %v119
  %v654 = vunpack.c.h.b16 %v119
  %v655 = vunpack.c.l.b16 %v120
  %v656 = vunpack.c.h.b16 %v120
  %v657 = vunpack.c.l.b16 %v121
  %v658 = vunpack.c.h.b16 %v121
  %v659 = vunpack.c.l.b16 %v122
  %v660 = vunpack.c.h.b16 %v122
  %v661 = vunpack.c.l.b16 %v123
  %v662 = vunpack.c.h.b16 %v123
  %v663 = vunpack.c.l.b16 %v124
  %v664 = vunpack.c.h.b16 %v124
  %v665 = vunpack.c.l.b16 %v125
  %v666 = vunpack.c.h.b16 %v125
  %v667 = vunpack.c.l.b16 %v126
  %v668 = vunpack.c.h.b16 %v126
  %v669 = vunpack.c.l.b16 %v127
  %v670 = vunpack.c.h.b16 %v127
  %v671 = vunpack.c.l.b16 %v128
  %v672 = vunpack.c.h.b16 %v128
  %v673 = vunpack.c.l.b16 %v129
  %v674 = vunpack.c.h.b16 %v129
  %v675 = vunpack.c.l.b16 %v130
  %v676 = vunpack.c.h.b16 %v130
  %v677 = vunpack.c.l.b16 %v131
  %v678 = vunpack.c.h.b16 %v131
  %v679 = vunpack.c.l.b16 %v132
  %v680 = vunpack.c.h.b16 %v132
  %v681 = vunpack.c.l.b16 %v133
  %v682 = vunpack.c.h.b16 %v133
  %v683 = vunpack.c.l.b16 %v134
  %v684 = vunpack.c.h.b16 %v134
  %v685 = vunpack.c.l.b16 %v135
  %v686 = vunpack.c.h.b16 %v135
  %v687 = vunpack.c.l.b16 %v136
  %v688 = vunpack.c.h.b16 %v136
  %v689 = vunpack.c.l.b16 %v137
  %v690 = vunpack.c.h.b16 %v137
  %v691 = vunpack.c.l.b16 %v138
  %v692 = vunpack.c.h.b16 %v138
  %v693 = vunpack.c.l.b16 %v139
  %v694 = vunpack.c.h.b16 %v139
  %v695 = vunpack.c.l.b16 %v140
  %v696 = vunpack.c.h.b16 %v140
  %v697 = vunpack.c.l.b16 %v141
  %v698 = vunpack.c.h.b16 %v141
  %v699 = vunpack.c.l.b16 %v142
  %v700 = vunpack.c.h.b16 %v142
  %v701 = vunpack.c.l.b16 %v143
  %v702 = vunpack.c.h.b16 %v143
  %v703 = vunpack.c.l.b16 %v144
  %v704 = vunpack.c.h.b16 %v144
  %v705 = vunpack.c.l.b16 %v145
  %v706 = vunpack.c.h.b16 %v145
  %v707 = vunpack.c.l.b16 %v146
  %v708 = vunpack.c.h.b16 %v146
  %v709 = vunpack.c.l.b16 %v147
  %v710 = vunpack.c.h.b16 %v147
  %v711 = vunpack.c.l.b16 %v148
  %v712 = vunpack.c.h.b16 %v148
  %v713 = vunpack.c.l.b16 %v149
  %v714 = vunpack.c.h.b16 %v149
  %v715 = vunpack.c.l.b16 %v150
  %v716 = vunpack.c.h.b16 %v150
  %v717 = vunpack.c.l.b16 %v151
  %v718 = vunpack.c.h.b16 %v151
  %v719 = vunpack.c.l.b16 %v152
  %v720 = vunpack.c.h.b16 %v152
  %v721 = vunpack.c.l.b16 %v153
  %v722 = vunpack.c.h.b16 %v153
  %v723 = vunpack.c.l.b16 %v154
  %v724 = vunpack.c.h.b16 %v154
  %v725 = vunpack.c.l.b16 %v155
  %v726 = vunpack.c.h.b16 %v155
  %v727 = vunpack.c.l.b16 %v156
  %v728 = vunpack.c.h.b16 %v156
  %v729 = vunpack.c.l.b16 %v157
  %v730 = vunpack.c.h.b16 %v157
  %v731 = vunpack.c.l.b16 %v158
  %v732 = vunpack.c.h.b16 %v158
  %v733 = vunpack.c.l.b16 %v159
  %v734 = vunpack.c.h.b16 %v159
  %v735 = vunpack.c.l.b16 %v160
  %v736 = vunpack.c.h.b16 %v160
  %v737 = vunpack.c.l.b16 %v161
  %v738 = vunpack.c.h.b16 %v161
  %v739 = vunpack.c.l.b16 %v162
  %v740 = vunpack.c.h.b16 %v162
  %v741 = vunpack.c.l.b16 %v163
  %v742 = vunpack.c.h.b16 %v163
  %v743 = vunpack.c.l.b16 %v164
  %v744 = vunpack.c.h.b16 %v164
  %v745 = vunpack.c.l.b16 %v165
  %v746 = vunpack.c.h.b16 %v165
  %v747 = vunpack.c.l.b16 %v166
  %v748 = vunpack.c.h.b16 %v166
  %v749 = vunpack.c.l.b16 %v167
  %v750 = vunpack.c.h.b16 %v167
  %v751 = vunpack.c.l.b16 %v168
  %v752 = vunpack.c.h.b16 %v168
  %v753 = vunpack.c.l.b16 %v169
  %v754 = vunpack.c.h.b16 %v169
  %v755 = vunpack.c.l.b16 %v170
  %v756 = vunpack.c.h.b16 %v170
  %v757 = vunpack.c.l.b16 %v171
  %v758 = vunpack.c.h.b16 %v171
  %v759 = vunpack.c.l.b16 %v172
  %v760 = vunpack.c.h.b16 %v172
  %v761 = vunpack.c.l.b16 %v173
  %v762 = vunpack.c.h.b16 %v173
  %v763 = vunpack.c.l.b16 %v174
  %v764 = vunpack.c.h.b16 %v174
  %v765 = vunpack.c.l.b16 %v175
  %v766 = vunpack.c.h.b16 %v175
  %v767 = vunpack.c.l.b16 %v176
  %v768 = vunpack.c.h.b16 %v176
  %v769 = vunpack.c.l.b16 %v177
  %v770 = vunpack.c.h.b16 %v177
  %v771 = vunpack.c.l.b16 %v178
  %v772 = vunpack.c.h.b16 %v178
  %v773 = vunpack.c.l.b16 %v179
  %v774 = vunpack.c.h.b16 %v179
  %v775 = vunpack.c.l.b16 %v180
  %v776 = vunpack.c.h.b16 %v180
  %v777 = vunpack.c.l.b16 %v181
  %v778 = vunpack.c.h.b16 %v181
  %v779 = vunpack.c.l.b16 %v182
  %v780 = vunpack.c.h.b16 %v182
  %v781 = vunpack.c.l.b16 %v183
  %v782 = vunpack.c.h.b16 %v183
  %v783 = vunpack.c.l.b16 %v184
  %v784 = vunpack.c.h.b16 %v184
  %v785 = vunpack.c.l.b16 %v185
  %v786 = vunpack.c.h.b16 %v185
  %v787 = vunpack.c.l.b16 %v186
  %v788 = vunpack.c.h.b16 %v186
  %v789 = vunpack.c.l.b16 %v187
  %v790 = vunpack.c.h.b16 %v187
  %v791 = vunpack.c.l.b16 %v188
  %v792 = vunpack.c.h.b16 %v188
  %v793 = vunpack.c.l.b16 %v189
  %v794 = vunpack.c.h.b16 %v189
  %v795 = vunpack.c.l.b16 %v190
  %v796 = vunpack.c.h.b16 %v190
  %v797 = vunpack.c.l.b16 %v191
  %v798 = vunpack.c.h.b16 %v191
  %v799 = vunpack.c.l.b16 %v192
  %v800 = vunpack.c.h.b16 %v192
  %v801 = vunpack.c.l.b16 %v193
  %v802 = vunpack.c.h.b16 %v193
  %v803 = vunpack.c.l.b16 %v194
  %v804 = vunpack.c.h.b16 %v194
  %v805 = vunpack.c.l.b16 %v195
  %v806 = vunpack.c.h.b16 %v195
  %v807 = vunpack.c.l.b16 %v196
  %v808 = vunpack.c.h.b16 %v196
  %v809 = vunpack.c.l.b16 %v197
  %v810 = vunpack.c.h.b16 %v197
  %v811 = vunpack.c.l.b16 %v198
  %v812 = vunpack.c.h.b16 %v198
  %v813 = vunpack.c.l.b16 %v199
  %v814 = vunpack.c.h.b16 %v199
  %v815 = vunpack.c.l.b16 %v200
  %v816 = vunpack.c.h.b16 %v200
  %v817 = vunpack.c.l.b16 %v201
  %v818 = vunpack.c.h.b16 %v201
  %v819 = vunpack.c.l.b16 %v202
  %v820 = vunpack.c.h.b16 %v202
  %v821 = vunpack.c.l.b16 %v203
  %v822 = vunpack.c.h.b16 %v203
  %v823 = vunpack.c.l.b16 %v204
  %v824 = vunpack.c.h.b16 %v204
  %v825 = vunpack.c.l.b16 %v205
  %v826 = vunpack.c.h.b16 %v205
  %v827 = vunpack.c.l.b16 %v206
  %v828 = vunpack.c.h.b16 %v206
  %v829 = vunpack.c.l.b16 %v207
  %v830 = vunpack.c.h.b16 %v207
  %v831 = vunpack.c.l.b16 %v208
  %v832 = vunpack.c.h.b16 %v208
  %v833 = vunpack.c.l.b16 %v209
  %v834 = vunpack.c.h.b16 %v209
  %v835 = vunpack.c.l.b16 %v210
  %v836 = vunpack.c.h.b16 %v210
  %v837 = vunpack.c.l.b16 %v211
  %v838 = vunpack.c.h.b16 %v211
  %v839 = vunpack.c.l.b16 %v212
  %v840 = vunpack.c.h.b16 %v212
  %v841 = vunpack.c.l.b16 %v213
  %v842 = vunpack.c.h.b16 %v213
  %v843 = vunpack.c.l.b16 %v214
  %v844 = vunpack.c.h.b16 %v214
  %v845 = vunpack.c.l.b16 %v215
  %v846 = vunpack.c.h.b16 %v215
  %v847 = vunpack.c.l.b16 %v216
  %v848 = vunpack.c.h.b16 %v216
  %v849 = vunpack.c.l.b16 %v217
  %v850 = vunpack.c.h.b16 %v217
  %v851 = vunpack.c.l.b16 %v218
  %v852 = vunpack.c.h.b16 %v218
  %v853 = vunpack.c.l.b16 %v219
  %v854 = vunpack.c.h.b16 %v219
  %v855 = vunpack.c.l.b16 %v220
  %v856 = vunpack.c.h.b16 %v220
  %v857 = vunpack.c.l.b16 %v221
  %v858 = vunpack.c.h.b16 %v221
  %v859 = vunpack.c.l.b16 %v222
  %v860 = vunpack.c.h.b16 %v222
  %v861 = vunpack.c.l.b16 %v223
  %v862 = vunpack.c.h.b16 %v223
  %v863 = vunpack.c.l.b16 %v224
  %v864 = vunpack.c.h.b16 %v224
  %v865 = vunpack.c.l.b16 %v225
  %v866 = vunpack.c.h.b16 %v225
  %v867 = vunpack.c.l.b16 %v226
  %v868 = vunpack.c.h.b16 %v226
  %v869 = vunpack.c.l.b16 %v227
  %v870 = vunpack.c.h.b16 %v227
  %v871 = vunpack.c.l.b16 %v228
  %v872 = vunpack.c.h.b16 %v228
  %v873 = vunpack.c.l.b16 %v229
  %v874 = vunpack.c.h.b16 %v229
  %v875 = vunpack.c.l.b16 %v230
  %v876 = vunpack.c.h.b16 %v230
  %v877 = vunpack.c.l.b16 %v231
  %v878 = vunpack.c.h.b16 %v231
  %v879 = vunpack.c.l.b16 %v232
  %v880 = vunpack.c.h.b16 %v232
  %v881 = vunpack.c.l.b16 %v233
  %v882 = vunpack.c.h.b16 %v233
  %v883 = vunpack.c.l.b16 %v234
  %v884 = vunpack.c.h.b16 %v234
  %v885 = vunpack.c.l.b16 %v235
  %v886 = vunpack.c.h.b16 %v235
  %v887 = vunpack.c.l.b16 %v236
  %v888 = vunpack.c.h.b16 %v236
  %v889 = vunpack.c.l.b16 %v237
  %v890 = vunpack.c.h.b16 %v237
  %v891 = vunpack.c.l.b16 %v238
  %v892 = vunpack.c.h.b16 %v238
  %v893 = vpack.c.b16 %v477, %v461
  %v894 = vpack.c.b16 %v478, %v462
  %v895 = vpack.c.b16 %v479, %v463
  %v896 = vpack.c.b16 %v480, %v464
  %v897 = vpack.c.b16 %v481, %v465
  %v898 = vpack.c.b16 %v482, %v466
  %v899 = vpack.c.b16 %v483, %v467
  %v900 = vpack.c.b16 %v484, %v468
  %v901 = vpack.c.b16 %v485, %v469
  %v902 = vpack.c.b16 %v486, %v470
  %v903 = vpack.c.b16 %v487, %v471
  %v904 = vpack.c.b16 %v488, %v472
  %v905 = vpack.c.b16 %v489, %v473
  %v906 = vpack.c.b16 %v490, %v474
  %v907 = vpack.c.b16 %v491, %v475
  %v908 = vpack.c.b16 %v492, %v476
  %v909 = vpack.c.b16 %v509, %v493
  %v910 = vpack.c.b16 %v510, %v494
  %v911 = vpack.c.b16 %v511, %v495
  %v912 = vpack.c.b16 %v512, %v496
  %v913 = vpack.c.b16 %v513, %v497
  %v914 = vpack.c.b16 %v514, %v498
  %v915 = vpack.c.b16 %v515, %v499
  %v916 = vpack.c.b16 %v516, %v500
  %v917 = vpack.c.b16 %v517, %v501
  %v918 = vpack.c.b16 %v518, %v502
  %v919 = vpack.c.b16 %v519, %v503
  %v920 = vpack.c.b16 %v520, %v504
  %v921 = vpack.c.b16 %v521, %v505
  %v922 = vpack.c.b16 %v522, %v506
  %v923 = vpack.c.b16 %v523, %v507
  %v924 = vpack.c.b16 %v524, %v508
  %v925 = vpack.c.b16 %v541, %v525
  %v926 = vpack.c.b16 %v542, %v526
  %v927 = vpack.c.b16 %v543, %v527
  %v928 = vpack.c.b16 %v544, %v528
  %v929 = vpack.c.b16 %v545, %v529
  %v930 = vpack.c.b16 %v546, %v530
  %v931 = vpack.c.b16 %v547, %v531
  %v932 = vpack.c.b16 %v548, %v532
  %v933 = vpack.c.b16 %v549, %v533
  %v934 = vpack.c.b16 %v550, %v534
  %v935 = vpack.c.b16 %v551, %v535
  %v936 = vpack.c.b16 %v552, %v536
  %v937 = vpack.c.b16 %v553, %v537
  %v938 = vpack.c.b16 %v554, %v538
  %v939 = vpack.c.b16 %v555, %v539
  %v940 = vpack.c.b16 %v556, %v540
  %v941 = vpack.c.b16 %v573, %v557
  %v942 = vpack.c.b16 %v574, %v558
  %v943 = vpack.c.b16 %v575, %v559
  %v944 = vpack.c.b16 %v576, %v560
  %v945 = vpack.c.b16 %v577, %v561
  %v946 = vpack.c.b16 %v578, %v562
  %v947 = vpack.c.b16 %v579, %v563
  %v948 = vpack.c.b16 %v580, %v564
  %v949 = vpack.c.b16 %v581, %v565
  %v950 = vpack.c.b16 %v582, %v566
  %v951 = vpack.c.b16 %v583, %v567
  %v952 = vpack.c.b16 %v584, %v568
  %v953 = vpack.c.b16 %v585, %v569
  %v954 = vpack.c.b16 %v586, %v570
  %v955 = vpack.c.b16 %v587, %v571
  %v956 = vpack.c.b16 %v588, %v572
  %v957 = vpack.c.b16 %v605, %v589
  %v958 = vpack.c.b16 %v606, %v590
  %v959 = vpack.c.b16 %v607, %v591
  %v960 = vpack.c.b16 %v608, %v592
  %v961 = vpack.c.b16 %v609, %v593
  %v962 = vpack.c.b16 %v610, %v594
  %v963 = vpack.c.b16 %v611, %v595
  %v964 = vpack.c.b16 %v612, %v596
  %v965 = vpack.c.b16 %v613, %v597
  %v966 = vpack.c.b16 %v614, %v598
  %v967 = vpack.c.b16 %v615, %v599
  %v968 = vpack.c.b16 %v616, %v600
  %v969 = vpack.c.b16 %v617, %v601
  %v970 = vpack.c.b16 %v618, %v602
  %v971 = vpack.c.b16 %v619, %v603
  %v972 = vpack.c.b16 %v620, %v604
  %v973 = vpack.c.b16 %v637, %v621
  %v974 = vpack.c.b16 %v638, %v622
  %v975 = vpack.c.b16 %v639, %v623
  %v976 = vpack.c.b16 %v640, %v624
  %v977 = vpack.c.b16 %v641, %v625
  %v978 = vpack.c.b16 %v642, %v626
  %v979 = vpack.c.b16 %v643, %v627
  %v980 = vpack.c.b16 %v644, %v628
  %v981 = vpack.c.b16 %v645, %v629
  %v982 = vpack.c.b16 %v646, %v630
  %v983 = vpack.c.b16 %v647, %v631
  %v984 = vpack.c.b16 %v648, %v632
  %v985 = vpack.c.b16 %v649, %v633
  %v986 = vpack.c.b16 %v650, %v634
  %v987 = vpack.c.b16 %v651, %v635
  %v988 = vpack.c.b16 %v652, %v636
  %v989 = vpack.c.b16 %v669, %v653
  %v990 = vpack.c.b16 %v670, %v654
  %v991 = vpack.c.b16 %v671, %v655
  %v992 = vpack.c.b16 %v672, %v656
  %v993 = vpack.c.b16 %v673, %v657
  %v994 = vpack.c.b16 %v674, %v658
  %v995 = vpack.c.b16 %v675, %v659
  %v996 = vpack.c.b16 %v676, %v660
  %v997 = vpack.c.b16 %v677, %v661
  %v998 = vpack.c.b16 %v678, %v662
  %v999 = vpack.c.b16 %v679, %v663
  %v1000 = vpack.c.b16 %v680, %v664
  %v1001 = vpack.c.b16 %v681, %v665
  %v1002 = vpack.c.b16 %v682, %v666
  %v1003 = vpack.c.b16 %v683, %v667
  %v1004 = vpack.c.b16 %v684, %v668
  %v1005 = vpack.c.b16 %v701, %v685
  %v1006 = vpack.c.b16 %v702, %v686
  %v1007 = vpack.c.b16 %v703, %v687
  %v1008 = vpack.c.b16 %v704, %v688
  %v1009 = vpack.c.b16 %v705, %v689
  %v1010 = vpack.c.b16 %v706, %v690
  %v1011 = vpack.c.b16 %v707, %v691
  %v1012 = vpack.c.b16 %v708, %v692
  %v1013 = vpack.c.b16 %v709, %v693
  %v1014 = vpack.c.b16 %v710, %v694
  %v1015 = vpack.c.b16 %v711, %v695
  %v1016 = vpack.c.b16 %v712, %v696
  %v1017 = vpack.c.b16 %v713, %v697
  %v1018 = vpack.c.b16 %v714, %v698
  %v1019 = vpack.c.b16 %v715, %v699
  %v1020 = vpack.c.b16 %v716, %v700
  %v1021 = vpack.c.b16 %v733, %v717
  %v1022 = vpack.c.b16 %v734, %v718
  %v1023 = vpack.c.b16 %v735, %v719
  %v1024 = vpack.c.b16 %v736, %v720
  %v1025 = vpack.c.b16 %v737, %v721
  %v1026 = vpack.c.b16 %v738, %v722
  %v1027 = vpack.c.b16 %v739, %v723
  %v1028 = vpack.c.b16 %v740, %v724
  %v1029 = vpack.c.b16 %v741, %v725
  %v1030 = vpack.c.b16 %v742, %v726
  %v1031 = vpack.c.b16 %v743, %v727
  %v1032 = vpack.c.b16 %v744, %v728
  %v1033 = vpack.c.b16 %v745, %v729
  %v1034 = vpack.c.b16 %v746, %v730
  %v1035 = vpack.c.b16 %v747, %v731
  %v1036 = vpack.c.b16 %v748, %v732
  %v1037 = vpack.c.b16 %v765, %v749
  %v1038 = vpack.c.b16 %v766, %v750
  %v1039 = vpack.c.b16 %v767, %v751
  %v1040 = vpack.c.b16 %v768, %v752
  %v1041 = vpack.c.b16 %v769, %v753
  %v1042 = vpack.c.b16 %v770, %v754
  %v1043 = vpack.c.b16 %v771, %v755
  %v1044 = vpack.c.b16 %v772, %v756
  %v1045 = vpack.c.b16 %v773, %v757
  %v1046 = vpack.c.b16 %v774, %v758
  %v1047 = vpack.c.b16 %v775, %v759
  %v1048 = vpack.c.b16 %v776, %v760
  %v1049 = vpack.c.b16 %v777, %v761
  %v1050 = vpack.c.b16 %v778, %v762
  %v1051 = vpack.c.b16 %v779, %v763
  %v1052 = vpack.c.b16 %v780, %v764
  %v1053 = vpack.c.b16 %v797, %v781
  %v1054 = vpack.c.b16 %v798, %v782
  %v1055 = vpack.c.b16 %v799, %v783
  %v1056 = vpack.c.b16 %v800, %v784
  %v1057 = vpack.c.b16 %v801, %v785
  %v1058 = vpack.c.b16 %v802, %v786
  %v1059 = vpack.c.b16 %v803, %v787
  %v1060 = vpack.c.b16 %v804, %v788
  %v1061 = vpack.c.b16 %v805, %v789
  %v1062 = vpack.c.b16 %v806, %v790
  %v1063 = vpack.c.b16 %v807, %v791
  %v1064 = vpack.c.b16 %v808, %v792
  %v1065 = vpack.c.b16 %v809, %v793
  %v1066 = vpack.c.b16 %v810, %v794
  %v1067 = vpack.c.b16 %v811, %v795
  %v1068 = vpack.c.b16 %v812, %v796
  %v1069 = vpack.c.b16 %v829, %v813
  %v1070 = vpack.c.b16 %v830, %v814
  %v1071 = vpack.c.b16 %v831, %v815
  %v1072 = vpack.c.b16 %v832, %v816
  %v1073 = vpack.c.b16 %v833, %v817
  %v1074 = vpack.c.b16 %v834, %v818
  %v1075 = vpack.c.b16 %v835, %v819
  %v1076 = vpack.c.b16 %v836, %v820
  %v1077 = vpack.c.b16 %v837, %v821
  %v1078 = vpack.c.b16 %v838, %v822
  %v1079 = vpack.c.b16 %v839, %v823
  %v1080 = vpack.c.b16 %v840, %v824
  %v1081 = vpack.c.b16 %v841, %v825
  %v1082 = vpack.c.b16 %v842, %v826
  %v1083 = vpack.c.b16 %v843, %v827
  %v1084 = vpack.c.b16 %v844, %v828
  %v1085 = vpack.c.b16 %v861, %v845
  %v1086 = vpack.c.b16 %v862, %v846
  %v1087 = vpack.c.b16 %v863, %v847
  %v1088 = vpack.c.b16 %v864, %v848
  %v1089 = vpack.c.b16 %v865, %v849
  %v1090 = vpack.c.b16 %v866, %v850
  %v1091 = vpack.c.b16 %v867, %v851
  %v1092 = vpack.c.b16 %v868, %v852
  %v1093 = vpack.c.b16 %v869, %v853
  %v1094 = vpack.c.b16 %v870, %v854
  %v1095 = vpack.c.b16 %v871, %v855
  %v1096 = vpack.c.b16 %v872, %v856
  %v1097 = vpack.c.b16 %v873, %v857
  %v1098 = vpack.c.b16 %v874, %v858
  %v1099 = vpack.c.b16 %v875, %v859
  %v1100 = vpack.c.b16 %v876, %v860
  %v1101 = vpack.c.b16 %v877, %v877
  %v1102 = vpack.c.b16 %v878, %v878
  %v1103 = vpack.c.b16 %v879, %v879
  %v1104 = vpack.c.b16 %v880, %v880
  %v1105 = vpack.c.b16 %v881, %v881
  %v1106 = vpack.c.b16 %v882, %v882
  %v1107 = vpack.c.b16 %v883, %v883
  %v1108 = vpack.c.b16 %v884, %v884
  %v1109 = vpack.c.b16 %v885, %v885
  %v1110 = vpack.c.b16 %v886, %v886
  %v1111 = vpack.c.b16 %v887, %v887
  %v1112 = vpack.c.b16 %v888, %v888
  %v1113 = vpack.c.b16 %v889, %v889
  %v1114 = vpack.c.b16 %v890, %v890
  %v1115 = vpack.c.b16 %v891, %v891
  %v1116 = vpack.c.b16 %v892, %v892
  %vm1325 = vcmask 719872
  %v1327 = vsel %vm1325, %v243, 0
  %vm1329 = vcmask 1043456
  %v1331 = vsel %vm1329, %v1101, 0
  %v1334 = vsel %vm1329, %v1102, 0
  %v1337 = vsel %vm1329, %v1103, 0
  %v1340 = vsel %vm1329, %v1104, 0
  %v1343 = vsel %vm1329, %v1105, 0
  %v1346 = vsel %vm1329, %v1106, 0
  %v1349 = vsel %vm1329, %v1107, 0
  %v1352 = vsel %vm1329, %v1108, 0
  %v1355 = vsel %vm1329, %v1109, 0
  %v1358 = vsel %vm1329, %v1110, 0
  %v1361 = vsel %vm1329, %v1111, 0
  %v1364 = vsel %vm1329, %v1112, 0
  %v1367 = vsel %vm1329, %v1113, 0
  %v1370 = vsel %vm1329, %v1114, 0
  %v1373 = vsel %vm1329, %v1115, 0
  %v1376 = vsel %vm1329, %v1116, 0
  %1378 = vmatprep.subr.bf16.mxu0 %v894
  %1379 = vmatpush1.bf16.msra.mxu0 %v893
  %1380 = vmatprep.subr.bf16.mxu0 %v910
  %1381 = vmatpush1.bf16.msra.mxu0 %v909
  %1382 = vmatprep.subr.bf16.mxu0 %v926
  %1383 = vmatpush1.bf16.msra.mxu0 %v925
  %1384 = vmatprep.subr.bf16.mxu0 %v942
  %1385 = vmatpush1.bf16.msra.mxu0 %v941
  %1386 = vmatprep.subr.bf16.mxu0 %v958
  %1387 = vmatpush1.bf16.msra.mxu0 %v957
  %1388 = vmatprep.subr.bf16.mxu0 %v974
  %1389 = vmatpush1.bf16.msra.mxu0 %v973
  %1390 = vmatprep.subr.bf16.mxu0 %v990
  %1391 = vmatpush1.bf16.msra.mxu0 %v989
  %1392 = vmatprep.subr.bf16.mxu0 %v1006
  %1393 = vmatpush1.bf16.msra.mxu0 %v1005
  %1394 = vmatprep.subr.bf16.mxu0 %v1022
  %1395 = vmatpush1.bf16.msra.mxu0 %v1021
  %1396 = vmatprep.subr.bf16.mxu0 %v1038
  %1397 = vmatpush1.bf16.msra.mxu0 %v1037
  %1398 = vmatprep.subr.bf16.mxu0 %v1054
  %1399 = vmatpush1.bf16.msra.mxu0 %v1053
  %1400 = vmatprep.subr.bf16.mxu0 %v1070
  %1401 = vmatpush1.bf16.msra.mxu0 %v1069
  %1402 = vmatprep.subr.bf16.mxu0 %v1086
  %1403 = vmatpush1.bf16.msra.mxu0 %v1085
  %1404 = vmatprep.subr.bf16.mxu0 %v1334
  %1405 = vmatpush1.bf16.msra.mxu0 %v1331
  %1406 = vmatprep.subr.bf16.mxu0 0
  %1407 = vmatpush1.bf16.msra.mxu0 0
  %1408 = vmatprep.subr.bf16.mxu0 0
  %1409 = vmatpush1.bf16.msra.mxu0 0
  %1410 = vmatprep.mubr.bf16.mxu0 %v1327
  %1411 = vmatmul.mubr.bf16.gmra.mrb[0].mxu0 %v242
  %v1412 = vpop.f32.mrb[0].mxu0
  %v1413 = vadd.f32 0.0, %v1412
  %v1414 = vpop.f32.mrb[0].mxu0
  %v1415 = vadd.f32 0.0, %v1414
  %v1416 = vpop.f32.mrb[0].mxu0
  %v1417 = vpop.f32.mrb[0].mxu0
  %1418 = vdwg.mxu0
  %1419 = vmatprep.subr.bf16.mxu0 %v896
  %1420 = vmatpush1.bf16.msra.mxu0 %v895
  %1421 = vmatprep.subr.bf16.mxu0 %v912
  %1422 = vmatpush1.bf16.msra.mxu0 %v911
  %1423 = vmatprep.subr.bf16.mxu0 %v928
  %1424 = vmatpush1.bf16.msra.mxu0 %v927
  %1425 = vmatprep.subr.bf16.mxu0 %v944
  %1426 = vmatpush1.bf16.msra.mxu0 %v943
  %1427 = vmatprep.subr.bf16.mxu0 %v960
  %1428 = vmatpush1.bf16.msra.mxu0 %v959
  %1429 = vmatprep.subr.bf16.mxu0 %v976
  %1430 = vmatpush1.bf16.msra.mxu0 %v975
  %1431 = vmatprep.subr.bf16.mxu0 %v992
  %1432 = vmatpush1.bf16.msra.mxu0 %v991
  %1433 = vmatprep.subr.bf16.mxu0 %v1008
  %1434 = vmatpush1.bf16.msra.mxu0 %v1007
  %1435 = vmatprep.subr.bf16.mxu0 %v1024
  %1436 = vmatpush1.bf16.msra.mxu0 %v1023
  %1437 = vmatprep.subr.bf16.mxu0 %v1040
  %1438 = vmatpush1.bf16.msra.mxu0 %v1039
  %1439 = vmatprep.subr.bf16.mxu0 %v1056
  %1440 = vmatpush1.bf16.msra.mxu0 %v1055
  %1441 = vmatprep.subr.bf16.mxu0 %v1072
  %1442 = vmatpush1.bf16.msra.mxu0 %v1071
  %1443 = vmatprep.subr.bf16.mxu0 %v1088
  %1444 = vmatpush1.bf16.msra.mxu0 %v1087
  %1445 = vmatprep.subr.bf16.mxu0 %v1340
  %1446 = vmatpush1.bf16.msra.mxu0 %v1337
  %1447 = vmatprep.subr.bf16.mxu0 0
  %1448 = vmatpush1.bf16.msra.mxu0 0
  %1449 = vmatprep.subr.bf16.mxu0 0
  %1450 = vmatpush1.bf16.msra.mxu0 0
  %1451 = vmatprep.mubr.bf16.mxu0 %v1327
  %1452 = vmatmul.mubr.bf16.gmra.mrb[0].mxu0 %v242
  %v1453 = vpop.f32.mrb[0].mxu0
  %v1454 = vadd.f32 0.0, %v1453
  %v1455 = vpop.f32.mrb[0].mxu0
  %v1456 = vadd.f32 0.0, %v1455
  %v1457 = vpop.f32.mrb[0].mxu0
  %v1458 = vpop.f32.mrb[0].mxu0
  %1459 = vdwg.mxu0
  %1460 = vmatprep.subr.bf16.mxu0 %v898
  %1461 = vmatpush1.bf16.msra.mxu0 %v897
  %1462 = vmatprep.subr.bf16.mxu0 %v914
  %1463 = vmatpush1.bf16.msra.mxu0 %v913
  %1464 = vmatprep.subr.bf16.mxu0 %v930
  %1465 = vmatpush1.bf16.msra.mxu0 %v929
  %1466 = vmatprep.subr.bf16.mxu0 %v946
  %1467 = vmatpush1.bf16.msra.mxu0 %v945
  %1468 = vmatprep.subr.bf16.mxu0 %v962
  %1469 = vmatpush1.bf16.msra.mxu0 %v961
  %1470 = vmatprep.subr.bf16.mxu0 %v978
  %1471 = vmatpush1.bf16.msra.mxu0 %v977
  %1472 = vmatprep.subr.bf16.mxu0 %v994
  %1473 = vmatpush1.bf16.msra.mxu0 %v993
  %1474 = vmatprep.subr.bf16.mxu0 %v1010
  %1475 = vmatpush1.bf16.msra.mxu0 %v1009
  %1476 = vmatprep.subr.bf16.mxu0 %v1026
  %1477 = vmatpush1.bf16.msra.mxu0 %v1025
  %1478 = vmatprep.subr.bf16.mxu0 %v1042
  %1479 = vmatpush1.bf16.msra.mxu0 %v1041
  %1480 = vmatprep.subr.bf16.mxu0 %v1058
  %1481 = vmatpush1.bf16.msra.mxu0 %v1057
  %1482 = vmatprep.subr.bf16.mxu0 %v1074
  %1483 = vmatpush1.bf16.msra.mxu0 %v1073
  %1484 = vmatprep.subr.bf16.mxu0 %v1090
  %1485 = vmatpush1.bf16.msra.mxu0 %v1089
  %1486 = vmatprep.subr.bf16.mxu0 %v1346
  %1487 = vmatpush1.bf16.msra.mxu0 %v1343
  %1488 = vmatprep.subr.bf16.mxu0 0
  %1489 = vmatpush1.bf16.msra.mxu0 0
  %1490 = vmatprep.subr.bf16.mxu0 0
  %1491 = vmatpush1.bf16.msra.mxu0 0
  %1492 = vmatprep.mubr.bf16.mxu0 %v1327
  %1493 = vmatmul.mubr.bf16.gmra.mrb[0].mxu0 %v242
  %v1494 = vpop.f32.mrb[0].mxu0
  %v1495 = vadd.f32 0.0, %v1494
  %v1496 = vpop.f32.mrb[0].mxu0
  %v1497 = vadd.f32 0.0, %v1496
  %v1498 = vpop.f32.mrb[0].mxu0
  %v1499 = vpop.f32.mrb[0].mxu0
  %1500 = vdwg.mxu0
  %1501 = vmatprep.subr.bf16.mxu0 %v900
  %1502 = vmatpush1.bf16.msra.mxu0 %v899
  %1503 = vmatprep.subr.bf16.mxu0 %v916
  %1504 = vmatpush1.bf16.msra.mxu0 %v915
  %1505 = vmatprep.subr.bf16.mxu0 %v932
  %1506 = vmatpush1.bf16.msra.mxu0 %v931
  %1507 = vmatprep.subr.bf16.mxu0 %v948
  %1508 = vmatpush1.bf16.msra.mxu0 %v947
  %1509 = vmatprep.subr.bf16.mxu0 %v964
  %1510 = vmatpush1.bf16.msra.mxu0 %v963
  %1511 = vmatprep.subr.bf16.mxu0 %v980
  %1512 = vmatpush1.bf16.msra.mxu0 %v979
  %1513 = vmatprep.subr.bf16.mxu0 %v996
  %1514 = vmatpush1.bf16.msra.mxu0 %v995
  %1515 = vmatprep.subr.bf16.mxu0 %v1012
  %1516 = vmatpush1.bf16.msra.mxu0 %v1011
  %1517 = vmatprep.subr.bf16.mxu0 %v1028
  %1518 = vmatpush1.bf16.msra.mxu0 %v1027
  %1519 = vmatprep.subr.bf16.mxu0 %v1044
  %1520 = vmatpush1.bf16.msra.mxu0 %v1043
  %1521 = vmatprep.subr.bf16.mxu0 %v1060
  %1522 = vmatpush1.bf16.msra.mxu0 %v1059
  %1523 = vmatprep.subr.bf16.mxu0 %v1076
  %1524 = vmatpush1.bf16.msra.mxu0 %v1075
  %1525 = vmatprep.subr.bf16.mxu0 %v1092
  %1526 = vmatpush1.bf16.msra.mxu0 %v1091
  %1527 = vmatprep.subr.bf16.mxu0 %v1352
  %1528 = vmatpush1.bf16.msra.mxu0 %v1349
  %1529 = vmatprep.subr.bf16.mxu0 0
  %1530 = vmatpush1.bf16.msra.mxu0 0
  %1531 = vmatprep.subr.bf16.mxu0 0
  %1532 = vmatpush1.bf16.msra.mxu0 0
  %1533 = vmatprep.mubr.bf16.mxu0 %v1327
  %1534 = vmatmul.mubr.bf16.gmra.mrb[0].mxu0 %v242
  %v1535 = vpop.f32.mrb[0].mxu0
  %v1536 = vadd.f32 0.0, %v1535
  %v1537 = vpop.f32.mrb[0].mxu0
  %v1538 = vadd.f32 0.0, %v1537
  %v1539 = vpop.f32.mrb[0].mxu0
  %v1540 = vpop.f32.mrb[0].mxu0
  %1541 = vdwg.mxu0
  %1542 = vmatprep.subr.bf16.mxu0 %v902
  %1543 = vmatpush1.bf16.msra.mxu0 %v901
  %1544 = vmatprep.subr.bf16.mxu0 %v918
  %1545 = vmatpush1.bf16.msra.mxu0 %v917
  %1546 = vmatprep.subr.bf16.mxu0 %v934
  %1547 = vmatpush1.bf16.msra.mxu0 %v933
  %1548 = vmatprep.subr.bf16.mxu0 %v950
  %1549 = vmatpush1.bf16.msra.mxu0 %v949
  %1550 = vmatprep.subr.bf16.mxu0 %v966
  %1551 = vmatpush1.bf16.msra.mxu0 %v965
  %1552 = vmatprep.subr.bf16.mxu0 %v982
  %1553 = vmatpush1.bf16.msra.mxu0 %v981
  %1554 = vmatprep.subr.bf16.mxu0 %v998
  %1555 = vmatpush1.bf16.msra.mxu0 %v997
  %1556 = vmatprep.subr.bf16.mxu0 %v1014
  %1557 = vmatpush1.bf16.msra.mxu0 %v1013
  %1558 = vmatprep.subr.bf16.mxu0 %v1030
  %1559 = vmatpush1.bf16.msra.mxu0 %v1029
  %1560 = vmatprep.subr.bf16.mxu0 %v1046
  %1561 = vmatpush1.bf16.msra.mxu0 %v1045
  %1562 = vmatprep.subr.bf16.mxu0 %v1062
  %1563 = vmatpush1.bf16.msra.mxu0 %v1061
  %1564 = vmatprep.subr.bf16.mxu0 %v1078
  %1565 = vmatpush1.bf16.msra.mxu0 %v1077
  %1566 = vmatprep.subr.bf16.mxu0 %v1094
  %1567 = vmatpush1.bf16.msra.mxu0 %v1093
  %1568 = vmatprep.subr.bf16.mxu0 %v1358
  %1569 = vmatpush1.bf16.msra.mxu0 %v1355
  %1570 = vmatprep.subr.bf16.mxu0 0
  %1571 = vmatpush1.bf16.msra.mxu0 0
  %1572 = vmatprep.subr.bf16.mxu0 0
  %1573 = vmatpush1.bf16.msra.mxu0 0
  %1574 = vmatprep.mubr.bf16.mxu0 %v1327
  %1575 = vmatmul.mubr.bf16.gmra.mrb[0].mxu0 %v242
  %v1576 = vpop.f32.mrb[0].mxu0
  %v1577 = vadd.f32 0.0, %v1576
  %v1578 = vpop.f32.mrb[0].mxu0
  %v1579 = vadd.f32 0.0, %v1578
  %v1580 = vpop.f32.mrb[0].mxu0
  %v1581 = vpop.f32.mrb[0].mxu0
  %1582 = vdwg.mxu0
  %1583 = vmatprep.subr.bf16.mxu0 %v904
  %1584 = vmatpush1.bf16.msra.mxu0 %v903
  %1585 = vmatprep.subr.bf16.mxu0 %v920
  %1586 = vmatpush1.bf16.msra.mxu0 %v919
  %1587 = vmatprep.subr.bf16.mxu0 %v936
  %1588 = vmatpush1.bf16.msra.mxu0 %v935
  %1589 = vmatprep.subr.bf16.mxu0 %v952
  %1590 = vmatpush1.bf16.msra.mxu0 %v951
  %1591 = vmatprep.subr.bf16.mxu0 %v968
  %1592 = vmatpush1.bf16.msra.mxu0 %v967
  %1593 = vmatprep.subr.bf16.mxu0 %v984
  %1594 = vmatpush1.bf16.msra.mxu0 %v983
  %1595 = vmatprep.subr.bf16.mxu0 %v1000
  %1596 = vmatpush1.bf16.msra.mxu0 %v999
  %1597 = vmatprep.subr.bf16.mxu0 %v1016
  %1598 = vmatpush1.bf16.msra.mxu0 %v1015
  %1599 = vmatprep.subr.bf16.mxu0 %v1032
  %1600 = vmatpush1.bf16.msra.mxu0 %v1031
  %1601 = vmatprep.subr.bf16.mxu0 %v1048
  %1602 = vmatpush1.bf16.msra.mxu0 %v1047
  %1603 = vmatprep.subr.bf16.mxu0 %v1064
  %1604 = vmatpush1.bf16.msra.mxu0 %v1063
  %1605 = vmatprep.subr.bf16.mxu0 %v1080
  %1606 = vmatpush1.bf16.msra.mxu0 %v1079
  %1607 = vmatprep.subr.bf16.mxu0 %v1096
  %1608 = vmatpush1.bf16.msra.mxu0 %v1095
  %1609 = vmatprep.subr.bf16.mxu0 %v1364
  %1610 = vmatpush1.bf16.msra.mxu0 %v1361
  %1611 = vmatprep.subr.bf16.mxu0 0
  %1612 = vmatpush1.bf16.msra.mxu0 0
  %1613 = vmatprep.subr.bf16.mxu0 0
  %1614 = vmatpush1.bf16.msra.mxu0 0
  %1615 = vmatprep.mubr.bf16.mxu0 %v1327
  %1616 = vmatmul.mubr.bf16.gmra.mrb[0].mxu0 %v242
  %v1617 = vpop.f32.mrb[0].mxu0
  %v1618 = vadd.f32 0.0, %v1617
  %v1619 = vpop.f32.mrb[0].mxu0
  %v1620 = vadd.f32 0.0, %v1619
  %v1621 = vpop.f32.mrb[0].mxu0
  %v1622 = vpop.f32.mrb[0].mxu0
  %1623 = vdwg.mxu0
  %1624 = vmatprep.subr.bf16.mxu0 %v906
  %1625 = vmatpush1.bf16.msra.mxu0 %v905
  %1626 = vmatprep.subr.bf16.mxu0 %v922
  %1627 = vmatpush1.bf16.msra.mxu0 %v921
  %1628 = vmatprep.subr.bf16.mxu0 %v938
  %1629 = vmatpush1.bf16.msra.mxu0 %v937
  %1630 = vmatprep.subr.bf16.mxu0 %v954
  %1631 = vmatpush1.bf16.msra.mxu0 %v953
  %1632 = vmatprep.subr.bf16.mxu0 %v970
  %1633 = vmatpush1.bf16.msra.mxu0 %v969
  %1634 = vmatprep.subr.bf16.mxu0 %v986
  %1635 = vmatpush1.bf16.msra.mxu0 %v985
  %1636 = vmatprep.subr.bf16.mxu0 %v1002
  %1637 = vmatpush1.bf16.msra.mxu0 %v1001
  %1638 = vmatprep.subr.bf16.mxu0 %v1018
  %1639 = vmatpush1.bf16.msra.mxu0 %v1017
  %1640 = vmatprep.subr.bf16.mxu0 %v1034
  %1641 = vmatpush1.bf16.msra.mxu0 %v1033
  %1642 = vmatprep.subr.bf16.mxu0 %v1050
  %1643 = vmatpush1.bf16.msra.mxu0 %v1049
  %1644 = vmatprep.subr.bf16.mxu0 %v1066
  %1645 = vmatpush1.bf16.msra.mxu0 %v1065
  %1646 = vmatprep.subr.bf16.mxu0 %v1082
  %1647 = vmatpush1.bf16.msra.mxu0 %v1081
  %1648 = vmatprep.subr.bf16.mxu0 %v1098
  %1649 = vmatpush1.bf16.msra.mxu0 %v1097
  %1650 = vmatprep.subr.bf16.mxu0 %v1370
  %1651 = vmatpush1.bf16.msra.mxu0 %v1367
  %1652 = vmatprep.subr.bf16.mxu0 0
  %1653 = vmatpush1.bf16.msra.mxu0 0
  %1654 = vmatprep.subr.bf16.mxu0 0
  %1655 = vmatpush1.bf16.msra.mxu0 0
  %1656 = vmatprep.mubr.bf16.mxu0 %v1327
  %1657 = vmatmul.mubr.bf16.gmra.mrb[0].mxu0 %v242
  %v1658 = vpop.f32.mrb[0].mxu0
  %v1659 = vadd.f32 0.0, %v1658
  %v1660 = vpop.f32.mrb[0].mxu0
  %v1661 = vadd.f32 0.0, %v1660
  %v1662 = vpop.f32.mrb[0].mxu0
  %v1663 = vpop.f32.mrb[0].mxu0
  %1664 = vdwg.mxu0
  %1665 = vmatprep.subr.bf16.mxu0 %v908
  %1666 = vmatpush1.bf16.msra.mxu0 %v907
  %1667 = vmatprep.subr.bf16.mxu0 %v924
  %1668 = vmatpush1.bf16.msra.mxu0 %v923
  %1669 = vmatprep.subr.bf16.mxu0 %v940
  %1670 = vmatpush1.bf16.msra.mxu0 %v939
  %1671 = vmatprep.subr.bf16.mxu0 %v956
  %1672 = vmatpush1.bf16.msra.mxu0 %v955
  %1673 = vmatprep.subr.bf16.mxu0 %v972
  %1674 = vmatpush1.bf16.msra.mxu0 %v971
  %1675 = vmatprep.subr.bf16.mxu0 %v988
  %1676 = vmatpush1.bf16.msra.mxu0 %v987
  %1677 = vmatprep.subr.bf16.mxu0 %v1004
  %1678 = vmatpush1.bf16.msra.mxu0 %v1003
  %1679 = vmatprep.subr.bf16.mxu0 %v1020
  %1680 = vmatpush1.bf16.msra.mxu0 %v1019
  %1681 = vmatprep.subr.bf16.mxu0 %v1036
  %1682 = vmatpush1.bf16.msra.mxu0 %v1035
  %1683 = vmatprep.subr.bf16.mxu0 %v1052
  %1684 = vmatpush1.bf16.msra.mxu0 %v1051
  %1685 = vmatprep.subr.bf16.mxu0 %v1068
  %1686 = vmatpush1.bf16.msra.mxu0 %v1067
  %1687 = vmatprep.subr.bf16.mxu0 %v1084
  %1688 = vmatpush1.bf16.msra.mxu0 %v1083
  %1689 = vmatprep.subr.bf16.mxu0 %v1100
  %1690 = vmatpush1.bf16.msra.mxu0 %v1099
  %1691 = vmatprep.subr.bf16.mxu0 %v1376
  %1692 = vmatpush1.bf16.msra.mxu0 %v1373
  %1693 = vmatprep.subr.bf16.mxu0 0
  %1694 = vmatpush1.bf16.msra.mxu0 0
  %1695 = vmatprep.subr.bf16.mxu0 0
  %1696 = vmatpush1.bf16.msra.mxu0 0
  %1697 = vmatprep.mubr.bf16.mxu0 %v1327
  %1698 = vmatmul.mubr.bf16.gmra.mrb[0].mxu0 %v242
  %v1699 = vpop.f32.mrb[0].mxu0
  %v1700 = vadd.f32 0.0, %v1699
  %v1701 = vpop.f32.mrb[0].mxu0
  %v1702 = vadd.f32 0.0, %v1701
  %v1703 = vpop.f32.mrb[0].mxu0
  %v1704 = vpop.f32.mrb[0].mxu0
  %1705 = vdwg.mxu0
  %1706 = vst [vmem:[%s2] sm:$0xff] %v1413
  %1707 = vst [vmem:[%s2 + $0x8] sm:$0xff] %v1415
  %1708 = vst [vmem:[%s2 + $0x10] sm:$0xff] %v1454
  %1709 = vst [vmem:[%s2 + $0x18] sm:$0xff] %v1456
  %1710 = vst [vmem:[%s2 + $0x20] sm:$0xff] %v1495
  %1711 = vst [vmem:[%s2 + $0x28] sm:$0xff] %v1497
  %1712 = vst [vmem:[%s2 + $0x30] sm:$0xff] %v1536
  %1713 = vst [vmem:[%s2 + $0x38] sm:$0xff] %v1538
  %1714 = vst [vmem:[%s2 + $0x40] sm:$0xff] %v1577
  %1715 = vst [vmem:[%s2 + $0x48] sm:$0xff] %v1579
  %1716 = vst [vmem:[%s2 + $0x50] sm:$0xff] %v1618
  %1717 = vst [vmem:[%s2 + $0x58] sm:$0xff] %v1620
  %1718 = vst [vmem:[%s2 + $0x60] sm:$0xff] %v1659
  %1719 = vst [vmem:[%s2 + $0x68] sm:$0xff] %v1661
  %1720 = vst [vmem:[%s2 + $0x70] sm:$0xff] %v1700
  %1721 = vst [vmem:[%s2 + $0x78] sm:$0xff] %v1702
  %v1722 = vld [vmem:[#allocation2] sm:$0xff]
  %v1723 = vadd.f32 %v1413, %v1415
  %v1724 = vadd.f32 %v1723, %v1454
  %v1725 = vadd.f32 %v1724, %v1456
  %v1726 = vadd.f32 %v1725, %v1495
  %v1727 = vadd.f32 %v1726, %v1497
  %v1728 = vadd.f32 %v1727, %v1536
  %v1729 = vadd.f32 %v1728, %v1538
  %v1730 = vadd.f32 %v1729, %v1577
  %v1731 = vadd.f32 %v1730, %v1579
  %v1732 = vadd.f32 %v1731, %v1618
  %v1733 = vadd.f32 %v1732, %v1620
  %v1734 = vadd.f32 %v1733, %v1659
  %v1735 = vadd.f32 %v1734, %v1661
  %v1736 = vadd.f32 %v1735, %v1700
  %v1737 = vadd.f32 %v1736, %v1702
  %1738 = vadd.xlane.f32.xlu0 %v1737
  %v1739 = vpop.xlane.xlu0 %1738
  %v1740 = vadd.f32 %v1722, %v1739
  %vm1741 = vcmask 7168
  %1742 = vst.msk [vmem:[#allocation2] sm:$0xff] %vm1741, %v1740
  %v1743 = vld [vmem:[#allocation3] sm:$0xff]
  %v1744 = vmul.f32 %v1413, %v1413
  %v1745 = vmul.f32 %v1415, %v1415
  %v1746 = vmul.f32 %v1454, %v1454
  %v1747 = vmul.f32 %v1456, %v1456
  %v1748 = vmul.f32 %v1495, %v1495
  %v1749 = vmul.f32 %v1497, %v1497
  %v1750 = vmul.f32 %v1536, %v1536
  %v1751 = vmul.f32 %v1538, %v1538
  %v1752 = vmul.f32 %v1577, %v1577
  %v1753 = vmul.f32 %v1579, %v1579
  %v1754 = vmul.f32 %v1618, %v1618
  %v1755 = vmul.f32 %v1620, %v1620
  %v1756 = vmul.f32 %v1659, %v1659
  %v1757 = vmul.f32 %v1661, %v1661
  %v1758 = vmul.f32 %v1700, %v1700
  %v1759 = vmul.f32 %v1702, %v1702
  %v1760 = vadd.f32 %v1744, %v1745
  %v1761 = vadd.f32 %v1760, %v1746
  %v1762 = vadd.f32 %v1761, %v1747
  %v1763 = vadd.f32 %v1762, %v1748
  %v1764 = vadd.f32 %v1763, %v1749
  %v1765 = vadd.f32 %v1764, %v1750
  %v1766 = vadd.f32 %v1765, %v1751
  %v1767 = vadd.f32 %v1766, %v1752
  %v1768 = vadd.f32 %v1767, %v1753
  %v1769 = vadd.f32 %v1768, %v1754
  %v1770 = vadd.f32 %v1769, %v1755
  %v1771 = vadd.f32 %v1770, %v1756
  %v1772 = vadd.f32 %v1771, %v1757
  %v1773 = vadd.f32 %v1772, %v1758
  %v1774 = vadd.f32 %v1773, %v1759
  %1775 = vadd.xlane.f32.xlu0 %v1774
  %v1776 = vpop.xlane.xlu0 %1775
  %v1777 = vadd.f32 %v1743, %v1776
  %1778 = vst.msk [vmem:[#allocation3] sm:$0xff] %vm1741, %v1777
  // Predicated region
  $region14: #{downsample_unet3d_forward.8} parent=0 // pred_check
    %p1779 = pneg %p15
  $region15: #{downsample_unet3d_forward.8} parent=0 // pred_check_branch
    %1781 = sbr.rel (%p1779) target = $region17
  $region16: #{downsample_unet3d_forward.8} parent=0 // pred_region
    %v1782 = vld [vmem:[#allocation2] sm:$0xff]
    %1783 = vst.msk [vmem:[%s3] sm:$0xff] %vm1741, %v1782
    %v1784 = vld [vmem:[#allocation3] sm:$0xff]
    %1785 = vst.msk [vmem:[%s4] sm:$0xff] %vm1741, %v1784
  $region17: #{downsample_unet3d_forward.8} parent=0 // pred_fallthru
    _
  // Predicated region
  $region18: #{downsample_unet3d_forward.8} parent=0 // pred_check
    _
  $region19: #{downsample_unet3d_forward.8} parent=0 // pred_check_branch
    %1787 = sbr.rel (0) target = $region21
  $region20: #{downsample_unet3d_forward.8} parent=0 // pred_region
    _
  $region21: #{downsample_unet3d_forward.8} parent=0 // pred_fallthru
    _
  // Predicated region
  $region22: #{downsample_unet3d_forward.8} parent=0 // pred_check
    _
  $region23: #{downsample_unet3d_forward.8} parent=0 // pred_check_branch
    %1789 = sbr.rel (0) target = $region25
  $region24: #{downsample_unet3d_forward.8} parent=0 // pred_region
    _
  $region25: #{downsample_unet3d_forward.8} parent=0 // pred_fallthru
    _
  // Predicated region
  $region26: #{downsample_unet3d_forward.8} parent=0 // pred_check
    _
  $region27: #{downsample_unet3d_forward.8} parent=0 // pred_check_branch
    %1791 = sbr.rel (0) target = $region29
  $region28: #{downsample_unet3d_forward.8} parent=0 // pred_region
    _
  $region29: #{downsample_unet3d_forward.8} parent=0 // pred_fallthru
    _
  // Predicated region
  $region30: #{downsample_unet3d_forward.8} parent=0 // pred_check
    _
  $region31: #{downsample_unet3d_forward.8} parent=0 // pred_check_branch
    %1793 = sbr.rel (0) target = $region33
  $region32: #{downsample_unet3d_forward.8} parent=0 // pred_region
    _
  $region33: #{downsample_unet3d_forward.8} parent=0 // pred_fallthru
    _
  // Predicated region
  $region34: #{downsample_unet3d_forward.8} parent=0 // pred_check
    _
  $region35: #{downsample_unet3d_forward.8} parent=0 // pred_check_branch
    %1795 = sbr.rel (0) target = $region37
  $region36: #{downsample_unet3d_forward.8} parent=0 // pred_region
    _
  $region37: #{downsample_unet3d_forward.8} parent=0 // pred_fallthru
    _
  // Predicated region
  $region38: #{downsample_unet3d_forward.8} parent=0 // pred_check
    _
  $region39: #{downsample_unet3d_forward.8} parent=0 // pred_check_branch
    %1797 = sbr.rel (0) target = $region41
  $region40: #{downsample_unet3d_forward.8} parent=0 // pred_region
    _
  $region41: #{downsample_unet3d_forward.8} parent=0 // pred_fallthru
    _

// kernel: downsample_unet3d_forward.9
$region0: #{downsample_unet3d_forward.9}
  #allocation0 [shape = 'u32[]', space=smem, size = 0x4, offset = 0x4, fixed_abs, tag = 'smem constant byte address 0x4 - core index']
  #allocation1 [shape = 'u32[144,128]{1,0:T(1,128)}', space=vmem, size = 0x12000, scoped, tag = 'internal scratch']
  %s0 = inlined_call_operand.vmem [shape: f32[8,2048], index: 0, kind: input, shape index: {}]
  %s1 = inlined_call_operand.vmem [shape: f32[8,1], index: 1, kind: input, shape index: {}]
  %s2 = inlined_call_operand.vmem [shape: f32[8,1], index: 2, kind: input, shape index: {}]
  %s3 = inlined_call_operand.vmem [shape: f32[8,2048], index: 3, kind: output, shape index: {}]
  %s4 = sld [smem:[#allocation0]]
  $region22: #{downsample_unet3d_forward.9} parent=0
    _
  %s6 = ssub.s32 1, %s4
  %s7 = scalar_select 0, %s6, %s4
  // Predicated region
  $region2: #{downsample_unet3d_forward.9} parent=0 // pred_check
    _
  $region3: #{downsample_unet3d_forward.9} parent=0 // pred_check_branch
    %9 = sbr.rel (0) target = $region5
  $region4: #{downsample_unet3d_forward.9} parent=0 // pred_region
    _
  $region5: #{downsample_unet3d_forward.9} parent=0 // pred_fallthru
    _
  // Predicated region
  $region6: #{downsample_unet3d_forward.9} parent=0 // pred_check
    _
  $region7: #{downsample_unet3d_forward.9} parent=0 // pred_check_branch
    %11 = sbr.rel (0) target = $region9
  $region8: #{downsample_unet3d_forward.9} parent=0 // pred_region
    _
  $region9: #{downsample_unet3d_forward.9} parent=0 // pred_fallthru
    _
  // Predicated region
  $region10: #{downsample_unet3d_forward.9} parent=0 // pred_check
    _
  $region11: #{downsample_unet3d_forward.9} parent=0 // pred_check_branch
    %13 = sbr.rel (0) target = $region13
  $region12: #{downsample_unet3d_forward.9} parent=0 // pred_region
    _
  $region13: #{downsample_unet3d_forward.9} parent=0 // pred_fallthru
    _
  %v14 = vld [vmem:[%s0] sm:$0xff]
  %v15 = vld [vmem:[%s0 + $0x8] sm:$0xff]
  %v16 = vld [vmem:[%s0 + $0x10] sm:$0xff]
  %v17 = vld [vmem:[%s0 + $0x18] sm:$0xff]
  %v18 = vld [vmem:[%s0 + $0x20] sm:$0xff]
  %v19 = vld [vmem:[%s0 + $0x28] sm:$0xff]
  %v20 = vld [vmem:[%s0 + $0x30] sm:$0xff]
  %v21 = vld [vmem:[%s0 + $0x38] sm:$0xff]
  %v22 = vld [vmem:[%s0 + $0x40] sm:$0xff]
  %v23 = vld [vmem:[%s0 + $0x48] sm:$0xff]
  %v24 = vld [vmem:[%s0 + $0x50] sm:$0xff]
  %v25 = vld [vmem:[%s0 + $0x58] sm:$0xff]
  %v26 = vld [vmem:[%s0 + $0x60] sm:$0xff]
  %v27 = vld [vmem:[%s0 + $0x68] sm:$0xff]
  %v28 = vld [vmem:[%s0 + $0x70] sm:$0xff]
  %v29 = vld [vmem:[%s0 + $0x78] sm:$0xff]
  %v30 = vld [vmem:[%s1] sm:$0xff]
  %32 = vset.pattern.permute.xlu0 0
  %33 = vperm.xlu0 %32, %v30
  %v34 = vpop.permute.xlu0 %33
  %v36 = vmul.f32 %v14, %v34
  %v37 = vmul.f32 %v15, %v34
  %v38 = vmul.f32 %v16, %v34
  %v39 = vmul.f32 %v17, %v34
  %v40 = vmul.f32 %v18, %v34
  %v41 = vmul.f32 %v19, %v34
  %v42 = vmul.f32 %v20, %v34
  %v43 = vmul.f32 %v21, %v34
  %v44 = vmul.f32 %v22, %v34
  %v45 = vmul.f32 %v23, %v34
  %v46 = vmul.f32 %v24, %v34
  %v47 = vmul.f32 %v25, %v34
  %v48 = vmul.f32 %v26, %v34
  %v49 = vmul.f32 %v27, %v34
  %v50 = vmul.f32 %v28, %v34
  %v51 = vmul.f32 %v29, %v34
  %v52 = vld [vmem:[%s2] sm:$0xff]
  %54 = vset.pattern.permute.xlu0 0
  %55 = vperm.xlu0 %54, %v52
  %v56 = vpop.permute.xlu0 %55
  %v58 = vadd.f32 %v36, %v56
  %v59 = vadd.f32 %v37, %v56
  %v60 = vadd.f32 %v38, %v56
  %v61 = vadd.f32 %v39, %v56
  %v62 = vadd.f32 %v40, %v56
  %v63 = vadd.f32 %v41, %v56
  %v64 = vadd.f32 %v42, %v56
  %v65 = vadd.f32 %v43, %v56
  %v66 = vadd.f32 %v44, %v56
  %v67 = vadd.f32 %v45, %v56
  %v68 = vadd.f32 %v46, %v56
  %v69 = vadd.f32 %v47, %v56
  %v70 = vadd.f32 %v48, %v56
  %v71 = vadd.f32 %v49, %v56
  %v72 = vadd.f32 %v50, %v56
  %v73 = vadd.f32 %v51, %v56
  %v74 = vmax.f32 %v58, 0.0
  %v75 = vmax.f32 %v59, 0.0
  %v76 = vmax.f32 %v60, 0.0
  %v77 = vmax.f32 %v61, 0.0
  %v78 = vmax.f32 %v62, 0.0
  %v79 = vmax.f32 %v63, 0.0
  %v80 = vmax.f32 %v64, 0.0
  %v81 = vmax.f32 %v65, 0.0
  %v82 = vmax.f32 %v66, 0.0
  %v83 = vmax.f32 %v67, 0.0
  %v84 = vmax.f32 %v68, 0.0
  %v85 = vmax.f32 %v69, 0.0
  %v86 = vmax.f32 %v70, 0.0
  %v87 = vmax.f32 %v71, 0.0
  %v88 = vmax.f32 %v72, 0.0
  %v89 = vmax.f32 %v73, 0.0
  %90 = vst [vmem:[%s3] sm:$0xff] %v74
  %91 = vst [vmem:[%s3 + $0x8] sm:$0xff] %v75
  %92 = vst [vmem:[%s3 + $0x10] sm:$0xff] %v76
  %93 = vst [vmem:[%s3 + $0x18] sm:$0xff] %v77
  %94 = vst [vmem:[%s3 + $0x20] sm:$0xff] %v78
  %95 = vst [vmem:[%s3 + $0x28] sm:$0xff] %v79
  %96 = vst [vmem:[%s3 + $0x30] sm:$0xff] %v80
  %97 = vst [vmem:[%s3 + $0x38] sm:$0xff] %v81
  %98 = vst [vmem:[%s3 + $0x40] sm:$0xff] %v82
  %99 = vst [vmem:[%s3 + $0x48] sm:$0xff] %v83
  %100 = vst [vmem:[%s3 + $0x50] sm:$0xff] %v84
  %101 = vst [vmem:[%s3 + $0x58] sm:$0xff] %v85
  %102 = vst [vmem:[%s3 + $0x60] sm:$0xff] %v86
  %103 = vst [vmem:[%s3 + $0x68] sm:$0xff] %v87
  %104 = vst [vmem:[%s3 + $0x70] sm:$0xff] %v88
  %105 = vst [vmem:[%s3 + $0x78] sm:$0xff] %v89
  // Predicated region
  $region14: #{downsample_unet3d_forward.9} parent=0 // pred_check
    _
  $region15: #{downsample_unet3d_forward.9} parent=0 // pred_check_branch
    %107 = sbr.rel (0) target = $region17
  $region16: #{downsample_unet3d_forward.9} parent=0 // pred_region
    _
  $region17: #{downsample_unet3d_forward.9} parent=0 // pred_fallthru
    _
  // Predicated region
  $region18: #{downsample_unet3d_forward.9} parent=0 // pred_check
    _
  $region19: #{downsample_unet3d_forward.9} parent=0 // pred_check_branch
    %109 = sbr.rel (0) target = $region21
  $region20: #{downsample_unet3d_forward.9} parent=0 // pred_region
    _
  $region21: #{downsample_unet3d_forward.9} parent=0 // pred_fallthru
    _

// kernel: downsample_unet3d_forward.11
$region0: #{downsample_unet3d_forward.11}
  #allocation0 [shape = 'u32[]', space=smem, size = 0x4, offset = 0x4, fixed_abs, tag = 'smem constant byte address 0x4 - core index']
  #allocation1 [shape = 'u32[144,128]{1,0:T(1,128)}', space=vmem, size = 0x12000, scoped, tag = 'internal scratch']
  %s0 = inlined_call_operand.vmem [shape: f32[8,512], index: 0, kind: input, shape index: {}]
  %s1 = inlined_call_operand.vmem [shape: f32[8,1], index: 1, kind: input, shape index: {}]
  %s2 = inlined_call_operand.vmem [shape: f32[8,1], index: 2, kind: input, shape index: {}]
  %s3 = inlined_call_operand.vmem [shape: f32[8,512], index: 3, kind: output, shape index: {}]
  %s4 = sld [smem:[#allocation0]]
  $region22: #{downsample_unet3d_forward.11} parent=0
    _
  %s6 = ssub.s32 1, %s4
  %s7 = scalar_select 0, %s6, %s4
  // Predicated region
  $region2: #{downsample_unet3d_forward.11} parent=0 // pred_check
    _
  $region3: #{downsample_unet3d_forward.11} parent=0 // pred_check_branch
    %9 = sbr.rel (0) target = $region5
  $region4: #{downsample_unet3d_forward.11} parent=0 // pred_region
    _
  $region5: #{downsample_unet3d_forward.11} parent=0 // pred_fallthru
    _
  // Predicated region
  $region6: #{downsample_unet3d_forward.11} parent=0 // pred_check
    _
  $region7: #{downsample_unet3d_forward.11} parent=0 // pred_check_branch
    %11 = sbr.rel (0) target = $region9
  $region8: #{downsample_unet3d_forward.11} parent=0 // pred_region
    _
  $region9: #{downsample_unet3d_forward.11} parent=0 // pred_fallthru
    _
  // Predicated region
  $region10: #{downsample_unet3d_forward.11} parent=0 // pred_check
    _
  $region11: #{downsample_unet3d_forward.11} parent=0 // pred_check_branch
    %13 = sbr.rel (0) target = $region13
  $region12: #{downsample_unet3d_forward.11} parent=0 // pred_region
    _
  $region13: #{downsample_unet3d_forward.11} parent=0 // pred_fallthru
    _
  %v14 = vld [vmem:[%s0] sm:$0xff]
  %v15 = vld [vmem:[%s0 + $0x8] sm:$0xff]
  %v16 = vld [vmem:[%s0 + $0x10] sm:$0xff]
  %v17 = vld [vmem:[%s0 + $0x18] sm:$0xff]
  %v18 = vld [vmem:[%s1] sm:$0xff]
  %20 = vset.pattern.permute.xlu0 0
  %21 = vperm.xlu0 %20, %v18
  %v22 = vpop.permute.xlu0 %21
  %v24 = vmul.f32 %v14, %v22
  %v25 = vmul.f32 %v15, %v22
  %v26 = vmul.f32 %v16, %v22
  %v27 = vmul.f32 %v17, %v22
  %v28 = vld [vmem:[%s2] sm:$0xff]
  %30 = vset.pattern.permute.xlu0 0
  %31 = vperm.xlu0 %30, %v28
  %v32 = vpop.permute.xlu0 %31
  %v34 = vadd.f32 %v24, %v32
  %v35 = vadd.f32 %v25, %v32
  %v36 = vadd.f32 %v26, %v32
  %v37 = vadd.f32 %v27, %v32
  %v38 = vmax.f32 %v34, 0.0
  %v39 = vmax.f32 %v35, 0.0
  %v40 = vmax.f32 %v36, 0.0
  %v41 = vmax.f32 %v37, 0.0
  %42 = vst [vmem:[%s3] sm:$0xff] %v38
  %43 = vst [vmem:[%s3 + $0x8] sm:$0xff] %v39
  %44 = vst [vmem:[%s3 + $0x10] sm:$0xff] %v40
  %45 = vst [vmem:[%s3 + $0x18] sm:$0xff] %v41
  // Predicated region
  $region14: #{downsample_unet3d_forward.11} parent=0 // pred_check
    _
  $region15: #{downsample_unet3d_forward.11} parent=0 // pred_check_branch
    %47 = sbr.rel (0) target = $region17
  $region16: #{downsample_unet3d_forward.11} parent=0 // pred_region
    _
  $region17: #{downsample_unet3d_forward.11} parent=0 // pred_fallthru
    _
  // Predicated region
  $region18: #{downsample_unet3d_forward.11} parent=0 // pred_check
    _
  $region19: #{downsample_unet3d_forward.11} parent=0 // pred_check_branch
    %49 = sbr.rel (0) target = $region21
  $region20: #{downsample_unet3d_forward.11} parent=0 // pred_region
    _
  $region21: #{downsample_unet3d_forward.11} parent=0 // pred_fallthru
    _

// kernel: downsample_unet3d_forward.10
$region0: #{downsample_unet3d_forward.10}
  #allocation0 [shape = 'u32[]', space=smem, size = 0x4, offset = 0x4, fixed_abs, tag = 'smem constant byte address 0x4 - core index']
  #allocation1 [shape = 'u32[144,128]{1,0:T(1,128)}', space=vmem, size = 0x12000, scoped, tag = 'internal scratch']
  #allocation2 [shape = 'f32[8,1]{1,0:T(8,128)}', space=vmem, size = 0x1000, scoped, tag = 'scratch operand']
  #allocation3 [shape = 'f32[8,1]{1,0:T(8,128)}', space=vmem, size = 0x1000, scoped, tag = 'scratch operand']
  %s0 = inlined_call_operand.vmem [shape: bf16[32,512], index: 0, kind: input, shape index: {}]
  %s1 = inlined_call_operand.vmem [shape: bf16[8,32], index: 1, kind: input, shape index: {}]
  %s2 = inlined_call_operand.vmem [shape: f32[8,512], index: 2, kind: output, shape index: {0}]
  %s3 = inlined_call_operand.vmem [shape: f32[8,1], index: 3, kind: output, shape index: {1}]
  %s4 = inlined_call_operand.vmem [shape: f32[8,1], index: 4, kind: output, shape index: {2}]
  %5 = xla_tuple %s2, %s3, %s4
  %s6 = sld [smem:[#allocation0]]
  $region42: #{downsample_unet3d_forward.10} parent=0
    _
  %s8 = ssub.s32 1, %s6
  %s9 = scalar_select 0, %s8, %s6
  // Predicated region
  $region2: #{downsample_unet3d_forward.10} parent=0 // pred_check
    _
  $region3: #{downsample_unet3d_forward.10} parent=0 // pred_check_branch
    %11 = sbr.rel (0) target = $region5
  $region4: #{downsample_unet3d_forward.10} parent=0 // pred_region
    _
  $region5: #{downsample_unet3d_forward.10} parent=0 // pred_fallthru
    _
  // Predicated region
  $region6: #{downsample_unet3d_forward.10} parent=0 // pred_check
    _
  $region7: #{downsample_unet3d_forward.10} parent=0 // pred_check_branch
    %13 = sbr.rel (0) target = $region9
  $region8: #{downsample_unet3d_forward.10} parent=0 // pred_region
    _
  $region9: #{downsample_unet3d_forward.10} parent=0 // pred_fallthru
    _
  %p15 = scmp.eq.s32.totalorder 0, 0
  // Predicated region
  $region10: #{downsample_unet3d_forward.10} parent=0 // pred_check
    %p16 = pneg %p15
  $region11: #{downsample_unet3d_forward.10} parent=0 // pred_check_branch
    %18 = sbr.rel (%p16) target = $region13
  $region12: #{downsample_unet3d_forward.10} parent=0 // pred_region
    %vm19 = vcmask 7168
    %20 = vst.msk [vmem:[#allocation2] sm:$0xff] %vm19, 0.0
    %21 = vst.msk [vmem:[#allocation3] sm:$0xff] %vm19, 0.0
  $region13: #{downsample_unet3d_forward.10} parent=0 // pred_fallthru
    _
  %v22 = vld [vmem:[%s1] sm:$0xf]
  %v23 = vld [vmem:[%s0] sm:$0xff]
  %v24 = vld [vmem:[%s0 + $0x8] sm:$0xff]
  %v25 = vld [vmem:[%s0 + $0x10] sm:$0xff]
  %v26 = vld [vmem:[%s0 + $0x18] sm:$0xff]
  %v27 = vld [vmem:[%s0 + $0x20] sm:$0xff]
  %v28 = vld [vmem:[%s0 + $0x28] sm:$0xff]
  %v29 = vld [vmem:[%s0 + $0x30] sm:$0xff]
  %v30 = vld [vmem:[%s0 + $0x38] sm:$0xff]
  %v39 = vunpack.c.l.b16 %v23
  %v40 = vunpack.c.h.b16 %v23
  %v41 = vunpack.c.l.b16 %v24
  %v42 = vunpack.c.h.b16 %v24
  %v43 = vunpack.c.l.b16 %v25
  %v44 = vunpack.c.h.b16 %v25
  %v45 = vunpack.c.l.b16 %v26
  %v46 = vunpack.c.h.b16 %v26
  %v47 = vunpack.c.l.b16 %v27
  %v48 = vunpack.c.h.b16 %v27
  %v49 = vunpack.c.l.b16 %v28
  %v50 = vunpack.c.h.b16 %v28
  %v51 = vunpack.c.l.b16 %v29
  %v52 = vunpack.c.h.b16 %v29
  %v53 = vunpack.c.l.b16 %v30
  %v54 = vunpack.c.h.b16 %v30
  %v55 = vpack.c.b16 %v43, %v39
  %v56 = vpack.c.b16 %v44, %v40
  %v57 = vpack.c.b16 %v45, %v41
  %v58 = vpack.c.b16 %v46, %v42
  %v59 = vpack.c.b16 %v51, %v47
  %v60 = vpack.c.b16 %v52, %v48
  %v61 = vpack.c.b16 %v53, %v49
  %v62 = vpack.c.b16 %v54, %v50
  %vm71 = vcmask 261120
  %v73 = vsel %vm71, %v22, 0
  %75 = vmatprep.subr.bf16.mxu0 %v56
  %76 = vmatpush1.bf16.msra.mxu0 %v55
  %77 = vmatprep.subr.bf16.mxu0 %v60
  %78 = vmatpush1.bf16.msra.mxu0 %v59
  %79 = vmatprep.subr.bf16.mxu0 0
  %80 = vmatpush1.bf16.msra.mxu0 0
  %81 = vmatprep.subr.bf16.mxu0 0
  %82 = vmatpush1.bf16.msra.mxu0 0
  %83 = vmatprep.subr.bf16.mxu0 0
  %84 = vmatpush1.bf16.msra.mxu0 0
  %85 = vmatprep.subr.bf16.mxu0 0
  %86 = vmatpush1.bf16.msra.mxu0 0
  %87 = vmatprep.subr.bf16.mxu0 0
  %88 = vmatpush1.bf16.msra.mxu0 0
  %89 = vmatprep.subr.bf16.mxu0 0
  %90 = vmatpush1.bf16.msra.mxu0 0
  %91 = vmatprep.subr.bf16.mxu0 0
  %92 = vmatpush1.bf16.msra.mxu0 0
  %93 = vmatprep.subr.bf16.mxu0 0
  %94 = vmatpush1.bf16.msra.mxu0 0
  %95 = vmatprep.subr.bf16.mxu0 0
  %96 = vmatpush1.bf16.msra.mxu0 0
  %97 = vmatprep.subr.bf16.mxu0 0
  %98 = vmatpush1.bf16.msra.mxu0 0
  %99 = vmatprep.subr.bf16.mxu0 0
  %100 = vmatpush1.bf16.msra.mxu0 0
  %101 = vmatprep.subr.bf16.mxu0 0
  %102 = vmatpush1.bf16.msra.mxu0 0
  %103 = vmatprep.subr.bf16.mxu0 0
  %104 = vmatpush1.bf16.msra.mxu0 0
  %105 = vmatprep.subr.bf16.mxu0 0
  %106 = vmatpush1.bf16.msra.mxu0 0
  %107 = vmatprep.mubr.bf16.mxu0 0
  %108 = vmatmul.mubr.bf16.gmra.mrb[0].mxu0 %v73
  %v109 = vpop.f32.mrb[0].mxu0
  %v110 = vadd.f32 0.0, %v109
  %v111 = vpop.f32.mrb[0].mxu0
  %v112 = vadd.f32 0.0, %v111
  %v113 = vpop.f32.mrb[0].mxu0
  %v114 = vpop.f32.mrb[0].mxu0
  %115 = vdwg.mxu0
  %116 = vmatprep.subr.bf16.mxu0 %v58
  %117 = vmatpush1.bf16.msra.mxu0 %v57
  %118 = vmatprep.subr.bf16.mxu0 %v62
  %119 = vmatpush1.bf16.msra.mxu0 %v61
  %120 = vmatprep.subr.bf16.mxu0 0
  %121 = vmatpush1.bf16.msra.mxu0 0
  %122 = vmatprep.subr.bf16.mxu0 0
  %123 = vmatpush1.bf16.msra.mxu0 0
  %124 = vmatprep.subr.bf16.mxu0 0
  %125 = vmatpush1.bf16.msra.mxu0 0
  %126 = vmatprep.subr.bf16.mxu0 0
  %127 = vmatpush1.bf16.msra.mxu0 0
  %128 = vmatprep.subr.bf16.mxu0 0
  %129 = vmatpush1.bf16.msra.mxu0 0
  %130 = vmatprep.subr.bf16.mxu0 0
  %131 = vmatpush1.bf16.msra.mxu0 0
  %132 = vmatprep.subr.bf16.mxu0 0
  %133 = vmatpush1.bf16.msra.mxu0 0
  %134 = vmatprep.subr.bf16.mxu0 0
  %135 = vmatpush1.bf16.msra.mxu0 0
  %136 = vmatprep.subr.bf16.mxu0 0
  %137 = vmatpush1.bf16.msra.mxu0 0
  %138 = vmatprep.subr.bf16.mxu0 0
  %139 = vmatpush1.bf16.msra.mxu0 0
  %140 = vmatprep.subr.bf16.mxu0 0
  %141 = vmatpush1.bf16.msra.mxu0 0
  %142 = vmatprep.subr.bf16.mxu0 0
  %143 = vmatpush1.bf16.msra.mxu0 0
  %144 = vmatprep.subr.bf16.mxu0 0
  %145 = vmatpush1.bf16.msra.mxu0 0
  %146 = vmatprep.subr.bf16.mxu0 0
  %147 = vmatpush1.bf16.msra.mxu0 0
  %148 = vmatprep.mubr.bf16.mxu0 0
  %149 = vmatmul.mubr.bf16.gmra.mrb[0].mxu0 %v73
  %v150 = vpop.f32.mrb[0].mxu0
  %v151 = vadd.f32 0.0, %v150
  %v152 = vpop.f32.mrb[0].mxu0
  %v153 = vadd.f32 0.0, %v152
  %v154 = vpop.f32.mrb[0].mxu0
  %v155 = vpop.f32.mrb[0].mxu0
  %156 = vdwg.mxu0
  %157 = vst [vmem:[%s2] sm:$0xff] %v110
  %158 = vst [vmem:[%s2 + $0x8] sm:$0xff] %v112
  %159 = vst [vmem:[%s2 + $0x10] sm:$0xff] %v151
  %160 = vst [vmem:[%s2 + $0x18] sm:$0xff] %v153
  %v161 = vld [vmem:[#allocation2] sm:$0xff]
  %v162 = vadd.f32 %v110, %v112
  %v163 = vadd.f32 %v162, %v151
  %v164 = vadd.f32 %v163, %v153
  %165 = vadd.xlane.f32.xlu0 %v164
  %v166 = vpop.xlane.xlu0 %165
  %v167 = vadd.f32 %v161, %v166
  %vm168 = vcmask 7168
  %169 = vst.msk [vmem:[#allocation2] sm:$0xff] %vm168, %v167
  %v170 = vld [vmem:[#allocation3] sm:$0xff]
  %v171 = vmul.f32 %v110, %v110
  %v172 = vmul.f32 %v112, %v112
  %v173 = vmul.f32 %v151, %v151
  %v174 = vmul.f32 %v153, %v153
  %v175 = vadd.f32 %v171, %v172
  %v176 = vadd.f32 %v175, %v173
  %v177 = vadd.f32 %v176, %v174
  %178 = vadd.xlane.f32.xlu0 %v177
  %v179 = vpop.xlane.xlu0 %178
  %v180 = vadd.f32 %v170, %v179
  %181 = vst.msk [vmem:[#allocation3] sm:$0xff] %vm168, %v180
  // Predicated region
  $region14: #{downsample_unet3d_forward.10} parent=0 // pred_check
    %p182 = pneg %p15
  $region15: #{downsample_unet3d_forward.10} parent=0 // pred_check_branch
    %184 = sbr.rel (%p182) target = $region17
  $region16: #{downsample_unet3d_forward.10} parent=0 // pred_region
    %v185 = vld [vmem:[#allocation2] sm:$0xff]
    %186 = vst.msk [vmem:[%s3] sm:$0xff] %vm168, %v185
    %v187 = vld [vmem:[#allocation3] sm:$0xff]
    %188 = vst.msk [vmem:[%s4] sm:$0xff] %vm168, %v187
  $region17: #{downsample_unet3d_forward.10} parent=0 // pred_fallthru
    _
  // Predicated region
  $region18: #{downsample_unet3d_forward.10} parent=0 // pred_check
    _
  $region19: #{downsample_unet3d_forward.10} parent=0 // pred_check_branch
    %190 = sbr.rel (0) target = $region21
  $region20: #{downsample_unet3d_forward.10} parent=0 // pred_region
    _
  $region21: #{downsample_unet3d_forward.10} parent=0 // pred_fallthru
    _
  // Predicated region
  $region22: #{downsample_unet3d_forward.10} parent=0 // pred_check
    _
  $region23: #{downsample_unet3d_forward.10} parent=0 // pred_check_branch
    %192 = sbr.rel (0) target = $region25
  $region24: #{downsample_unet3d_forward.10} parent=0 // pred_region
    _
  $region25: #{downsample_unet3d_forward.10} parent=0 // pred_fallthru
    _
  // Predicated region
  $region26: #{downsample_unet3d_forward.10} parent=0 // pred_check
    _
  $region27: #{downsample_unet3d_forward.10} parent=0 // pred_check_branch
    %194 = sbr.rel (0) target = $region29
  $region28: #{downsample_unet3d_forward.10} parent=0 // pred_region
    _
  $region29: #{downsample_unet3d_forward.10} parent=0 // pred_fallthru
    _
  // Predicated region
  $region30: #{downsample_unet3d_forward.10} parent=0 // pred_check
    _
  $region31: #{downsample_unet3d_forward.10} parent=0 // pred_check_branch
    %196 = sbr.rel (0) target = $region33
  $region32: #{downsample_unet3d_forward.10} parent=0 // pred_region
    _
  $region33: #{downsample_unet3d_forward.10} parent=0 // pred_fallthru
    _
  // Predicated region
  $region34: #{downsample_unet3d_forward.10} parent=0 // pred_check
    _
  $region35: #{downsample_unet3d_forward.10} parent=0 // pred_check_branch
    %198 = sbr.rel (0) target = $region37
  $region36: #{downsample_unet3d_forward.10} parent=0 // pred_region
    _
  $region37: #{downsample_unet3d_forward.10} parent=0 // pred_fallthru
    _
  // Predicated region
  $region38: #{downsample_unet3d_forward.10} parent=0 // pred_check
    _
  $region39: #{downsample_unet3d_forward.10} parent=0 // pred_check_branch
    %200 = sbr.rel (0) target = $region41
  $region40: #{downsample_unet3d_forward.10} parent=0 // pred_region
    _
  $region41: #{downsample_unet3d_forward.10} parent=0 // pred_fallthru
    _

</llo_original>
